<compile_context>
chip_gen: v5e
topology: v5e:2x2
jax: 0.10.0
libtpu: 0.0.40
codegen_flags: <defaults>
</compile_context>

<pallas_src>
import functools

import numpy as np

import jax
import jax.numpy as jnp
from jax.experimental import pallas as pl
from jax.experimental.pallas import tpu as pltpu

CAPACITY = 32
X_FDIM = 128
FC_OUT = CAPACITY * 2 * 7 * 7          # 3136
NEG_SLOPE = 0.2

# Sub-pixel decomposition tables for ConvTranspose2d(k=4, stride=2, padding=1).
# For an output row 2a+p the contributing kernel rows are:
#   p=0: ki=1 at input row a (shift 0), ki=3 at input row a-1 (shift -1)
#   p=1: ki=2 at input row a (shift 0), ki=0 at input row a+1 (shift +1)
PH_TAP = {0: {0: 1, -1: 3}, 1: {0: 2, 1: 0}}      # phase bit -> {shift: tap}

# Second deconv consumed in phase-planar form (input = 4 phase planes of the
# first deconv, planar 7x7 grid).  Final output row 4a + rowphase reads
# (input phase p1, planar row a + delta) with kernel tap ki:
ROW_TABLE = {
    0: ((0, 0, 1), (1, -1, 3)),
    1: ((0, 0, 2), (1, 0, 0)),
    2: ((1, 0, 1), (0, 0, 3)),
    3: ((1, 0, 2), (0, 1, 0)),
}

SHIFTS = tuple((dr, dc) for dr in (-1, 0, 1) for dc in (-1, 0, 1))   # 9 shifts


# ---------------------------------------------------------------------------
# Offline weight / mask preparation (out of the forward path)
# ---------------------------------------------------------------------------
def _deconv_stage1_weights(w_t):
    """(Cin=64, Cout=32, 4, 4) torch ConvT weight -> (9, 4*Cout, Cin)."""
    w = np.asarray(w_t, np.float32)
    cin, cout = w.shape[0], w.shape[1]
    out = np.zeros((len(SHIFTS), 4 * cout, cin), np.float32)
    for s, (dr, dc) in enumerate(SHIFTS):
        for p in (0, 1):
            ki = PH_TAP[p].get(dr)
            if ki is None:
                continue
            for q in (0, 1):
                kj = PH_TAP[q].get(dc)
                if kj is None:
                    continue
                ph = 2 * p + q
                out[s, ph * cout:(ph + 1) * cout, :] = w[:, :, ki, kj].T
    return out


def _deconv_stage2_weights(w_t):
    """(Cin=32, 1, 4, 4) torch ConvT weight -> (9, 16, 4*Cin) phase-planar."""
    w = np.asarray(w_t, np.float32)
    cin = w.shape[0]
    out = np.zeros((len(SHIFTS), 16, 4 * cin), np.float32)
    for s, (dr, dc) in enumerate(SHIFTS):
        for rp in range(4):
            for (p1, d_r, ki) in ROW_TABLE[rp]:
                if d_r != dr:
                    continue
                for cp in range(4):
                    for (q1, d_c, kj) in ROW_TABLE[cp]:
                        if d_c != dc:
                            continue
                        ph = 2 * p1 + q1
                        out[s, rp * 4 + cp, ph * cin:(ph + 1) * cin] = w[:, 0, ki, kj]
    return out


def _shift_masks(batch):
    """(9, 1, batch*49) 0/1 validity masks for the 9 planar shifts."""
    n = batch * 49
    m = np.zeros((len(SHIFTS), 1, n), np.float32)
    for s, (dr, dc) in enumerate(SHIFTS):
        plane = np.zeros((7, 7), np.float32)
        plane[max(0, -dr):min(7, 7 - dr), max(0, -dc):min(7, 7 - dc)] = 1.0
        m[s, 0, :] = np.tile(plane.reshape(-1), batch)
    return m


def init_params(key):
    """Same raw parameterization as the PyTorch module."""
    c = CAPACITY
    k1, k2, k3, k4, k5, k6 = jax.random.split(key, 6)
    s_fc = 1.0 / jnp.sqrt(float(X_FDIM))
    fc_w = jax.random.uniform(k1, (X_FDIM, FC_OUT), jnp.float32, -1.0, 1.0) * s_fc
    fc_b = jax.random.uniform(k2, (FC_OUT,), jnp.float32, -1.0, 1.0) * s_fc
    # PyTorch ConvTranspose2d weight layout: (in_channels, out_channels, kH, kW)
    w2 = jax.random.uniform(k3, (c * 2, c, 4, 4), jnp.float32, -1.0, 1.0) * 0.05
    b2 = jax.random.uniform(k4, (c,), jnp.float32, -1.0, 1.0) * 0.05
    w1 = jax.random.uniform(k5, (c, 1, 4, 4), jnp.float32, -1.0, 1.0) * 0.05
    b1 = jax.random.uniform(k6, (1,), jnp.float32, -1.0, 1.0) * 0.05
    return fc_w, fc_b, w2, b2, w1, b1


def prepare_params(params):
    """One-time layout / dtype transforms (not in the hot path)."""
    fc_w, fc_b, w2, b2, w1, b1 = params
    c = CAPACITY
    wfc = jnp.asarray(fc_w, jnp.bfloat16)                           # (128, 3136)
    bfc = jnp.asarray(fc_b, jnp.float32).reshape(1, FC_OUT)         # (1, 3136)
    w1s = jnp.asarray(_deconv_stage1_weights(w2), jnp.bfloat16)     # (9, 128, 64)
    b1r = jnp.asarray(np.tile(np.asarray(b2, np.float32), 4).reshape(4 * c, 1))
    w2s = jnp.asarray(_deconv_stage2_weights(w1), jnp.bfloat16)     # (9, 16, 128)
    b2r = jnp.asarray(b1, jnp.float32).reshape(1, 1)                # (1, 1)
    return (wfc, bfc, w1s, b1r, w2s, b2r)


# ---------------------------------------------------------------------------
# Fully fused Net3 kernel
# ---------------------------------------------------------------------------
def _lane_shift(v, d):
    """Static lane shift: out[:, i] = v[:, i + d], zero-filled at the ends."""
    if d == 0:
        return v
    pad = jnp.zeros((v.shape[0], abs(d)), v.dtype)
    if d > 0:
        return jnp.concatenate([v[:, d:], pad], axis=1)
    return jnp.concatenate([pad, v[:, :d]], axis=1)


def _net3_kernel(x_ref, wfc_ref, bfc_ref, w1_ref, b1_ref, w2_ref, b2_ref,
                 mask_ref, o_ref, *, batch):
    B = batch
    C2 = 2 * CAPACITY        # 64
    C1 = CAPACITY            # 32
    N = B * 49

    # ---- fc1 + leaky_relu: one MXU matmul (bf16 operands, f32 accum) -------
    x = x_ref[...].astype(jnp.bfloat16)
    h = jnp.dot(x, wfc_ref[...], preferred_element_type=jnp.float32)
    h = h + bfc_ref[...]
    h = jnp.where(h >= 0, h, NEG_SLOPE * h)                  # (B, 3136) f32

    # ---- one relayout to conv form: (B, 64*49) -> (64, B*49) ---------------
    h3 = h.reshape(B, C2, 49)
    a0 = jnp.concatenate([h3[b] for b in range(B)], axis=1)  # (64, N)
    a0 = a0.astype(jnp.bfloat16)

    # ---- ConvTranspose2d(64->32, k4, s2, p1): 9 shift matmuls (phase-planar)
    acc1 = jnp.zeros((4 * C1, N), jnp.float32)
    for s, (dr, dc) in enumerate(SHIFTS):
        xs = _lane_shift(a0, 7 * dr + dc) * mask_ref[s]      # (64, N) bf16
        acc1 = acc1 + jnp.dot(w1_ref[s], xs, preferred_element_type=jnp.float32)
    z = acc1 + b1_ref[...]
    z = jnp.where(z >= 0, z, NEG_SLOPE * z)                  # (128, N) f32
    z = z.astype(jnp.bfloat16)

    # ---- ConvTranspose2d(32->1, k4, s2, p1) + sigmoid -----------------------
    acc2 = jnp.zeros((16, N), jnp.float32)
    for s, (dr, dc) in enumerate(SHIFTS):
        zs = _lane_shift(z, 7 * dr + dc) * mask_ref[s]       # (128, N) bf16
        acc2 = acc2 + jnp.dot(w2_ref[s], zs, preferred_element_type=jnp.float32)
    o_ref[...] = jax.nn.sigmoid(acc2 + b2_ref[...])          # (16, N) f32


def net3_forward(x, prepared):
    if x.ndim == 1:
        x = x[None, :]                                        # matches x.view(1, ...)
    B = x.shape[0]
    N = B * 49
    wfc, bfc, w1s, b1r, w2s, b2r = prepared
    masks = jnp.asarray(_shift_masks(B), jnp.bfloat16)        # (9, 1, N), 0/1 exact

    kernel = functools.partial(_net3_kernel, batch=B)
    out = pl.pallas_call(
        kernel,
        out_shape=jax.ShapeDtypeStruct((16, N), jnp.float32),
        grid=(1,),
        in_specs=[
            pl.BlockSpec(x.shape, lambda i: (0, 0)),
            pl.BlockSpec(wfc.shape, lambda i: (0, 0)),
            pl.BlockSpec(bfc.shape, lambda i: (0, 0)),
            pl.BlockSpec(w1s.shape, lambda i: (0, 0, 0)),
            pl.BlockSpec(b1r.shape, lambda i: (0, 0)),
            pl.BlockSpec(w2s.shape, lambda i: (0, 0, 0)),
            pl.BlockSpec(b2r.shape, lambda i: (0, 0)),
            pl.BlockSpec(masks.shape, lambda i: (0, 0, 0)),
        ],
        out_specs=pl.BlockSpec((16, N), lambda i: (0, 0)),
        compiler_params=pltpu.CompilerParams(dimension_semantics=("arbitrary",)),
    )(x, wfc, bfc, w1s, b1r, w2s, b2r, masks)

    # Phase-planar (16, B*49) -> NCHW (B, 1, 28, 28): one tiny wrapper reshape.
    o = out.reshape(4, 4, B, 7, 7)                 # [rowphase, colphase, b, a, c]
    y = jnp.transpose(o, (2, 3, 0, 4, 1)).reshape(B, 28, 28)
    return y[:, None, :, :]


# ---------------------------------------------------------------------------
# Pure-JAX reference (f32) for a correctness check
# ---------------------------------------------------------------------------
def _ref_deconv(x, w_t, b):
    cout = w_t.shape[1]
    wc = jnp.flip(jnp.transpose(w_t, (1, 0, 2, 3)), axis=(2, 3))   # (Cout,Cin,4,4)
    y = jax.lax.conv_general_dilated(
        x, wc, window_strides=(1, 1), padding=((2, 2), (2, 2)),
        lhs_dilation=(2, 2), dimension_numbers=("NCHW", "OIHW", "NCHW"))
    return y + b.reshape(1, cout, 1, 1)


def _ref_forward(x, params):
    fc_w, fc_b, w2, b2, w1, b1 = params
    if x.ndim == 1:
        x = x[None, :]
    h = x @ fc_w + fc_b
    h = jnp.where(h >= 0, h, NEG_SLOPE * h)
    h = h.reshape(x.shape[0], 2 * CAPACITY, 7, 7)
    h = _ref_deconv(h, w2, b2)
    h = jnp.where(h >= 0, h, NEG_SLOPE * h)
    return jax.nn.sigmoid(_ref_deconv(h, w1, b1))


if __name__ == "__main__":
    key = jax.random.PRNGKey(0)
    pkey, xkey = jax.random.split(key)
    params = init_params(pkey)
    prepared = prepare_params(params)                 # one-time, out of hot path
    x = jax.random.normal(xkey, (2, X_FDIM), jnp.float32)

    fwd = jax.jit(net3_forward)
    out = jax.block_until_ready(fwd(x, prepared))

    assert out.shape == (2, 1, 28, 28), out.shape
    assert bool(jnp.all(jnp.isfinite(out)))
    assert bool(jnp.all((out >= 0.0) & (out <= 1.0)))  # sigmoid range

    ref = _ref_forward(x, params)
    err = float(jnp.max(jnp.abs(out - ref)))
    assert err < 2e-2, err                             # bf16-matmul tolerance
    print("KERNEL_OK")
</pallas_src>

<mosaic_0001>
module attributes {stable_mosaic.version = 11 : i64} {
  func.func @_net3_kernel(%arg0: i32, %arg1: memref<2x128xf32, #tpu.memory_space<vmem>>, %arg2: memref<128x3136xbf16, #tpu.memory_space<vmem>>, %arg3: memref<1x3136xf32, #tpu.memory_space<vmem>>, %arg4: memref<9x128x64xbf16, #tpu.memory_space<vmem>>, %arg5: memref<128x1xf32, #tpu.memory_space<vmem>>, %arg6: memref<9x16x128xbf16, #tpu.memory_space<vmem>>, %arg7: memref<1x1xf32, #tpu.memory_space<vmem>>, %arg8: memref<9x1x98xbf16, #tpu.memory_space<vmem>>, %arg9: memref<16x98xf32, #tpu.memory_space<vmem>>) attributes {dimension_semantics = [#tpu.dimension_semantics<arbitrary>], iteration_bounds = array<i64: 1>, scalar_prefetch = 0 : i64, scratch_operands = 0 : i64, tpu.core_type = #tpu.core_type<tc>, window_params = [{pipeline_mode = #tpu.pipeline_mode<synchronous>, transform_indices = @transform_0, window_bounds = array<i64: 2, 128>}, {pipeline_mode = #tpu.pipeline_mode<synchronous>, transform_indices = @transform_1, window_bounds = array<i64: 128, 3136>}, {pipeline_mode = #tpu.pipeline_mode<synchronous>, transform_indices = @transform_2, window_bounds = array<i64: 1, 3136>}, {pipeline_mode = #tpu.pipeline_mode<synchronous>, transform_indices = @transform_3, window_bounds = array<i64: 9, 128, 64>}, {pipeline_mode = #tpu.pipeline_mode<synchronous>, transform_indices = @transform_4, window_bounds = array<i64: 128, 1>}, {pipeline_mode = #tpu.pipeline_mode<synchronous>, transform_indices = @transform_5, window_bounds = array<i64: 9, 16, 128>}, {pipeline_mode = #tpu.pipeline_mode<synchronous>, transform_indices = @transform_6, window_bounds = array<i64: 1, 1>}, {pipeline_mode = #tpu.pipeline_mode<synchronous>, transform_indices = @transform_7, window_bounds = array<i64: 9, 1, 98>}, {pipeline_mode = #tpu.pipeline_mode<synchronous>, transform_indices = @transform_8, window_bounds = array<i64: 16, 98>}]} {
    %c0 = arith.constant 0 : index
    %c0_0 = arith.constant 0 : index
    %0 = vector.load %arg1[%c0, %c0_0] : memref<2x128xf32, #tpu.memory_space<vmem>>, vector<2x128xf32>
    %1 = arith.truncf %0 : vector<2x128xf32> to vector<2x128xbf16>
    %c0_1 = arith.constant 0 : index
    %c0_2 = arith.constant 0 : index
    %2 = vector.load %arg2[%c0_1, %c0_2] : memref<128x3136xbf16, #tpu.memory_space<vmem>>, vector<128x3136xbf16>
    %cst = arith.constant dense<0.000000e+00> : vector<2x3136xf32>
    %3 = tpu.matmul %1, %2, %cst {dimension_numbers = #tpu.dot_dimension_numbers<[1], [0], [0], [1], [0, 0, 1, 1], [], []>} : vector<2x128xbf16>, vector<128x3136xbf16>, vector<2x3136xf32> -> vector<2x3136xf32>
    %c0_3 = arith.constant 0 : index
    %c0_4 = arith.constant 0 : index
    %4 = vector.load %arg3[%c0_3, %c0_4] : memref<1x3136xf32, #tpu.memory_space<vmem>>, vector<1x3136xf32>
    %5 = vector.broadcast %4 : vector<1x3136xf32> to vector<2x3136xf32>
    %6 = arith.addf %3, %5 : vector<2x3136xf32>
    %cst_5 = arith.constant 0.000000e+00 : f32
    %7 = vector.broadcast %cst_5 : f32 to vector<2x3136xf32>
    %8 = arith.cmpf oge, %6, %7 : vector<2x3136xf32>
    %cst_6 = arith.constant 2.000000e-01 : f32
    %9 = vector.broadcast %cst_6 : f32 to vector<2x3136xf32>
    %10 = arith.mulf %9, %6 : vector<2x3136xf32>
    %11 = arith.select %8, %6, %10 : vector<2x3136xi1>, vector<2x3136xf32>
    %12 = vector.shape_cast %11 : vector<2x3136xf32> to vector<2x64x49xf32>
    %13 = vector.extract_strided_slice %12 {offsets = [0, 0, 0], sizes = [1, 64, 49], strides = [1, 1, 1]} : vector<2x64x49xf32> to vector<1x64x49xf32>
    %14 = vector.shape_cast %13 : vector<1x64x49xf32> to vector<64x49xf32>
    %15 = vector.extract_strided_slice %12 {offsets = [1, 0, 0], sizes = [1, 64, 49], strides = [1, 1, 1]} : vector<2x64x49xf32> to vector<1x64x49xf32>
    %16 = vector.shape_cast %15 : vector<1x64x49xf32> to vector<64x49xf32>
    %17 = tpu.concatenate %14, %16 in 1 : vector<64x49xf32>, vector<64x49xf32> -> vector<64x98xf32>
    %18 = arith.truncf %17 : vector<64x98xf32> to vector<64x98xbf16>
    %cst_7 = arith.constant 0.000000e+00 : f32
    %19 = vector.broadcast %cst_7 : f32 to vector<128x98xf32>
    %cst_8 = arith.constant 0.000000e+00 : bf16
    %20 = vector.broadcast %cst_8 : bf16 to vector<64x8xbf16>
    %21 = vector.extract_strided_slice %18 {offsets = [0, 0], sizes = [64, 90], strides = [1, 1]} : vector<64x98xbf16> to vector<64x90xbf16>
    %22 = tpu.concatenate %20, %21 in 1 : vector<64x8xbf16>, vector<64x90xbf16> -> vector<64x98xbf16>
    %c0_9 = arith.constant 0 : index
    %c0_10 = arith.constant 0 : index
    %c0_11 = arith.constant 0 : index
    %23 = vector.load %arg8[%c0_9, %c0_10, %c0_11] : memref<9x1x98xbf16, #tpu.memory_space<vmem>>, vector<1x1x98xbf16>
    %24 = vector.shape_cast %23 : vector<1x1x98xbf16> to vector<1x98xbf16>
    %25 = vector.broadcast %24 : vector<1x98xbf16> to vector<64x98xbf16>
    %26 = arith.mulf %22, %25 : vector<64x98xbf16>
    %c0_12 = arith.constant 0 : index
    %c0_13 = arith.constant 0 : index
    %c0_14 = arith.constant 0 : index
    %27 = vector.load %arg4[%c0_12, %c0_13, %c0_14] : memref<9x128x64xbf16, #tpu.memory_space<vmem>>, vector<1x128x64xbf16>
    %28 = vector.shape_cast %27 : vector<1x128x64xbf16> to vector<128x64xbf16>
    %cst_15 = arith.constant dense<0.000000e+00> : vector<128x98xf32>
    %29 = tpu.matmul %28, %26, %cst_15 {dimension_numbers = #tpu.dot_dimension_numbers<[1], [0], [0], [1], [0, 0, 1, 1], [], []>} : vector<128x64xbf16>, vector<64x98xbf16>, vector<128x98xf32> -> vector<128x98xf32>
    %30 = arith.addf %19, %29 : vector<128x98xf32>
    %cst_16 = arith.constant 0.000000e+00 : bf16
    %31 = vector.broadcast %cst_16 : bf16 to vector<64x7xbf16>
    %32 = vector.extract_strided_slice %18 {offsets = [0, 0], sizes = [64, 91], strides = [1, 1]} : vector<64x98xbf16> to vector<64x91xbf16>
    %33 = tpu.concatenate %31, %32 in 1 : vector<64x7xbf16>, vector<64x91xbf16> -> vector<64x98xbf16>
    %c1 = arith.constant 1 : index
    %c0_17 = arith.constant 0 : index
    %c0_18 = arith.constant 0 : index
    %34 = vector.load %arg8[%c1, %c0_17, %c0_18] : memref<9x1x98xbf16, #tpu.memory_space<vmem>>, vector<1x1x98xbf16>
    %35 = vector.shape_cast %34 : vector<1x1x98xbf16> to vector<1x98xbf16>
    %36 = vector.broadcast %35 : vector<1x98xbf16> to vector<64x98xbf16>
    %37 = arith.mulf %33, %36 : vector<64x98xbf16>
    %c1_19 = arith.constant 1 : index
    %c0_20 = arith.constant 0 : index
    %c0_21 = arith.constant 0 : index
    %38 = vector.load %arg4[%c1_19, %c0_20, %c0_21] : memref<9x128x64xbf16, #tpu.memory_space<vmem>>, vector<1x128x64xbf16>
    %39 = vector.shape_cast %38 : vector<1x128x64xbf16> to vector<128x64xbf16>
    %cst_22 = arith.constant dense<0.000000e+00> : vector<128x98xf32>
    %40 = tpu.matmul %39, %37, %cst_22 {dimension_numbers = #tpu.dot_dimension_numbers<[1], [0], [0], [1], [0, 0, 1, 1], [], []>} : vector<128x64xbf16>, vector<64x98xbf16>, vector<128x98xf32> -> vector<128x98xf32>
    %41 = arith.addf %30, %40 : vector<128x98xf32>
    %cst_23 = arith.constant 0.000000e+00 : bf16
    %42 = vector.broadcast %cst_23 : bf16 to vector<64x6xbf16>
    %43 = vector.extract_strided_slice %18 {offsets = [0, 0], sizes = [64, 92], strides = [1, 1]} : vector<64x98xbf16> to vector<64x92xbf16>
    %44 = tpu.concatenate %42, %43 in 1 : vector<64x6xbf16>, vector<64x92xbf16> -> vector<64x98xbf16>
    %c2 = arith.constant 2 : index
    %c0_24 = arith.constant 0 : index
    %c0_25 = arith.constant 0 : index
    %45 = vector.load %arg8[%c2, %c0_24, %c0_25] : memref<9x1x98xbf16, #tpu.memory_space<vmem>>, vector<1x1x98xbf16>
    %46 = vector.shape_cast %45 : vector<1x1x98xbf16> to vector<1x98xbf16>
    %47 = vector.broadcast %46 : vector<1x98xbf16> to vector<64x98xbf16>
    %48 = arith.mulf %44, %47 : vector<64x98xbf16>
    %c2_26 = arith.constant 2 : index
    %c0_27 = arith.constant 0 : index
    %c0_28 = arith.constant 0 : index
    %49 = vector.load %arg4[%c2_26, %c0_27, %c0_28] : memref<9x128x64xbf16, #tpu.memory_space<vmem>>, vector<1x128x64xbf16>
    %50 = vector.shape_cast %49 : vector<1x128x64xbf16> to vector<128x64xbf16>
    %cst_29 = arith.constant dense<0.000000e+00> : vector<128x98xf32>
    %51 = tpu.matmul %50, %48, %cst_29 {dimension_numbers = #tpu.dot_dimension_numbers<[1], [0], [0], [1], [0, 0, 1, 1], [], []>} : vector<128x64xbf16>, vector<64x98xbf16>, vector<128x98xf32> -> vector<128x98xf32>
    %52 = arith.addf %41, %51 : vector<128x98xf32>
    %cst_30 = arith.constant 0.000000e+00 : bf16
    %53 = vector.broadcast %cst_30 : bf16 to vector<64x1xbf16>
    %54 = vector.extract_strided_slice %18 {offsets = [0, 0], sizes = [64, 97], strides = [1, 1]} : vector<64x98xbf16> to vector<64x97xbf16>
    %55 = tpu.concatenate %53, %54 in 1 : vector<64x1xbf16>, vector<64x97xbf16> -> vector<64x98xbf16>
    %c3 = arith.constant 3 : index
    %c0_31 = arith.constant 0 : index
    %c0_32 = arith.constant 0 : index
    %56 = vector.load %arg8[%c3, %c0_31, %c0_32] : memref<9x1x98xbf16, #tpu.memory_space<vmem>>, vector<1x1x98xbf16>
    %57 = vector.shape_cast %56 : vector<1x1x98xbf16> to vector<1x98xbf16>
    %58 = vector.broadcast %57 : vector<1x98xbf16> to vector<64x98xbf16>
    %59 = arith.mulf %55, %58 : vector<64x98xbf16>
    %c3_33 = arith.constant 3 : index
    %c0_34 = arith.constant 0 : index
    %c0_35 = arith.constant 0 : index
    %60 = vector.load %arg4[%c3_33, %c0_34, %c0_35] : memref<9x128x64xbf16, #tpu.memory_space<vmem>>, vector<1x128x64xbf16>
    %61 = vector.shape_cast %60 : vector<1x128x64xbf16> to vector<128x64xbf16>
    %cst_36 = arith.constant dense<0.000000e+00> : vector<128x98xf32>
    %62 = tpu.matmul %61, %59, %cst_36 {dimension_numbers = #tpu.dot_dimension_numbers<[1], [0], [0], [1], [0, 0, 1, 1], [], []>} : vector<128x64xbf16>, vector<64x98xbf16>, vector<128x98xf32> -> vector<128x98xf32>
    %63 = arith.addf %52, %62 : vector<128x98xf32>
    %c4 = arith.constant 4 : index
    %c0_37 = arith.constant 0 : index
    %c0_38 = arith.constant 0 : index
    %64 = vector.load %arg8[%c4, %c0_37, %c0_38] : memref<9x1x98xbf16, #tpu.memory_space<vmem>>, vector<1x1x98xbf16>
    %65 = vector.shape_cast %64 : vector<1x1x98xbf16> to vector<1x98xbf16>
    %66 = vector.broadcast %65 : vector<1x98xbf16> to vector<64x98xbf16>
    %67 = arith.mulf %18, %66 : vector<64x98xbf16>
    %c4_39 = arith.constant 4 : index
    %c0_40 = arith.constant 0 : index
    %c0_41 = arith.constant 0 : index
    %68 = vector.load %arg4[%c4_39, %c0_40, %c0_41] : memref<9x128x64xbf16, #tpu.memory_space<vmem>>, vector<1x128x64xbf16>
    %69 = vector.shape_cast %68 : vector<1x128x64xbf16> to vector<128x64xbf16>
    %cst_42 = arith.constant dense<0.000000e+00> : vector<128x98xf32>
    %70 = tpu.matmul %69, %67, %cst_42 {dimension_numbers = #tpu.dot_dimension_numbers<[1], [0], [0], [1], [0, 0, 1, 1], [], []>} : vector<128x64xbf16>, vector<64x98xbf16>, vector<128x98xf32> -> vector<128x98xf32>
    %71 = arith.addf %63, %70 : vector<128x98xf32>
    %cst_43 = arith.constant 0.000000e+00 : bf16
    %72 = vector.broadcast %cst_43 : bf16 to vector<64x1xbf16>
    %73 = vector.extract_strided_slice %18 {offsets = [0, 1], sizes = [64, 97], strides = [1, 1]} : vector<64x98xbf16> to vector<64x97xbf16>
    %74 = tpu.concatenate %73, %72 in 1 : vector<64x97xbf16>, vector<64x1xbf16> -> vector<64x98xbf16>
    %c5 = arith.constant 5 : index
    %c0_44 = arith.constant 0 : index
    %c0_45 = arith.constant 0 : index
    %75 = vector.load %arg8[%c5, %c0_44, %c0_45] : memref<9x1x98xbf16, #tpu.memory_space<vmem>>, vector<1x1x98xbf16>
    %76 = vector.shape_cast %75 : vector<1x1x98xbf16> to vector<1x98xbf16>
    %77 = vector.broadcast %76 : vector<1x98xbf16> to vector<64x98xbf16>
    %78 = arith.mulf %74, %77 : vector<64x98xbf16>
    %c5_46 = arith.constant 5 : index
    %c0_47 = arith.constant 0 : index
    %c0_48 = arith.constant 0 : index
    %79 = vector.load %arg4[%c5_46, %c0_47, %c0_48] : memref<9x128x64xbf16, #tpu.memory_space<vmem>>, vector<1x128x64xbf16>
    %80 = vector.shape_cast %79 : vector<1x128x64xbf16> to vector<128x64xbf16>
    %cst_49 = arith.constant dense<0.000000e+00> : vector<128x98xf32>
    %81 = tpu.matmul %80, %78, %cst_49 {dimension_numbers = #tpu.dot_dimension_numbers<[1], [0], [0], [1], [0, 0, 1, 1], [], []>} : vector<128x64xbf16>, vector<64x98xbf16>, vector<128x98xf32> -> vector<128x98xf32>
    %82 = arith.addf %71, %81 : vector<128x98xf32>
    %cst_50 = arith.constant 0.000000e+00 : bf16
    %83 = vector.broadcast %cst_50 : bf16 to vector<64x6xbf16>
    %84 = vector.extract_strided_slice %18 {offsets = [0, 6], sizes = [64, 92], strides = [1, 1]} : vector<64x98xbf16> to vector<64x92xbf16>
    %85 = tpu.concatenate %84, %83 in 1 : vector<64x92xbf16>, vector<64x6xbf16> -> vector<64x98xbf16>
    %c6 = arith.constant 6 : index
    %c0_51 = arith.constant 0 : index
    %c0_52 = arith.constant 0 : index
    %86 = vector.load %arg8[%c6, %c0_51, %c0_52] : memref<9x1x98xbf16, #tpu.memory_space<vmem>>, vector<1x1x98xbf16>
    %87 = vector.shape_cast %86 : vector<1x1x98xbf16> to vector<1x98xbf16>
    %88 = vector.broadcast %87 : vector<1x98xbf16> to vector<64x98xbf16>
    %89 = arith.mulf %85, %88 : vector<64x98xbf16>
    %c6_53 = arith.constant 6 : index
    %c0_54 = arith.constant 0 : index
    %c0_55 = arith.constant 0 : index
    %90 = vector.load %arg4[%c6_53, %c0_54, %c0_55] : memref<9x128x64xbf16, #tpu.memory_space<vmem>>, vector<1x128x64xbf16>
    %91 = vector.shape_cast %90 : vector<1x128x64xbf16> to vector<128x64xbf16>
    %cst_56 = arith.constant dense<0.000000e+00> : vector<128x98xf32>
    %92 = tpu.matmul %91, %89, %cst_56 {dimension_numbers = #tpu.dot_dimension_numbers<[1], [0], [0], [1], [0, 0, 1, 1], [], []>} : vector<128x64xbf16>, vector<64x98xbf16>, vector<128x98xf32> -> vector<128x98xf32>
    %93 = arith.addf %82, %92 : vector<128x98xf32>
    %cst_57 = arith.constant 0.000000e+00 : bf16
    %94 = vector.broadcast %cst_57 : bf16 to vector<64x7xbf16>
    %95 = vector.extract_strided_slice %18 {offsets = [0, 7], sizes = [64, 91], strides = [1, 1]} : vector<64x98xbf16> to vector<64x91xbf16>
    %96 = tpu.concatenate %95, %94 in 1 : vector<64x91xbf16>, vector<64x7xbf16> -> vector<64x98xbf16>
    %c7 = arith.constant 7 : index
    %c0_58 = arith.constant 0 : index
    %c0_59 = arith.constant 0 : index
    %97 = vector.load %arg8[%c7, %c0_58, %c0_59] : memref<9x1x98xbf16, #tpu.memory_space<vmem>>, vector<1x1x98xbf16>
    %98 = vector.shape_cast %97 : vector<1x1x98xbf16> to vector<1x98xbf16>
    %99 = vector.broadcast %98 : vector<1x98xbf16> to vector<64x98xbf16>
    %100 = arith.mulf %96, %99 : vector<64x98xbf16>
    %c7_60 = arith.constant 7 : index
    %c0_61 = arith.constant 0 : index
    %c0_62 = arith.constant 0 : index
    %101 = vector.load %arg4[%c7_60, %c0_61, %c0_62] : memref<9x128x64xbf16, #tpu.memory_space<vmem>>, vector<1x128x64xbf16>
    %102 = vector.shape_cast %101 : vector<1x128x64xbf16> to vector<128x64xbf16>
    %cst_63 = arith.constant dense<0.000000e+00> : vector<128x98xf32>
    %103 = tpu.matmul %102, %100, %cst_63 {dimension_numbers = #tpu.dot_dimension_numbers<[1], [0], [0], [1], [0, 0, 1, 1], [], []>} : vector<128x64xbf16>, vector<64x98xbf16>, vector<128x98xf32> -> vector<128x98xf32>
    %104 = arith.addf %93, %103 : vector<128x98xf32>
    %cst_64 = arith.constant 0.000000e+00 : bf16
    %105 = vector.broadcast %cst_64 : bf16 to vector<64x8xbf16>
    %106 = vector.extract_strided_slice %18 {offsets = [0, 8], sizes = [64, 90], strides = [1, 1]} : vector<64x98xbf16> to vector<64x90xbf16>
    %107 = tpu.concatenate %106, %105 in 1 : vector<64x90xbf16>, vector<64x8xbf16> -> vector<64x98xbf16>
    %c8 = arith.constant 8 : index
    %c0_65 = arith.constant 0 : index
    %c0_66 = arith.constant 0 : index
    %108 = vector.load %arg8[%c8, %c0_65, %c0_66] : memref<9x1x98xbf16, #tpu.memory_space<vmem>>, vector<1x1x98xbf16>
    %109 = vector.shape_cast %108 : vector<1x1x98xbf16> to vector<1x98xbf16>
    %110 = vector.broadcast %109 : vector<1x98xbf16> to vector<64x98xbf16>
    %111 = arith.mulf %107, %110 : vector<64x98xbf16>
    %c8_67 = arith.constant 8 : index
    %c0_68 = arith.constant 0 : index
    %c0_69 = arith.constant 0 : index
    %112 = vector.load %arg4[%c8_67, %c0_68, %c0_69] : memref<9x128x64xbf16, #tpu.memory_space<vmem>>, vector<1x128x64xbf16>
    %113 = vector.shape_cast %112 : vector<1x128x64xbf16> to vector<128x64xbf16>
    %cst_70 = arith.constant dense<0.000000e+00> : vector<128x98xf32>
    %114 = tpu.matmul %113, %111, %cst_70 {dimension_numbers = #tpu.dot_dimension_numbers<[1], [0], [0], [1], [0, 0, 1, 1], [], []>} : vector<128x64xbf16>, vector<64x98xbf16>, vector<128x98xf32> -> vector<128x98xf32>
    %115 = arith.addf %104, %114 : vector<128x98xf32>
    %c0_71 = arith.constant 0 : index
    %c0_72 = arith.constant 0 : index
    %116 = vector.load %arg5[%c0_71, %c0_72] : memref<128x1xf32, #tpu.memory_space<vmem>>, vector<128x1xf32>
    %117 = vector.broadcast %116 : vector<128x1xf32> to vector<128x98xf32>
    %118 = arith.addf %115, %117 : vector<128x98xf32>
    %cst_73 = arith.constant 0.000000e+00 : f32
    %119 = vector.broadcast %cst_73 : f32 to vector<128x98xf32>
    %120 = arith.cmpf oge, %118, %119 : vector<128x98xf32>
    %cst_74 = arith.constant 2.000000e-01 : f32
    %121 = vector.broadcast %cst_74 : f32 to vector<128x98xf32>
    %122 = arith.mulf %121, %118 : vector<128x98xf32>
    %123 = arith.select %120, %118, %122 : vector<128x98xi1>, vector<128x98xf32>
    %124 = arith.truncf %123 : vector<128x98xf32> to vector<128x98xbf16>
    %cst_75 = arith.constant 0.000000e+00 : f32
    %125 = vector.broadcast %cst_75 : f32 to vector<16x98xf32>
    %cst_76 = arith.constant 0.000000e+00 : bf16
    %126 = vector.broadcast %cst_76 : bf16 to vector<128x8xbf16>
    %127 = vector.extract_strided_slice %124 {offsets = [0, 0], sizes = [128, 90], strides = [1, 1]} : vector<128x98xbf16> to vector<128x90xbf16>
    %128 = tpu.concatenate %126, %127 in 1 : vector<128x8xbf16>, vector<128x90xbf16> -> vector<128x98xbf16>
    %c0_77 = arith.constant 0 : index
    %c0_78 = arith.constant 0 : index
    %c0_79 = arith.constant 0 : index
    %129 = vector.load %arg8[%c0_77, %c0_78, %c0_79] : memref<9x1x98xbf16, #tpu.memory_space<vmem>>, vector<1x1x98xbf16>
    %130 = vector.shape_cast %129 : vector<1x1x98xbf16> to vector<1x98xbf16>
    %131 = vector.broadcast %130 : vector<1x98xbf16> to vector<128x98xbf16>
    %132 = arith.mulf %128, %131 : vector<128x98xbf16>
    %c0_80 = arith.constant 0 : index
    %c0_81 = arith.constant 0 : index
    %c0_82 = arith.constant 0 : index
    %133 = vector.load %arg6[%c0_80, %c0_81, %c0_82] : memref<9x16x128xbf16, #tpu.memory_space<vmem>>, vector<1x16x128xbf16>
    %134 = vector.shape_cast %133 : vector<1x16x128xbf16> to vector<16x128xbf16>
    %cst_83 = arith.constant dense<0.000000e+00> : vector<16x98xf32>
    %135 = tpu.matmul %134, %132, %cst_83 {dimension_numbers = #tpu.dot_dimension_numbers<[1], [0], [0], [1], [0, 0, 1, 1], [], []>} : vector<16x128xbf16>, vector<128x98xbf16>, vector<16x98xf32> -> vector<16x98xf32>
    %136 = arith.addf %125, %135 : vector<16x98xf32>
    %cst_84 = arith.constant 0.000000e+00 : bf16
    %137 = vector.broadcast %cst_84 : bf16 to vector<128x7xbf16>
    %138 = vector.extract_strided_slice %124 {offsets = [0, 0], sizes = [128, 91], strides = [1, 1]} : vector<128x98xbf16> to vector<128x91xbf16>
    %139 = tpu.concatenate %137, %138 in 1 : vector<128x7xbf16>, vector<128x91xbf16> -> vector<128x98xbf16>
    %c1_85 = arith.constant 1 : index
    %c0_86 = arith.constant 0 : index
    %c0_87 = arith.constant 0 : index
    %140 = vector.load %arg8[%c1_85, %c0_86, %c0_87] : memref<9x1x98xbf16, #tpu.memory_space<vmem>>, vector<1x1x98xbf16>
    %141 = vector.shape_cast %140 : vector<1x1x98xbf16> to vector<1x98xbf16>
    %142 = vector.broadcast %141 : vector<1x98xbf16> to vector<128x98xbf16>
    %143 = arith.mulf %139, %142 : vector<128x98xbf16>
    %c1_88 = arith.constant 1 : index
    %c0_89 = arith.constant 0 : index
    %c0_90 = arith.constant 0 : index
    %144 = vector.load %arg6[%c1_88, %c0_89, %c0_90] : memref<9x16x128xbf16, #tpu.memory_space<vmem>>, vector<1x16x128xbf16>
    %145 = vector.shape_cast %144 : vector<1x16x128xbf16> to vector<16x128xbf16>
    %cst_91 = arith.constant dense<0.000000e+00> : vector<16x98xf32>
    %146 = tpu.matmul %145, %143, %cst_91 {dimension_numbers = #tpu.dot_dimension_numbers<[1], [0], [0], [1], [0, 0, 1, 1], [], []>} : vector<16x128xbf16>, vector<128x98xbf16>, vector<16x98xf32> -> vector<16x98xf32>
    %147 = arith.addf %136, %146 : vector<16x98xf32>
    %cst_92 = arith.constant 0.000000e+00 : bf16
    %148 = vector.broadcast %cst_92 : bf16 to vector<128x6xbf16>
    %149 = vector.extract_strided_slice %124 {offsets = [0, 0], sizes = [128, 92], strides = [1, 1]} : vector<128x98xbf16> to vector<128x92xbf16>
    %150 = tpu.concatenate %148, %149 in 1 : vector<128x6xbf16>, vector<128x92xbf16> -> vector<128x98xbf16>
    %c2_93 = arith.constant 2 : index
    %c0_94 = arith.constant 0 : index
    %c0_95 = arith.constant 0 : index
    %151 = vector.load %arg8[%c2_93, %c0_94, %c0_95] : memref<9x1x98xbf16, #tpu.memory_space<vmem>>, vector<1x1x98xbf16>
    %152 = vector.shape_cast %151 : vector<1x1x98xbf16> to vector<1x98xbf16>
    %153 = vector.broadcast %152 : vector<1x98xbf16> to vector<128x98xbf16>
    %154 = arith.mulf %150, %153 : vector<128x98xbf16>
    %c2_96 = arith.constant 2 : index
    %c0_97 = arith.constant 0 : index
    %c0_98 = arith.constant 0 : index
    %155 = vector.load %arg6[%c2_96, %c0_97, %c0_98] : memref<9x16x128xbf16, #tpu.memory_space<vmem>>, vector<1x16x128xbf16>
    %156 = vector.shape_cast %155 : vector<1x16x128xbf16> to vector<16x128xbf16>
    %cst_99 = arith.constant dense<0.000000e+00> : vector<16x98xf32>
    %157 = tpu.matmul %156, %154, %cst_99 {dimension_numbers = #tpu.dot_dimension_numbers<[1], [0], [0], [1], [0, 0, 1, 1], [], []>} : vector<16x128xbf16>, vector<128x98xbf16>, vector<16x98xf32> -> vector<16x98xf32>
    %158 = arith.addf %147, %157 : vector<16x98xf32>
    %cst_100 = arith.constant 0.000000e+00 : bf16
    %159 = vector.broadcast %cst_100 : bf16 to vector<128x1xbf16>
    %160 = vector.extract_strided_slice %124 {offsets = [0, 0], sizes = [128, 97], strides = [1, 1]} : vector<128x98xbf16> to vector<128x97xbf16>
    %161 = tpu.concatenate %159, %160 in 1 : vector<128x1xbf16>, vector<128x97xbf16> -> vector<128x98xbf16>
    %c3_101 = arith.constant 3 : index
    %c0_102 = arith.constant 0 : index
    %c0_103 = arith.constant 0 : index
    %162 = vector.load %arg8[%c3_101, %c0_102, %c0_103] : memref<9x1x98xbf16, #tpu.memory_space<vmem>>, vector<1x1x98xbf16>
    %163 = vector.shape_cast %162 : vector<1x1x98xbf16> to vector<1x98xbf16>
    %164 = vector.broadcast %163 : vector<1x98xbf16> to vector<128x98xbf16>
    %165 = arith.mulf %161, %164 : vector<128x98xbf16>
    %c3_104 = arith.constant 3 : index
    %c0_105 = arith.constant 0 : index
    %c0_106 = arith.constant 0 : index
    %166 = vector.load %arg6[%c3_104, %c0_105, %c0_106] : memref<9x16x128xbf16, #tpu.memory_space<vmem>>, vector<1x16x128xbf16>
    %167 = vector.shape_cast %166 : vector<1x16x128xbf16> to vector<16x128xbf16>
    %cst_107 = arith.constant dense<0.000000e+00> : vector<16x98xf32>
    %168 = tpu.matmul %167, %165, %cst_107 {dimension_numbers = #tpu.dot_dimension_numbers<[1], [0], [0], [1], [0, 0, 1, 1], [], []>} : vector<16x128xbf16>, vector<128x98xbf16>, vector<16x98xf32> -> vector<16x98xf32>
    %169 = arith.addf %158, %168 : vector<16x98xf32>
    %c4_108 = arith.constant 4 : index
    %c0_109 = arith.constant 0 : index
    %c0_110 = arith.constant 0 : index
    %170 = vector.load %arg8[%c4_108, %c0_109, %c0_110] : memref<9x1x98xbf16, #tpu.memory_space<vmem>>, vector<1x1x98xbf16>
    %171 = vector.shape_cast %170 : vector<1x1x98xbf16> to vector<1x98xbf16>
    %172 = vector.broadcast %171 : vector<1x98xbf16> to vector<128x98xbf16>
    %173 = arith.mulf %124, %172 : vector<128x98xbf16>
    %c4_111 = arith.constant 4 : index
    %c0_112 = arith.constant 0 : index
    %c0_113 = arith.constant 0 : index
    %174 = vector.load %arg6[%c4_111, %c0_112, %c0_113] : memref<9x16x128xbf16, #tpu.memory_space<vmem>>, vector<1x16x128xbf16>
    %175 = vector.shape_cast %174 : vector<1x16x128xbf16> to vector<16x128xbf16>
    %cst_114 = arith.constant dense<0.000000e+00> : vector<16x98xf32>
    %176 = tpu.matmul %175, %173, %cst_114 {dimension_numbers = #tpu.dot_dimension_numbers<[1], [0], [0], [1], [0, 0, 1, 1], [], []>} : vector<16x128xbf16>, vector<128x98xbf16>, vector<16x98xf32> -> vector<16x98xf32>
    %177 = arith.addf %169, %176 : vector<16x98xf32>
    %cst_115 = arith.constant 0.000000e+00 : bf16
    %178 = vector.broadcast %cst_115 : bf16 to vector<128x1xbf16>
    %179 = vector.extract_strided_slice %124 {offsets = [0, 1], sizes = [128, 97], strides = [1, 1]} : vector<128x98xbf16> to vector<128x97xbf16>
    %180 = tpu.concatenate %179, %178 in 1 : vector<128x97xbf16>, vector<128x1xbf16> -> vector<128x98xbf16>
    %c5_116 = arith.constant 5 : index
    %c0_117 = arith.constant 0 : index
    %c0_118 = arith.constant 0 : index
    %181 = vector.load %arg8[%c5_116, %c0_117, %c0_118] : memref<9x1x98xbf16, #tpu.memory_space<vmem>>, vector<1x1x98xbf16>
    %182 = vector.shape_cast %181 : vector<1x1x98xbf16> to vector<1x98xbf16>
    %183 = vector.broadcast %182 : vector<1x98xbf16> to vector<128x98xbf16>
    %184 = arith.mulf %180, %183 : vector<128x98xbf16>
    %c5_119 = arith.constant 5 : index
    %c0_120 = arith.constant 0 : index
    %c0_121 = arith.constant 0 : index
    %185 = vector.load %arg6[%c5_119, %c0_120, %c0_121] : memref<9x16x128xbf16, #tpu.memory_space<vmem>>, vector<1x16x128xbf16>
    %186 = vector.shape_cast %185 : vector<1x16x128xbf16> to vector<16x128xbf16>
    %cst_122 = arith.constant dense<0.000000e+00> : vector<16x98xf32>
    %187 = tpu.matmul %186, %184, %cst_122 {dimension_numbers = #tpu.dot_dimension_numbers<[1], [0], [0], [1], [0, 0, 1, 1], [], []>} : vector<16x128xbf16>, vector<128x98xbf16>, vector<16x98xf32> -> vector<16x98xf32>
    %188 = arith.addf %177, %187 : vector<16x98xf32>
    %cst_123 = arith.constant 0.000000e+00 : bf16
    %189 = vector.broadcast %cst_123 : bf16 to vector<128x6xbf16>
    %190 = vector.extract_strided_slice %124 {offsets = [0, 6], sizes = [128, 92], strides = [1, 1]} : vector<128x98xbf16> to vector<128x92xbf16>
    %191 = tpu.concatenate %190, %189 in 1 : vector<128x92xbf16>, vector<128x6xbf16> -> vector<128x98xbf16>
    %c6_124 = arith.constant 6 : index
    %c0_125 = arith.constant 0 : index
    %c0_126 = arith.constant 0 : index
    %192 = vector.load %arg8[%c6_124, %c0_125, %c0_126] : memref<9x1x98xbf16, #tpu.memory_space<vmem>>, vector<1x1x98xbf16>
    %193 = vector.shape_cast %192 : vector<1x1x98xbf16> to vector<1x98xbf16>
    %194 = vector.broadcast %193 : vector<1x98xbf16> to vector<128x98xbf16>
    %195 = arith.mulf %191, %194 : vector<128x98xbf16>
    %c6_127 = arith.constant 6 : index
    %c0_128 = arith.constant 0 : index
    %c0_129 = arith.constant 0 : index
    %196 = vector.load %arg6[%c6_127, %c0_128, %c0_129] : memref<9x16x128xbf16, #tpu.memory_space<vmem>>, vector<1x16x128xbf16>
    %197 = vector.shape_cast %196 : vector<1x16x128xbf16> to vector<16x128xbf16>
    %cst_130 = arith.constant dense<0.000000e+00> : vector<16x98xf32>
    %198 = tpu.matmul %197, %195, %cst_130 {dimension_numbers = #tpu.dot_dimension_numbers<[1], [0], [0], [1], [0, 0, 1, 1], [], []>} : vector<16x128xbf16>, vector<128x98xbf16>, vector<16x98xf32> -> vector<16x98xf32>
    %199 = arith.addf %188, %198 : vector<16x98xf32>
    %cst_131 = arith.constant 0.000000e+00 : bf16
    %200 = vector.broadcast %cst_131 : bf16 to vector<128x7xbf16>
    %201 = vector.extract_strided_slice %124 {offsets = [0, 7], sizes = [128, 91], strides = [1, 1]} : vector<128x98xbf16> to vector<128x91xbf16>
    %202 = tpu.concatenate %201, %200 in 1 : vector<128x91xbf16>, vector<128x7xbf16> -> vector<128x98xbf16>
    %c7_132 = arith.constant 7 : index
    %c0_133 = arith.constant 0 : index
    %c0_134 = arith.constant 0 : index
    %203 = vector.load %arg8[%c7_132, %c0_133, %c0_134] : memref<9x1x98xbf16, #tpu.memory_space<vmem>>, vector<1x1x98xbf16>
    %204 = vector.shape_cast %203 : vector<1x1x98xbf16> to vector<1x98xbf16>
    %205 = vector.broadcast %204 : vector<1x98xbf16> to vector<128x98xbf16>
    %206 = arith.mulf %202, %205 : vector<128x98xbf16>
    %c7_135 = arith.constant 7 : index
    %c0_136 = arith.constant 0 : index
    %c0_137 = arith.constant 0 : index
    %207 = vector.load %arg6[%c7_135, %c0_136, %c0_137] : memref<9x16x128xbf16, #tpu.memory_space<vmem>>, vector<1x16x128xbf16>
    %208 = vector.shape_cast %207 : vector<1x16x128xbf16> to vector<16x128xbf16>
    %cst_138 = arith.constant dense<0.000000e+00> : vector<16x98xf32>
    %209 = tpu.matmul %208, %206, %cst_138 {dimension_numbers = #tpu.dot_dimension_numbers<[1], [0], [0], [1], [0, 0, 1, 1], [], []>} : vector<16x128xbf16>, vector<128x98xbf16>, vector<16x98xf32> -> vector<16x98xf32>
    %210 = arith.addf %199, %209 : vector<16x98xf32>
    %cst_139 = arith.constant 0.000000e+00 : bf16
    %211 = vector.broadcast %cst_139 : bf16 to vector<128x8xbf16>
    %212 = vector.extract_strided_slice %124 {offsets = [0, 8], sizes = [128, 90], strides = [1, 1]} : vector<128x98xbf16> to vector<128x90xbf16>
    %213 = tpu.concatenate %212, %211 in 1 : vector<128x90xbf16>, vector<128x8xbf16> -> vector<128x98xbf16>
    %c8_140 = arith.constant 8 : index
    %c0_141 = arith.constant 0 : index
    %c0_142 = arith.constant 0 : index
    %214 = vector.load %arg8[%c8_140, %c0_141, %c0_142] : memref<9x1x98xbf16, #tpu.memory_space<vmem>>, vector<1x1x98xbf16>
    %215 = vector.shape_cast %214 : vector<1x1x98xbf16> to vector<1x98xbf16>
    %216 = vector.broadcast %215 : vector<1x98xbf16> to vector<128x98xbf16>
    %217 = arith.mulf %213, %216 : vector<128x98xbf16>
    %c8_143 = arith.constant 8 : index
    %c0_144 = arith.constant 0 : index
    %c0_145 = arith.constant 0 : index
    %218 = vector.load %arg6[%c8_143, %c0_144, %c0_145] : memref<9x16x128xbf16, #tpu.memory_space<vmem>>, vector<1x16x128xbf16>
    %219 = vector.shape_cast %218 : vector<1x16x128xbf16> to vector<16x128xbf16>
    %cst_146 = arith.constant dense<0.000000e+00> : vector<16x98xf32>
    %220 = tpu.matmul %219, %217, %cst_146 {dimension_numbers = #tpu.dot_dimension_numbers<[1], [0], [0], [1], [0, 0, 1, 1], [], []>} : vector<16x128xbf16>, vector<128x98xbf16>, vector<16x98xf32> -> vector<16x98xf32>
    %221 = arith.addf %210, %220 : vector<16x98xf32>
    %c0_147 = arith.constant 0 : index
    %c0_148 = arith.constant 0 : index
    %222 = vector.load %arg7[%c0_147, %c0_148] : memref<1x1xf32, #tpu.memory_space<vmem>>, vector<1x1xf32>
    %223 = vector.broadcast %222 : vector<1x1xf32> to vector<16x98xf32>
    %224 = arith.addf %221, %223 : vector<16x98xf32>
    %225 = arith.negf %224 : vector<16x98xf32>
    %226 = math.exp %225 : vector<16x98xf32>
    %cst_149 = arith.constant 1.000000e+00 : f32
    %227 = vector.broadcast %cst_149 : f32 to vector<16x98xf32>
    %228 = arith.addf %227, %226 : vector<16x98xf32>
    %229 = arith.divf %227, %228 : vector<16x98xf32>
    %c0_150 = arith.constant 0 : index
    %c0_151 = arith.constant 0 : index
    %230 = vector.load %arg9[%c0_150, %c0_151] : memref<16x98xf32, #tpu.memory_space<vmem>>, vector<16x98xf32>
    tpu.vector_store %arg9[%c0_150, %c0_151], %229 {strides = array<i32>} : memref<16x98xf32, #tpu.memory_space<vmem>>, vector<16x98xf32>,
    return
  }
  func.func @transform_0(%arg0: i32) -> (i32, i32) {
    %c0_i32 = arith.constant 0 : i32
    %c0_i32_0 = arith.constant 0 : i32
    %c0_i32_1 = arith.constant 0 : i32
    return %c0_i32, %c0_i32_0 : i32, i32
  }
  func.func @transform_1(%arg0: i32) -> (i32, i32) {
    %c0_i32 = arith.constant 0 : i32
    %c0_i32_0 = arith.constant 0 : i32
    %c0_i32_1 = arith.constant 0 : i32
    return %c0_i32, %c0_i32_0 : i32, i32
  }
  func.func @transform_2(%arg0: i32) -> (i32, i32) {
    %c0_i32 = arith.constant 0 : i32
    %c0_i32_0 = arith.constant 0 : i32
    %c0_i32_1 = arith.constant 0 : i32
    return %c0_i32, %c0_i32_0 : i32, i32
  }
  func.func @transform_3(%arg0: i32) -> (i32, i32, i32) {
    %c0_i32 = arith.constant 0 : i32
    %c0_i32_0 = arith.constant 0 : i32
    %c0_i32_1 = arith.constant 0 : i32
    %c0_i32_2 = arith.constant 0 : i32
    return %c0_i32, %c0_i32_0, %c0_i32_1 : i32, i32, i32
  }
  func.func @transform_4(%arg0: i32) -> (i32, i32) {
    %c0_i32 = arith.constant 0 : i32
    %c0_i32_0 = arith.constant 0 : i32
    %c0_i32_1 = arith.constant 0 : i32
    return %c0_i32, %c0_i32_0 : i32, i32
  }
  func.func @transform_5(%arg0: i32) -> (i32, i32, i32) {
    %c0_i32 = arith.constant 0 : i32
    %c0_i32_0 = arith.constant 0 : i32
    %c0_i32_1 = arith.constant 0 : i32
    %c0_i32_2 = arith.constant 0 : i32
    return %c0_i32, %c0_i32_0, %c0_i32_1 : i32, i32, i32
  }
  func.func @transform_6(%arg0: i32) -> (i32, i32) {
    %c0_i32 = arith.constant 0 : i32
    %c0_i32_0 = arith.constant 0 : i32
    %c0_i32_1 = arith.constant 0 : i32
    return %c0_i32, %c0_i32_0 : i32, i32
  }
  func.func @transform_7(%arg0: i32) -> (i32, i32, i32) {
    %c0_i32 = arith.constant 0 : i32
    %c0_i32_0 = arith.constant 0 : i32
    %c0_i32_1 = arith.constant 0 : i32
    %c0_i32_2 = arith.constant 0 : i32
    return %c0_i32, %c0_i32_0, %c0_i32_1 : i32, i32, i32
  }
  func.func @transform_8(%arg0: i32) -> (i32, i32) {
    %c0_i32 = arith.constant 0 : i32
    %c0_i32_0 = arith.constant 0 : i32
    %c0_i32_1 = arith.constant 0 : i32
    return %c0_i32, %c0_i32_0 : i32, i32
  }
}

</mosaic_0001>

<llo_original>
// kernel: net3_forward.1
$region0: #{net3_forward.1}
  #allocation0 [shape = 'u32[]', space=smem, size = 0x4, offset = 0x4, fixed_abs, tag = 'smem constant byte address 0x4 - core index']
  #allocation1 [shape = 'u32[72,128]{1,0:T(1,128)}', space=vmem, size = 0x9000, scoped, tag = 'internal scratch']
  #allocation2 [shape = 'f32[1,1]{1,0:T(1,128)S(1)}', space=vmem, size = 0x200, scoped, tag = 'scoped memory for net3_forward.1']
  %s0 = inlined_call_operand.vmem [shape: f32[2,128], index: 0, kind: input, shape index: {}]
  %s1 = inlined_call_operand.vmem [shape: bf16[128,3136], index: 1, kind: input, shape index: {}]
  %s2 = inlined_call_operand.vmem [shape: f32[1,3136], index: 2, kind: input, shape index: {}]
  %s3 = inlined_call_operand.vmem [shape: bf16[9,128,64], index: 3, kind: input, shape index: {}]
  %s4 = inlined_call_operand.vmem [shape: f32[128,1], index: 4, kind: input, shape index: {}]
  %s5 = inlined_call_operand.vmem [shape: bf16[9,16,128], index: 5, kind: input, shape index: {}]
  %s6 = inlined_call_operand.<no memory space> [shape: f32[1,1], index: 6, kind: input, shape index: {}]
  %s7 = inlined_call_operand.vmem [shape: bf16[9,1,98], index: 7, kind: input, shape index: {}]
  %s8 = inlined_call_operand.vmem [shape: f32[16,98], index: 8, kind: output, shape index: {}]
  %s9 = sld [smem:[#allocation0]]
  $region42: #{net3_forward.1} parent=0
    _
  %s11 = ssub.s32 1, %s9
  %s12 = scalar_select 0, %s11, %s9
  %v13 = vstv %s6
  %14 = vst [vmem:[#allocation2] sm:$0x1] %v13
  // Predicated region
  $region2: #{net3_forward.1} parent=0 // pred_check
    _
  $region3: #{net3_forward.1} parent=0 // pred_check_branch
    %16 = sbr.rel (0) target = $region5
  $region4: #{net3_forward.1} parent=0 // pred_region
    _
  $region5: #{net3_forward.1} parent=0 // pred_fallthru
    _
  // Predicated region
  $region6: #{net3_forward.1} parent=0 // pred_check
    _
  $region7: #{net3_forward.1} parent=0 // pred_check_branch
    %18 = sbr.rel (0) target = $region9
  $region8: #{net3_forward.1} parent=0 // pred_region
    _
  $region9: #{net3_forward.1} parent=0 // pred_fallthru
    _
  // Predicated region
  $region10: #{net3_forward.1} parent=0 // pred_check
    _
  $region11: #{net3_forward.1} parent=0 // pred_check_branch
    %20 = sbr.rel (0) target = $region13
  $region12: #{net3_forward.1} parent=0 // pred_region
    _
  $region13: #{net3_forward.1} parent=0 // pred_fallthru
    _
  // Predicated region
  $region14: #{net3_forward.1} parent=0 // pred_check
    _
  $region15: #{net3_forward.1} parent=0 // pred_check_branch
    %22 = sbr.rel (0) target = $region17
  $region16: #{net3_forward.1} parent=0 // pred_region
    _
  $region17: #{net3_forward.1} parent=0 // pred_fallthru
    _
  // Predicated region
  $region18: #{net3_forward.1} parent=0 // pred_check
    _
  $region19: #{net3_forward.1} parent=0 // pred_check_branch
    %24 = sbr.rel (0) target = $region21
  $region20: #{net3_forward.1} parent=0 // pred_region
    _
  $region21: #{net3_forward.1} parent=0 // pred_fallthru
    _
  // Predicated region
  $region22: #{net3_forward.1} parent=0 // pred_check
    _
  $region23: #{net3_forward.1} parent=0 // pred_check_branch
    %26 = sbr.rel (0) target = $region25
  $region24: #{net3_forward.1} parent=0 // pred_region
    _
  $region25: #{net3_forward.1} parent=0 // pred_fallthru
    _
  // Predicated region
  $region26: #{net3_forward.1} parent=0 // pred_check
    _
  $region27: #{net3_forward.1} parent=0 // pred_check_branch
    %28 = sbr.rel (0) target = $region29
  $region28: #{net3_forward.1} parent=0 // pred_region
    _
  $region29: #{net3_forward.1} parent=0 // pred_fallthru
    _
  // Predicated region
  $region30: #{net3_forward.1} parent=0 // pred_check
    _
  $region31: #{net3_forward.1} parent=0 // pred_check_branch
    %30 = sbr.rel (0) target = $region33
  $region32: #{net3_forward.1} parent=0 // pred_region
    _
  $region33: #{net3_forward.1} parent=0 // pred_fallthru
    _
  %v32 = vld [vmem:[%s0] sm:$0x3]
  %v33 = vpack.c.bf16 %v32, %v32
  %v34 = vld [vmem:[%s1] sm:$0xff]
  %v35 = vld [vmem:[%s1 + $0x8] sm:$0xff]
  %v36 = vld [vmem:[%s1 + $0x10] sm:$0xff]
  %v37 = vld [vmem:[%s1 + $0x18] sm:$0xff]
  %v38 = vld [vmem:[%s1 + $0x20] sm:$0xff]
  %v39 = vld [vmem:[%s1 + $0x28] sm:$0xff]
  %v40 = vld [vmem:[%s1 + $0x30] sm:$0xff]
  %v41 = vld [vmem:[%s1 + $0x38] sm:$0xff]
  %v42 = vld [vmem:[%s1 + $0x40] sm:$0xff]
  %v43 = vld [vmem:[%s1 + $0x48] sm:$0xff]
  %v44 = vld [vmem:[%s1 + $0x50] sm:$0xff]
  %v45 = vld [vmem:[%s1 + $0x58] sm:$0xff]
  %v46 = vld [vmem:[%s1 + $0x60] sm:$0xf]
  %v47 = vld [vmem:[%s1 + $0x64] sm:$0xff]
  %v48 = vld [vmem:[%s1 + $0x6c] sm:$0xff]
  %v49 = vld [vmem:[%s1 + $0x74] sm:$0xff]
  %v50 = vld [vmem:[%s1 + $0x7c] sm:$0xff]
  %v51 = vld [vmem:[%s1 + $0x84] sm:$0xff]
  %v52 = vld [vmem:[%s1 + $0x8c] sm:$0xff]
  %v53 = vld [vmem:[%s1 + $0x94] sm:$0xff]
  %v54 = vld [vmem:[%s1 + $0x9c] sm:$0xff]
  %v55 = vld [vmem:[%s1 + $0xa4] sm:$0xff]
  %v56 = vld [vmem:[%s1 + $0xac] sm:$0xff]
  %v57 = vld [vmem:[%s1 + $0xb4] sm:$0xff]
  %v58 = vld [vmem:[%s1 + $0xbc] sm:$0xff]
  %v59 = vld [vmem:[%s1 + $0xc4] sm:$0xf]
  %v60 = vld [vmem:[%s1 + $0xc8] sm:$0xff]
  %v61 = vld [vmem:[%s1 + $0xd0] sm:$0xff]
  %v62 = vld [vmem:[%s1 + $0xd8] sm:$0xff]
  %v63 = vld [vmem:[%s1 + $0xe0] sm:$0xff]
  %v64 = vld [vmem:[%s1 + $0xe8] sm:$0xff]
  %v65 = vld [vmem:[%s1 + $0xf0] sm:$0xff]
  %v66 = vld [vmem:[%s1 + $0xf8] sm:$0xff]
  %v67 = vld [vmem:[%s1 + $0x100] sm:$0xff]
  %v68 = vld [vmem:[%s1 + $0x108] sm:$0xff]
  %v69 = vld [vmem:[%s1 + $0x110] sm:$0xff]
  %v70 = vld [vmem:[%s1 + $0x118] sm:$0xff]
  %v71 = vld [vmem:[%s1 + $0x120] sm:$0xff]
  %v72 = vld [vmem:[%s1 + $0x128] sm:$0xf]
  %v73 = vld [vmem:[%s1 + $0x12c] sm:$0xff]
  %v74 = vld [vmem:[%s1 + $0x134] sm:$0xff]
  %v75 = vld [vmem:[%s1 + $0x13c] sm:$0xff]
  %v76 = vld [vmem:[%s1 + $0x144] sm:$0xff]
  %v77 = vld [vmem:[%s1 + $0x14c] sm:$0xff]
  %v78 = vld [vmem:[%s1 + $0x154] sm:$0xff]
  %v79 = vld [vmem:[%s1 + $0x15c] sm:$0xff]
  %v80 = vld [vmem:[%s1 + $0x164] sm:$0xff]
  %v81 = vld [vmem:[%s1 + $0x16c] sm:$0xff]
  %v82 = vld [vmem:[%s1 + $0x174] sm:$0xff]
  %v83 = vld [vmem:[%s1 + $0x17c] sm:$0xff]
  %v84 = vld [vmem:[%s1 + $0x184] sm:$0xff]
  %v85 = vld [vmem:[%s1 + $0x18c] sm:$0xf]
  %v86 = vld [vmem:[%s1 + $0x190] sm:$0xff]
  %v87 = vld [vmem:[%s1 + $0x198] sm:$0xff]
  %v88 = vld [vmem:[%s1 + $0x1a0] sm:$0xff]
  %v89 = vld [vmem:[%s1 + $0x1a8] sm:$0xff]
  %v90 = vld [vmem:[%s1 + $0x1b0] sm:$0xff]
  %v91 = vld [vmem:[%s1 + $0x1b8] sm:$0xff]
  %v92 = vld [vmem:[%s1 + $0x1c0] sm:$0xff]
  %v93 = vld [vmem:[%s1 + $0x1c8] sm:$0xff]
  %v94 = vld [vmem:[%s1 + $0x1d0] sm:$0xff]
  %v95 = vld [vmem:[%s1 + $0x1d8] sm:$0xff]
  %v96 = vld [vmem:[%s1 + $0x1e0] sm:$0xff]
  %v97 = vld [vmem:[%s1 + $0x1e8] sm:$0xff]
  %v98 = vld [vmem:[%s1 + $0x1f0] sm:$0xf]
  %v99 = vld [vmem:[%s1 + $0x1f4] sm:$0xff]
  %v100 = vld [vmem:[%s1 + $0x1fc] sm:$0xff]
  %v101 = vld [vmem:[%s1 + $0x204] sm:$0xff]
  %v102 = vld [vmem:[%s1 + $0x20c] sm:$0xff]
  %v103 = vld [vmem:[%s1 + $0x214] sm:$0xff]
  %v104 = vld [vmem:[%s1 + $0x21c] sm:$0xff]
  %v105 = vld [vmem:[%s1 + $0x224] sm:$0xff]
  %v106 = vld [vmem:[%s1 + $0x22c] sm:$0xff]
  %v107 = vld [vmem:[%s1 + $0x234] sm:$0xff]
  %v108 = vld [vmem:[%s1 + $0x23c] sm:$0xff]
  %v109 = vld [vmem:[%s1 + $0x244] sm:$0xff]
  %v110 = vld [vmem:[%s1 + $0x24c] sm:$0xff]
  %v111 = vld [vmem:[%s1 + $0x254] sm:$0xf]
  %v112 = vld [vmem:[%s1 + $0x258] sm:$0xff]
  %v113 = vld [vmem:[%s1 + $0x260] sm:$0xff]
  %v114 = vld [vmem:[%s1 + $0x268] sm:$0xff]
  %v115 = vld [vmem:[%s1 + $0x270] sm:$0xff]
  %v116 = vld [vmem:[%s1 + $0x278] sm:$0xff]
  %v117 = vld [vmem:[%s1 + $0x280] sm:$0xff]
  %v118 = vld [vmem:[%s1 + $0x288] sm:$0xff]
  %v119 = vld [vmem:[%s1 + $0x290] sm:$0xff]
  %v120 = vld [vmem:[%s1 + $0x298] sm:$0xff]
  %v121 = vld [vmem:[%s1 + $0x2a0] sm:$0xff]
  %v122 = vld [vmem:[%s1 + $0x2a8] sm:$0xff]
  %v123 = vld [vmem:[%s1 + $0x2b0] sm:$0xff]
  %v124 = vld [vmem:[%s1 + $0x2b8] sm:$0xf]
  %v125 = vld [vmem:[%s1 + $0x2bc] sm:$0xff]
  %v126 = vld [vmem:[%s1 + $0x2c4] sm:$0xff]
  %v127 = vld [vmem:[%s1 + $0x2cc] sm:$0xff]
  %v128 = vld [vmem:[%s1 + $0x2d4] sm:$0xff]
  %v129 = vld [vmem:[%s1 + $0x2dc] sm:$0xff]
  %v130 = vld [vmem:[%s1 + $0x2e4] sm:$0xff]
  %v131 = vld [vmem:[%s1 + $0x2ec] sm:$0xff]
  %v132 = vld [vmem:[%s1 + $0x2f4] sm:$0xff]
  %v133 = vld [vmem:[%s1 + $0x2fc] sm:$0xff]
  %v134 = vld [vmem:[%s1 + $0x304] sm:$0xff]
  %v135 = vld [vmem:[%s1 + $0x30c] sm:$0xff]
  %v136 = vld [vmem:[%s1 + $0x314] sm:$0xff]
  %v137 = vld [vmem:[%s1 + $0x31c] sm:$0xf]
  %v138 = vld [vmem:[%s1 + $0x320] sm:$0xff]
  %v139 = vld [vmem:[%s1 + $0x328] sm:$0xff]
  %v140 = vld [vmem:[%s1 + $0x330] sm:$0xff]
  %v141 = vld [vmem:[%s1 + $0x338] sm:$0xff]
  %v142 = vld [vmem:[%s1 + $0x340] sm:$0xff]
  %v143 = vld [vmem:[%s1 + $0x348] sm:$0xff]
  %v144 = vld [vmem:[%s1 + $0x350] sm:$0xff]
  %v145 = vld [vmem:[%s1 + $0x358] sm:$0xff]
  %v146 = vld [vmem:[%s1 + $0x360] sm:$0xff]
  %v147 = vld [vmem:[%s1 + $0x368] sm:$0xff]
  %v148 = vld [vmem:[%s1 + $0x370] sm:$0xff]
  %v149 = vld [vmem:[%s1 + $0x378] sm:$0xff]
  %v150 = vld [vmem:[%s1 + $0x380] sm:$0xf]
  %v151 = vld [vmem:[%s1 + $0x384] sm:$0xff]
  %v152 = vld [vmem:[%s1 + $0x38c] sm:$0xff]
  %v153 = vld [vmem:[%s1 + $0x394] sm:$0xff]
  %v154 = vld [vmem:[%s1 + $0x39c] sm:$0xff]
  %v155 = vld [vmem:[%s1 + $0x3a4] sm:$0xff]
  %v156 = vld [vmem:[%s1 + $0x3ac] sm:$0xff]
  %v157 = vld [vmem:[%s1 + $0x3b4] sm:$0xff]
  %v158 = vld [vmem:[%s1 + $0x3bc] sm:$0xff]
  %v159 = vld [vmem:[%s1 + $0x3c4] sm:$0xff]
  %v160 = vld [vmem:[%s1 + $0x3cc] sm:$0xff]
  %v161 = vld [vmem:[%s1 + $0x3d4] sm:$0xff]
  %v162 = vld [vmem:[%s1 + $0x3dc] sm:$0xff]
  %v163 = vld [vmem:[%s1 + $0x3e4] sm:$0xf]
  %v164 = vld [vmem:[%s1 + $0x3e8] sm:$0xff]
  %v165 = vld [vmem:[%s1 + $0x3f0] sm:$0xff]
  %v166 = vld [vmem:[%s1 + $0x3f8] sm:$0xff]
  %v167 = vld [vmem:[%s1 + $0x400] sm:$0xff]
  %v168 = vld [vmem:[%s1 + $0x408] sm:$0xff]
  %v169 = vld [vmem:[%s1 + $0x410] sm:$0xff]
  %v170 = vld [vmem:[%s1 + $0x418] sm:$0xff]
  %v171 = vld [vmem:[%s1 + $0x420] sm:$0xff]
  %v172 = vld [vmem:[%s1 + $0x428] sm:$0xff]
  %v173 = vld [vmem:[%s1 + $0x430] sm:$0xff]
  %v174 = vld [vmem:[%s1 + $0x438] sm:$0xff]
  %v175 = vld [vmem:[%s1 + $0x440] sm:$0xff]
  %v176 = vld [vmem:[%s1 + $0x448] sm:$0xf]
  %v177 = vld [vmem:[%s1 + $0x44c] sm:$0xff]
  %v178 = vld [vmem:[%s1 + $0x454] sm:$0xff]
  %v179 = vld [vmem:[%s1 + $0x45c] sm:$0xff]
  %v180 = vld [vmem:[%s1 + $0x464] sm:$0xff]
  %v181 = vld [vmem:[%s1 + $0x46c] sm:$0xff]
  %v182 = vld [vmem:[%s1 + $0x474] sm:$0xff]
  %v183 = vld [vmem:[%s1 + $0x47c] sm:$0xff]
  %v184 = vld [vmem:[%s1 + $0x484] sm:$0xff]
  %v185 = vld [vmem:[%s1 + $0x48c] sm:$0xff]
  %v186 = vld [vmem:[%s1 + $0x494] sm:$0xff]
  %v187 = vld [vmem:[%s1 + $0x49c] sm:$0xff]
  %v188 = vld [vmem:[%s1 + $0x4a4] sm:$0xff]
  %v189 = vld [vmem:[%s1 + $0x4ac] sm:$0xf]
  %v190 = vld [vmem:[%s1 + $0x4b0] sm:$0xff]
  %v191 = vld [vmem:[%s1 + $0x4b8] sm:$0xff]
  %v192 = vld [vmem:[%s1 + $0x4c0] sm:$0xff]
  %v193 = vld [vmem:[%s1 + $0x4c8] sm:$0xff]
  %v194 = vld [vmem:[%s1 + $0x4d0] sm:$0xff]
  %v195 = vld [vmem:[%s1 + $0x4d8] sm:$0xff]
  %v196 = vld [vmem:[%s1 + $0x4e0] sm:$0xff]
  %v197 = vld [vmem:[%s1 + $0x4e8] sm:$0xff]
  %v198 = vld [vmem:[%s1 + $0x4f0] sm:$0xff]
  %v199 = vld [vmem:[%s1 + $0x4f8] sm:$0xff]
  %v200 = vld [vmem:[%s1 + $0x500] sm:$0xff]
  %v201 = vld [vmem:[%s1 + $0x508] sm:$0xff]
  %v202 = vld [vmem:[%s1 + $0x510] sm:$0xf]
  %v203 = vld [vmem:[%s1 + $0x514] sm:$0xff]
  %v204 = vld [vmem:[%s1 + $0x51c] sm:$0xff]
  %v205 = vld [vmem:[%s1 + $0x524] sm:$0xff]
  %v206 = vld [vmem:[%s1 + $0x52c] sm:$0xff]
  %v207 = vld [vmem:[%s1 + $0x534] sm:$0xff]
  %v208 = vld [vmem:[%s1 + $0x53c] sm:$0xff]
  %v209 = vld [vmem:[%s1 + $0x544] sm:$0xff]
  %v210 = vld [vmem:[%s1 + $0x54c] sm:$0xff]
  %v211 = vld [vmem:[%s1 + $0x554] sm:$0xff]
  %v212 = vld [vmem:[%s1 + $0x55c] sm:$0xff]
  %v213 = vld [vmem:[%s1 + $0x564] sm:$0xff]
  %v214 = vld [vmem:[%s1 + $0x56c] sm:$0xff]
  %v215 = vld [vmem:[%s1 + $0x574] sm:$0xf]
  %v216 = vld [vmem:[%s1 + $0x578] sm:$0xff]
  %v217 = vld [vmem:[%s1 + $0x580] sm:$0xff]
  %v218 = vld [vmem:[%s1 + $0x588] sm:$0xff]
  %v219 = vld [vmem:[%s1 + $0x590] sm:$0xff]
  %v220 = vld [vmem:[%s1 + $0x598] sm:$0xff]
  %v221 = vld [vmem:[%s1 + $0x5a0] sm:$0xff]
  %v222 = vld [vmem:[%s1 + $0x5a8] sm:$0xff]
  %v223 = vld [vmem:[%s1 + $0x5b0] sm:$0xff]
  %v224 = vld [vmem:[%s1 + $0x5b8] sm:$0xff]
  %v225 = vld [vmem:[%s1 + $0x5c0] sm:$0xff]
  %v226 = vld [vmem:[%s1 + $0x5c8] sm:$0xff]
  %v227 = vld [vmem:[%s1 + $0x5d0] sm:$0xff]
  %v228 = vld [vmem:[%s1 + $0x5d8] sm:$0xf]
  %v229 = vld [vmem:[%s1 + $0x5dc] sm:$0xff]
  %v230 = vld [vmem:[%s1 + $0x5e4] sm:$0xff]
  %v231 = vld [vmem:[%s1 + $0x5ec] sm:$0xff]
  %v232 = vld [vmem:[%s1 + $0x5f4] sm:$0xff]
  %v233 = vld [vmem:[%s1 + $0x5fc] sm:$0xff]
  %v234 = vld [vmem:[%s1 + $0x604] sm:$0xff]
  %v235 = vld [vmem:[%s1 + $0x60c] sm:$0xff]
  %v236 = vld [vmem:[%s1 + $0x614] sm:$0xff]
  %v237 = vld [vmem:[%s1 + $0x61c] sm:$0xff]
  %v238 = vld [vmem:[%s1 + $0x624] sm:$0xff]
  %v239 = vld [vmem:[%s1 + $0x62c] sm:$0xff]
  %v240 = vld [vmem:[%s1 + $0x634] sm:$0xff]
  %v241 = vld [vmem:[%s1 + $0x63c] sm:$0xf]
  %v242 = vld [vmem:[%s2] sm:$0xff]
  %v243 = vld [vmem:[%s2 + $0x8] sm:$0xff]
  %v244 = vld [vmem:[%s2 + $0x10] sm:$0xff]
  %v245 = vld [vmem:[%s2 + $0x18] sm:$0x1]
  %v250 = vperm.slane %v242, 0
  %v251 = vperm.slane %v242, 1
  %v252 = vperm.slane %v242, 2
  %v253 = vperm.slane %v242, 3
  %v254 = vperm.slane %v242, 4
  %v255 = vperm.slane %v242, 5
  %v256 = vperm.slane %v242, 6
  %v257 = vperm.slane %v242, 7
  %v258 = vperm.slane %v243, 0
  %v259 = vperm.slane %v243, 1
  %v260 = vperm.slane %v243, 2
  %v261 = vperm.slane %v243, 3
  %v262 = vperm.slane %v243, 4
  %v263 = vperm.slane %v243, 5
  %v264 = vperm.slane %v243, 6
  %v265 = vperm.slane %v243, 7
  %v266 = vperm.slane %v244, 0
  %v267 = vperm.slane %v244, 1
  %v268 = vperm.slane %v244, 2
  %v269 = vperm.slane %v244, 3
  %v270 = vperm.slane %v244, 4
  %v271 = vperm.slane %v244, 5
  %v272 = vperm.slane %v244, 6
  %v273 = vperm.slane %v244, 7
  %v274 = vperm.slane %v245, 0
  %v508 = vunpack.c.l.b16 %v34
  %v509 = vunpack.c.h.b16 %v34
  %v510 = vunpack.c.l.b16 %v35
  %v511 = vunpack.c.h.b16 %v35
  %v512 = vunpack.c.l.b16 %v36
  %v513 = vunpack.c.h.b16 %v36
  %v514 = vunpack.c.l.b16 %v37
  %v515 = vunpack.c.h.b16 %v37
  %v516 = vunpack.c.l.b16 %v38
  %v517 = vunpack.c.h.b16 %v38
  %v518 = vunpack.c.l.b16 %v39
  %v519 = vunpack.c.h.b16 %v39
  %v520 = vunpack.c.l.b16 %v40
  %v521 = vunpack.c.h.b16 %v40
  %v522 = vunpack.c.l.b16 %v41
  %v523 = vunpack.c.h.b16 %v41
  %v524 = vunpack.c.l.b16 %v42
  %v525 = vunpack.c.h.b16 %v42
  %v526 = vunpack.c.l.b16 %v43
  %v527 = vunpack.c.h.b16 %v43
  %v528 = vunpack.c.l.b16 %v44
  %v529 = vunpack.c.h.b16 %v44
  %v530 = vunpack.c.l.b16 %v45
  %v531 = vunpack.c.h.b16 %v45
  %v532 = vunpack.c.l.b16 %v46
  %v533 = vunpack.c.l.b16 %v47
  %v534 = vunpack.c.h.b16 %v47
  %v535 = vunpack.c.l.b16 %v48
  %v536 = vunpack.c.h.b16 %v48
  %v537 = vunpack.c.l.b16 %v49
  %v538 = vunpack.c.h.b16 %v49
  %v539 = vunpack.c.l.b16 %v50
  %v540 = vunpack.c.h.b16 %v50
  %v541 = vunpack.c.l.b16 %v51
  %v542 = vunpack.c.h.b16 %v51
  %v543 = vunpack.c.l.b16 %v52
  %v544 = vunpack.c.h.b16 %v52
  %v545 = vunpack.c.l.b16 %v53
  %v546 = vunpack.c.h.b16 %v53
  %v547 = vunpack.c.l.b16 %v54
  %v548 = vunpack.c.h.b16 %v54
  %v549 = vunpack.c.l.b16 %v55
  %v550 = vunpack.c.h.b16 %v55
  %v551 = vunpack.c.l.b16 %v56
  %v552 = vunpack.c.h.b16 %v56
  %v553 = vunpack.c.l.b16 %v57
  %v554 = vunpack.c.h.b16 %v57
  %v555 = vunpack.c.l.b16 %v58
  %v556 = vunpack.c.h.b16 %v58
  %v557 = vunpack.c.l.b16 %v59
  %v558 = vunpack.c.l.b16 %v60
  %v559 = vunpack.c.h.b16 %v60
  %v560 = vunpack.c.l.b16 %v61
  %v561 = vunpack.c.h.b16 %v61
  %v562 = vunpack.c.l.b16 %v62
  %v563 = vunpack.c.h.b16 %v62
  %v564 = vunpack.c.l.b16 %v63
  %v565 = vunpack.c.h.b16 %v63
  %v566 = vunpack.c.l.b16 %v64
  %v567 = vunpack.c.h.b16 %v64
  %v568 = vunpack.c.l.b16 %v65
  %v569 = vunpack.c.h.b16 %v65
  %v570 = vunpack.c.l.b16 %v66
  %v571 = vunpack.c.h.b16 %v66
  %v572 = vunpack.c.l.b16 %v67
  %v573 = vunpack.c.h.b16 %v67
  %v574 = vunpack.c.l.b16 %v68
  %v575 = vunpack.c.h.b16 %v68
  %v576 = vunpack.c.l.b16 %v69
  %v577 = vunpack.c.h.b16 %v69
  %v578 = vunpack.c.l.b16 %v70
  %v579 = vunpack.c.h.b16 %v70
  %v580 = vunpack.c.l.b16 %v71
  %v581 = vunpack.c.h.b16 %v71
  %v582 = vunpack.c.l.b16 %v72
  %v583 = vunpack.c.l.b16 %v73
  %v584 = vunpack.c.h.b16 %v73
  %v585 = vunpack.c.l.b16 %v74
  %v586 = vunpack.c.h.b16 %v74
  %v587 = vunpack.c.l.b16 %v75
  %v588 = vunpack.c.h.b16 %v75
  %v589 = vunpack.c.l.b16 %v76
  %v590 = vunpack.c.h.b16 %v76
  %v591 = vunpack.c.l.b16 %v77
  %v592 = vunpack.c.h.b16 %v77
  %v593 = vunpack.c.l.b16 %v78
  %v594 = vunpack.c.h.b16 %v78
  %v595 = vunpack.c.l.b16 %v79
  %v596 = vunpack.c.h.b16 %v79
  %v597 = vunpack.c.l.b16 %v80
  %v598 = vunpack.c.h.b16 %v80
  %v599 = vunpack.c.l.b16 %v81
  %v600 = vunpack.c.h.b16 %v81
  %v601 = vunpack.c.l.b16 %v82
  %v602 = vunpack.c.h.b16 %v82
  %v603 = vunpack.c.l.b16 %v83
  %v604 = vunpack.c.h.b16 %v83
  %v605 = vunpack.c.l.b16 %v84
  %v606 = vunpack.c.h.b16 %v84
  %v607 = vunpack.c.l.b16 %v85
  %v608 = vunpack.c.l.b16 %v86
  %v609 = vunpack.c.h.b16 %v86
  %v610 = vunpack.c.l.b16 %v87
  %v611 = vunpack.c.h.b16 %v87
  %v612 = vunpack.c.l.b16 %v88
  %v613 = vunpack.c.h.b16 %v88
  %v614 = vunpack.c.l.b16 %v89
  %v615 = vunpack.c.h.b16 %v89
  %v616 = vunpack.c.l.b16 %v90
  %v617 = vunpack.c.h.b16 %v90
  %v618 = vunpack.c.l.b16 %v91
  %v619 = vunpack.c.h.b16 %v91
  %v620 = vunpack.c.l.b16 %v92
  %v621 = vunpack.c.h.b16 %v92
  %v622 = vunpack.c.l.b16 %v93
  %v623 = vunpack.c.h.b16 %v93
  %v624 = vunpack.c.l.b16 %v94
  %v625 = vunpack.c.h.b16 %v94
  %v626 = vunpack.c.l.b16 %v95
  %v627 = vunpack.c.h.b16 %v95
  %v628 = vunpack.c.l.b16 %v96
  %v629 = vunpack.c.h.b16 %v96
  %v630 = vunpack.c.l.b16 %v97
  %v631 = vunpack.c.h.b16 %v97
  %v632 = vunpack.c.l.b16 %v98
  %v633 = vunpack.c.l.b16 %v99
  %v634 = vunpack.c.h.b16 %v99
  %v635 = vunpack.c.l.b16 %v100
  %v636 = vunpack.c.h.b16 %v100
  %v637 = vunpack.c.l.b16 %v101
  %v638 = vunpack.c.h.b16 %v101
  %v639 = vunpack.c.l.b16 %v102
  %v640 = vunpack.c.h.b16 %v102
  %v641 = vunpack.c.l.b16 %v103
  %v642 = vunpack.c.h.b16 %v103
  %v643 = vunpack.c.l.b16 %v104
  %v644 = vunpack.c.h.b16 %v104
  %v645 = vunpack.c.l.b16 %v105
  %v646 = vunpack.c.h.b16 %v105
  %v647 = vunpack.c.l.b16 %v106
  %v648 = vunpack.c.h.b16 %v106
  %v649 = vunpack.c.l.b16 %v107
  %v650 = vunpack.c.h.b16 %v107
  %v651 = vunpack.c.l.b16 %v108
  %v652 = vunpack.c.h.b16 %v108
  %v653 = vunpack.c.l.b16 %v109
  %v654 = vunpack.c.h.b16 %v109
  %v655 = vunpack.c.l.b16 %v110
  %v656 = vunpack.c.h.b16 %v110
  %v657 = vunpack.c.l.b16 %v111
  %v658 = vunpack.c.l.b16 %v112
  %v659 = vunpack.c.h.b16 %v112
  %v660 = vunpack.c.l.b16 %v113
  %v661 = vunpack.c.h.b16 %v113
  %v662 = vunpack.c.l.b16 %v114
  %v663 = vunpack.c.h.b16 %v114
  %v664 = vunpack.c.l.b16 %v115
  %v665 = vunpack.c.h.b16 %v115
  %v666 = vunpack.c.l.b16 %v116
  %v667 = vunpack.c.h.b16 %v116
  %v668 = vunpack.c.l.b16 %v117
  %v669 = vunpack.c.h.b16 %v117
  %v670 = vunpack.c.l.b16 %v118
  %v671 = vunpack.c.h.b16 %v118
  %v672 = vunpack.c.l.b16 %v119
  %v673 = vunpack.c.h.b16 %v119
  %v674 = vunpack.c.l.b16 %v120
  %v675 = vunpack.c.h.b16 %v120
  %v676 = vunpack.c.l.b16 %v121
  %v677 = vunpack.c.h.b16 %v121
  %v678 = vunpack.c.l.b16 %v122
  %v679 = vunpack.c.h.b16 %v122
  %v680 = vunpack.c.l.b16 %v123
  %v681 = vunpack.c.h.b16 %v123
  %v682 = vunpack.c.l.b16 %v124
  %v683 = vunpack.c.l.b16 %v125
  %v684 = vunpack.c.h.b16 %v125
  %v685 = vunpack.c.l.b16 %v126
  %v686 = vunpack.c.h.b16 %v126
  %v687 = vunpack.c.l.b16 %v127
  %v688 = vunpack.c.h.b16 %v127
  %v689 = vunpack.c.l.b16 %v128
  %v690 = vunpack.c.h.b16 %v128
  %v691 = vunpack.c.l.b16 %v129
  %v692 = vunpack.c.h.b16 %v129
  %v693 = vunpack.c.l.b16 %v130
  %v694 = vunpack.c.h.b16 %v130
  %v695 = vunpack.c.l.b16 %v131
  %v696 = vunpack.c.h.b16 %v131
  %v697 = vunpack.c.l.b16 %v132
  %v698 = vunpack.c.h.b16 %v132
  %v699 = vunpack.c.l.b16 %v133
  %v700 = vunpack.c.h.b16 %v133
  %v701 = vunpack.c.l.b16 %v134
  %v702 = vunpack.c.h.b16 %v134
  %v703 = vunpack.c.l.b16 %v135
  %v704 = vunpack.c.h.b16 %v135
  %v705 = vunpack.c.l.b16 %v136
  %v706 = vunpack.c.h.b16 %v136
  %v707 = vunpack.c.l.b16 %v137
  %v708 = vunpack.c.l.b16 %v138
  %v709 = vunpack.c.h.b16 %v138
  %v710 = vunpack.c.l.b16 %v139
  %v711 = vunpack.c.h.b16 %v139
  %v712 = vunpack.c.l.b16 %v140
  %v713 = vunpack.c.h.b16 %v140
  %v714 = vunpack.c.l.b16 %v141
  %v715 = vunpack.c.h.b16 %v141
  %v716 = vunpack.c.l.b16 %v142
  %v717 = vunpack.c.h.b16 %v142
  %v718 = vunpack.c.l.b16 %v143
  %v719 = vunpack.c.h.b16 %v143
  %v720 = vunpack.c.l.b16 %v144
  %v721 = vunpack.c.h.b16 %v144
  %v722 = vunpack.c.l.b16 %v145
  %v723 = vunpack.c.h.b16 %v145
  %v724 = vunpack.c.l.b16 %v146
  %v725 = vunpack.c.h.b16 %v146
  %v726 = vunpack.c.l.b16 %v147
  %v727 = vunpack.c.h.b16 %v147
  %v728 = vunpack.c.l.b16 %v148
  %v729 = vunpack.c.h.b16 %v148
  %v730 = vunpack.c.l.b16 %v149
  %v731 = vunpack.c.h.b16 %v149
  %v732 = vunpack.c.l.b16 %v150
  %v733 = vunpack.c.l.b16 %v151
  %v734 = vunpack.c.h.b16 %v151
  %v735 = vunpack.c.l.b16 %v152
  %v736 = vunpack.c.h.b16 %v152
  %v737 = vunpack.c.l.b16 %v153
  %v738 = vunpack.c.h.b16 %v153
  %v739 = vunpack.c.l.b16 %v154
  %v740 = vunpack.c.h.b16 %v154
  %v741 = vunpack.c.l.b16 %v155
  %v742 = vunpack.c.h.b16 %v155
  %v743 = vunpack.c.l.b16 %v156
  %v744 = vunpack.c.h.b16 %v156
  %v745 = vunpack.c.l.b16 %v157
  %v746 = vunpack.c.h.b16 %v157
  %v747 = vunpack.c.l.b16 %v158
  %v748 = vunpack.c.h.b16 %v158
  %v749 = vunpack.c.l.b16 %v159
  %v750 = vunpack.c.h.b16 %v159
  %v751 = vunpack.c.l.b16 %v160
  %v752 = vunpack.c.h.b16 %v160
  %v753 = vunpack.c.l.b16 %v161
  %v754 = vunpack.c.h.b16 %v161
  %v755 = vunpack.c.l.b16 %v162
  %v756 = vunpack.c.h.b16 %v162
  %v757 = vunpack.c.l.b16 %v163
  %v758 = vunpack.c.l.b16 %v164
  %v759 = vunpack.c.h.b16 %v164
  %v760 = vunpack.c.l.b16 %v165
  %v761 = vunpack.c.h.b16 %v165
  %v762 = vunpack.c.l.b16 %v166
  %v763 = vunpack.c.h.b16 %v166
  %v764 = vunpack.c.l.b16 %v167
  %v765 = vunpack.c.h.b16 %v167
  %v766 = vunpack.c.l.b16 %v168
  %v767 = vunpack.c.h.b16 %v168
  %v768 = vunpack.c.l.b16 %v169
  %v769 = vunpack.c.h.b16 %v169
  %v770 = vunpack.c.l.b16 %v170
  %v771 = vunpack.c.h.b16 %v170
  %v772 = vunpack.c.l.b16 %v171
  %v773 = vunpack.c.h.b16 %v171
  %v774 = vunpack.c.l.b16 %v172
  %v775 = vunpack.c.h.b16 %v172
  %v776 = vunpack.c.l.b16 %v173
  %v777 = vunpack.c.h.b16 %v173
  %v778 = vunpack.c.l.b16 %v174
  %v779 = vunpack.c.h.b16 %v174
  %v780 = vunpack.c.l.b16 %v175
  %v781 = vunpack.c.h.b16 %v175
  %v782 = vunpack.c.l.b16 %v176
  %v783 = vunpack.c.l.b16 %v177
  %v784 = vunpack.c.h.b16 %v177
  %v785 = vunpack.c.l.b16 %v178
  %v786 = vunpack.c.h.b16 %v178
  %v787 = vunpack.c.l.b16 %v179
  %v788 = vunpack.c.h.b16 %v179
  %v789 = vunpack.c.l.b16 %v180
  %v790 = vunpack.c.h.b16 %v180
  %v791 = vunpack.c.l.b16 %v181
  %v792 = vunpack.c.h.b16 %v181
  %v793 = vunpack.c.l.b16 %v182
  %v794 = vunpack.c.h.b16 %v182
  %v795 = vunpack.c.l.b16 %v183
  %v796 = vunpack.c.h.b16 %v183
  %v797 = vunpack.c.l.b16 %v184
  %v798 = vunpack.c.h.b16 %v184
  %v799 = vunpack.c.l.b16 %v185
  %v800 = vunpack.c.h.b16 %v185
  %v801 = vunpack.c.l.b16 %v186
  %v802 = vunpack.c.h.b16 %v186
  %v803 = vunpack.c.l.b16 %v187
  %v804 = vunpack.c.h.b16 %v187
  %v805 = vunpack.c.l.b16 %v188
  %v806 = vunpack.c.h.b16 %v188
  %v807 = vunpack.c.l.b16 %v189
  %v808 = vunpack.c.l.b16 %v190
  %v809 = vunpack.c.h.b16 %v190
  %v810 = vunpack.c.l.b16 %v191
  %v811 = vunpack.c.h.b16 %v191
  %v812 = vunpack.c.l.b16 %v192
  %v813 = vunpack.c.h.b16 %v192
  %v814 = vunpack.c.l.b16 %v193
  %v815 = vunpack.c.h.b16 %v193
  %v816 = vunpack.c.l.b16 %v194
  %v817 = vunpack.c.h.b16 %v194
  %v818 = vunpack.c.l.b16 %v195
  %v819 = vunpack.c.h.b16 %v195
  %v820 = vunpack.c.l.b16 %v196
  %v821 = vunpack.c.h.b16 %v196
  %v822 = vunpack.c.l.b16 %v197
  %v823 = vunpack.c.h.b16 %v197
  %v824 = vunpack.c.l.b16 %v198
  %v825 = vunpack.c.h.b16 %v198
  %v826 = vunpack.c.l.b16 %v199
  %v827 = vunpack.c.h.b16 %v199
  %v828 = vunpack.c.l.b16 %v200
  %v829 = vunpack.c.h.b16 %v200
  %v830 = vunpack.c.l.b16 %v201
  %v831 = vunpack.c.h.b16 %v201
  %v832 = vunpack.c.l.b16 %v202
  %v833 = vunpack.c.l.b16 %v203
  %v834 = vunpack.c.h.b16 %v203
  %v835 = vunpack.c.l.b16 %v204
  %v836 = vunpack.c.h.b16 %v204
  %v837 = vunpack.c.l.b16 %v205
  %v838 = vunpack.c.h.b16 %v205
  %v839 = vunpack.c.l.b16 %v206
  %v840 = vunpack.c.h.b16 %v206
  %v841 = vunpack.c.l.b16 %v207
  %v842 = vunpack.c.h.b16 %v207
  %v843 = vunpack.c.l.b16 %v208
  %v844 = vunpack.c.h.b16 %v208
  %v845 = vunpack.c.l.b16 %v209
  %v846 = vunpack.c.h.b16 %v209
  %v847 = vunpack.c.l.b16 %v210
  %v848 = vunpack.c.h.b16 %v210
  %v849 = vunpack.c.l.b16 %v211
  %v850 = vunpack.c.h.b16 %v211
  %v851 = vunpack.c.l.b16 %v212
  %v852 = vunpack.c.h.b16 %v212
  %v853 = vunpack.c.l.b16 %v213
  %v854 = vunpack.c.h.b16 %v213
  %v855 = vunpack.c.l.b16 %v214
  %v856 = vunpack.c.h.b16 %v214
  %v857 = vunpack.c.l.b16 %v215
  %v858 = vunpack.c.l.b16 %v216
  %v859 = vunpack.c.h.b16 %v216
  %v860 = vunpack.c.l.b16 %v217
  %v861 = vunpack.c.h.b16 %v217
  %v862 = vunpack.c.l.b16 %v218
  %v863 = vunpack.c.h.b16 %v218
  %v864 = vunpack.c.l.b16 %v219
  %v865 = vunpack.c.h.b16 %v219
  %v866 = vunpack.c.l.b16 %v220
  %v867 = vunpack.c.h.b16 %v220
  %v868 = vunpack.c.l.b16 %v221
  %v869 = vunpack.c.h.b16 %v221
  %v870 = vunpack.c.l.b16 %v222
  %v871 = vunpack.c.h.b16 %v222
  %v872 = vunpack.c.l.b16 %v223
  %v873 = vunpack.c.h.b16 %v223
  %v874 = vunpack.c.l.b16 %v224
  %v875 = vunpack.c.h.b16 %v224
  %v876 = vunpack.c.l.b16 %v225
  %v877 = vunpack.c.h.b16 %v225
  %v878 = vunpack.c.l.b16 %v226
  %v879 = vunpack.c.h.b16 %v226
  %v880 = vunpack.c.l.b16 %v227
  %v881 = vunpack.c.h.b16 %v227
  %v882 = vunpack.c.l.b16 %v228
  %v883 = vunpack.c.l.b16 %v229
  %v884 = vunpack.c.h.b16 %v229
  %v885 = vunpack.c.l.b16 %v230
  %v886 = vunpack.c.h.b16 %v230
  %v887 = vunpack.c.l.b16 %v231
  %v888 = vunpack.c.h.b16 %v231
  %v889 = vunpack.c.l.b16 %v232
  %v890 = vunpack.c.h.b16 %v232
  %v891 = vunpack.c.l.b16 %v233
  %v892 = vunpack.c.h.b16 %v233
  %v893 = vunpack.c.l.b16 %v234
  %v894 = vunpack.c.h.b16 %v234
  %v895 = vunpack.c.l.b16 %v235
  %v896 = vunpack.c.h.b16 %v235
  %v897 = vunpack.c.l.b16 %v236
  %v898 = vunpack.c.h.b16 %v236
  %v899 = vunpack.c.l.b16 %v237
  %v900 = vunpack.c.h.b16 %v237
  %v901 = vunpack.c.l.b16 %v238
  %v902 = vunpack.c.h.b16 %v238
  %v903 = vunpack.c.l.b16 %v239
  %v904 = vunpack.c.h.b16 %v239
  %v905 = vunpack.c.l.b16 %v240
  %v906 = vunpack.c.h.b16 %v240
  %v907 = vunpack.c.l.b16 %v241
  %v908 = vpack.c.b16 %v533, %v508
  %v909 = vpack.c.b16 %v534, %v509
  %v910 = vpack.c.b16 %v535, %v510
  %v911 = vpack.c.b16 %v536, %v511
  %v912 = vpack.c.b16 %v537, %v512
  %v913 = vpack.c.b16 %v538, %v513
  %v914 = vpack.c.b16 %v539, %v514
  %v915 = vpack.c.b16 %v540, %v515
  %v916 = vpack.c.b16 %v541, %v516
  %v917 = vpack.c.b16 %v542, %v517
  %v918 = vpack.c.b16 %v543, %v518
  %v919 = vpack.c.b16 %v544, %v519
  %v920 = vpack.c.b16 %v545, %v520
  %v921 = vpack.c.b16 %v546, %v521
  %v922 = vpack.c.b16 %v547, %v522
  %v923 = vpack.c.b16 %v548, %v523
  %v924 = vpack.c.b16 %v549, %v524
  %v925 = vpack.c.b16 %v550, %v525
  %v926 = vpack.c.b16 %v551, %v526
  %v927 = vpack.c.b16 %v552, %v527
  %v928 = vpack.c.b16 %v553, %v528
  %v929 = vpack.c.b16 %v554, %v529
  %v930 = vpack.c.b16 %v555, %v530
  %v931 = vpack.c.b16 %v556, %v531
  %v932 = vpack.c.b16 %v557, %v532
  %v933 = vpack.c.b16 %v583, %v558
  %v934 = vpack.c.b16 %v584, %v559
  %v935 = vpack.c.b16 %v585, %v560
  %v936 = vpack.c.b16 %v586, %v561
  %v937 = vpack.c.b16 %v587, %v562
  %v938 = vpack.c.b16 %v588, %v563
  %v939 = vpack.c.b16 %v589, %v564
  %v940 = vpack.c.b16 %v590, %v565
  %v941 = vpack.c.b16 %v591, %v566
  %v942 = vpack.c.b16 %v592, %v567
  %v943 = vpack.c.b16 %v593, %v568
  %v944 = vpack.c.b16 %v594, %v569
  %v945 = vpack.c.b16 %v595, %v570
  %v946 = vpack.c.b16 %v596, %v571
  %v947 = vpack.c.b16 %v597, %v572
  %v948 = vpack.c.b16 %v598, %v573
  %v949 = vpack.c.b16 %v599, %v574
  %v950 = vpack.c.b16 %v600, %v575
  %v951 = vpack.c.b16 %v601, %v576
  %v952 = vpack.c.b16 %v602, %v577
  %v953 = vpack.c.b16 %v603, %v578
  %v954 = vpack.c.b16 %v604, %v579
  %v955 = vpack.c.b16 %v605, %v580
  %v956 = vpack.c.b16 %v606, %v581
  %v957 = vpack.c.b16 %v607, %v582
  %v958 = vpack.c.b16 %v633, %v608
  %v959 = vpack.c.b16 %v634, %v609
  %v960 = vpack.c.b16 %v635, %v610
  %v961 = vpack.c.b16 %v636, %v611
  %v962 = vpack.c.b16 %v637, %v612
  %v963 = vpack.c.b16 %v638, %v613
  %v964 = vpack.c.b16 %v639, %v614
  %v965 = vpack.c.b16 %v640, %v615
  %v966 = vpack.c.b16 %v641, %v616
  %v967 = vpack.c.b16 %v642, %v617
  %v968 = vpack.c.b16 %v643, %v618
  %v969 = vpack.c.b16 %v644, %v619
  %v970 = vpack.c.b16 %v645, %v620
  %v971 = vpack.c.b16 %v646, %v621
  %v972 = vpack.c.b16 %v647, %v622
  %v973 = vpack.c.b16 %v648, %v623
  %v974 = vpack.c.b16 %v649, %v624
  %v975 = vpack.c.b16 %v650, %v625
  %v976 = vpack.c.b16 %v651, %v626
  %v977 = vpack.c.b16 %v652, %v627
  %v978 = vpack.c.b16 %v653, %v628
  %v979 = vpack.c.b16 %v654, %v629
  %v980 = vpack.c.b16 %v655, %v630
  %v981 = vpack.c.b16 %v656, %v631
  %v982 = vpack.c.b16 %v657, %v632
  %v983 = vpack.c.b16 %v683, %v658
  %v984 = vpack.c.b16 %v684, %v659
  %v985 = vpack.c.b16 %v685, %v660
  %v986 = vpack.c.b16 %v686, %v661
  %v987 = vpack.c.b16 %v687, %v662
  %v988 = vpack.c.b16 %v688, %v663
  %v989 = vpack.c.b16 %v689, %v664
  %v990 = vpack.c.b16 %v690, %v665
  %v991 = vpack.c.b16 %v691, %v666
  %v992 = vpack.c.b16 %v692, %v667
  %v993 = vpack.c.b16 %v693, %v668
  %v994 = vpack.c.b16 %v694, %v669
  %v995 = vpack.c.b16 %v695, %v670
  %v996 = vpack.c.b16 %v696, %v671
  %v997 = vpack.c.b16 %v697, %v672
  %v998 = vpack.c.b16 %v698, %v673
  %v999 = vpack.c.b16 %v699, %v674
  %v1000 = vpack.c.b16 %v700, %v675
  %v1001 = vpack.c.b16 %v701, %v676
  %v1002 = vpack.c.b16 %v702, %v677
  %v1003 = vpack.c.b16 %v703, %v678
  %v1004 = vpack.c.b16 %v704, %v679
  %v1005 = vpack.c.b16 %v705, %v680
  %v1006 = vpack.c.b16 %v706, %v681
  %v1007 = vpack.c.b16 %v707, %v682
  %v1008 = vpack.c.b16 %v733, %v708
  %v1009 = vpack.c.b16 %v734, %v709
  %v1010 = vpack.c.b16 %v735, %v710
  %v1011 = vpack.c.b16 %v736, %v711
  %v1012 = vpack.c.b16 %v737, %v712
  %v1013 = vpack.c.b16 %v738, %v713
  %v1014 = vpack.c.b16 %v739, %v714
  %v1015 = vpack.c.b16 %v740, %v715
  %v1016 = vpack.c.b16 %v741, %v716
  %v1017 = vpack.c.b16 %v742, %v717
  %v1018 = vpack.c.b16 %v743, %v718
  %v1019 = vpack.c.b16 %v744, %v719
  %v1020 = vpack.c.b16 %v745, %v720
  %v1021 = vpack.c.b16 %v746, %v721
  %v1022 = vpack.c.b16 %v747, %v722
  %v1023 = vpack.c.b16 %v748, %v723
  %v1024 = vpack.c.b16 %v749, %v724
  %v1025 = vpack.c.b16 %v750, %v725
  %v1026 = vpack.c.b16 %v751, %v726
  %v1027 = vpack.c.b16 %v752, %v727
  %v1028 = vpack.c.b16 %v753, %v728
  %v1029 = vpack.c.b16 %v754, %v729
  %v1030 = vpack.c.b16 %v755, %v730
  %v1031 = vpack.c.b16 %v756, %v731
  %v1032 = vpack.c.b16 %v757, %v732
  %v1033 = vpack.c.b16 %v783, %v758
  %v1034 = vpack.c.b16 %v784, %v759
  %v1035 = vpack.c.b16 %v785, %v760
  %v1036 = vpack.c.b16 %v786, %v761
  %v1037 = vpack.c.b16 %v787, %v762
  %v1038 = vpack.c.b16 %v788, %v763
  %v1039 = vpack.c.b16 %v789, %v764
  %v1040 = vpack.c.b16 %v790, %v765
  %v1041 = vpack.c.b16 %v791, %v766
  %v1042 = vpack.c.b16 %v792, %v767
  %v1043 = vpack.c.b16 %v793, %v768
  %v1044 = vpack.c.b16 %v794, %v769
  %v1045 = vpack.c.b16 %v795, %v770
  %v1046 = vpack.c.b16 %v796, %v771
  %v1047 = vpack.c.b16 %v797, %v772
  %v1048 = vpack.c.b16 %v798, %v773
  %v1049 = vpack.c.b16 %v799, %v774
  %v1050 = vpack.c.b16 %v800, %v775
  %v1051 = vpack.c.b16 %v801, %v776
  %v1052 = vpack.c.b16 %v802, %v777
  %v1053 = vpack.c.b16 %v803, %v778
  %v1054 = vpack.c.b16 %v804, %v779
  %v1055 = vpack.c.b16 %v805, %v780
  %v1056 = vpack.c.b16 %v806, %v781
  %v1057 = vpack.c.b16 %v807, %v782
  %v1058 = vpack.c.b16 %v833, %v808
  %v1059 = vpack.c.b16 %v834, %v809
  %v1060 = vpack.c.b16 %v835, %v810
  %v1061 = vpack.c.b16 %v836, %v811
  %v1062 = vpack.c.b16 %v837, %v812
  %v1063 = vpack.c.b16 %v838, %v813
  %v1064 = vpack.c.b16 %v839, %v814
  %v1065 = vpack.c.b16 %v840, %v815
  %v1066 = vpack.c.b16 %v841, %v816
  %v1067 = vpack.c.b16 %v842, %v817
  %v1068 = vpack.c.b16 %v843, %v818
  %v1069 = vpack.c.b16 %v844, %v819
  %v1070 = vpack.c.b16 %v845, %v820
  %v1071 = vpack.c.b16 %v846, %v821
  %v1072 = vpack.c.b16 %v847, %v822
  %v1073 = vpack.c.b16 %v848, %v823
  %v1074 = vpack.c.b16 %v849, %v824
  %v1075 = vpack.c.b16 %v850, %v825
  %v1076 = vpack.c.b16 %v851, %v826
  %v1077 = vpack.c.b16 %v852, %v827
  %v1078 = vpack.c.b16 %v853, %v828
  %v1079 = vpack.c.b16 %v854, %v829
  %v1080 = vpack.c.b16 %v855, %v830
  %v1081 = vpack.c.b16 %v856, %v831
  %v1082 = vpack.c.b16 %v857, %v832
  %v1083 = vpack.c.b16 %v883, %v858
  %v1084 = vpack.c.b16 %v884, %v859
  %v1085 = vpack.c.b16 %v885, %v860
  %v1086 = vpack.c.b16 %v886, %v861
  %v1087 = vpack.c.b16 %v887, %v862
  %v1088 = vpack.c.b16 %v888, %v863
  %v1089 = vpack.c.b16 %v889, %v864
  %v1090 = vpack.c.b16 %v890, %v865
  %v1091 = vpack.c.b16 %v891, %v866
  %v1092 = vpack.c.b16 %v892, %v867
  %v1093 = vpack.c.b16 %v893, %v868
  %v1094 = vpack.c.b16 %v894, %v869
  %v1095 = vpack.c.b16 %v895, %v870
  %v1096 = vpack.c.b16 %v896, %v871
  %v1097 = vpack.c.b16 %v897, %v872
  %v1098 = vpack.c.b16 %v898, %v873
  %v1099 = vpack.c.b16 %v899, %v874
  %v1100 = vpack.c.b16 %v900, %v875
  %v1101 = vpack.c.b16 %v901, %v876
  %v1102 = vpack.c.b16 %v902, %v877
  %v1103 = vpack.c.b16 %v903, %v878
  %v1104 = vpack.c.b16 %v904, %v879
  %v1105 = vpack.c.b16 %v905, %v880
  %v1106 = vpack.c.b16 %v906, %v881
  %v1107 = vpack.c.b16 %v907, %v882
  %1308 = vmatpush.bf16.msra.mxu0 %v1083
  %1309 = vmatpush.bf16.msra.mxu0 %v1058
  %1310 = vmatpush.bf16.msra.mxu0 %v1033
  %1311 = vmatpush.bf16.msra.mxu0 %v1008
  %1312 = vmatpush.bf16.msra.mxu0 %v983
  %1313 = vmatpush.bf16.msra.mxu0 %v958
  %1314 = vmatpush.bf16.msra.mxu0 %v933
  %1315 = vmatpush.bf16.msra.mxu0 %v908
  %1316 = vmatmul.bf16.gmra.mxu0 %v33
  %v1317 = vpop.f32.mrf.mxu0
  %v1318 = vadd.f32 %v250, %v1317
  %v1319 = vpop.f32.mrf.mxu0
  %1320 = vdwg.mxu0
  %1321 = vmatpush.bf16.msra.mxu0 %v1084
  %1322 = vmatpush.bf16.msra.mxu0 %v1059
  %1323 = vmatpush.bf16.msra.mxu0 %v1034
  %1324 = vmatpush.bf16.msra.mxu0 %v1009
  %1325 = vmatpush.bf16.msra.mxu0 %v984
  %1326 = vmatpush.bf16.msra.mxu0 %v959
  %1327 = vmatpush.bf16.msra.mxu0 %v934
  %1328 = vmatpush.bf16.msra.mxu0 %v909
  %1329 = vmatmul.bf16.gmra.mxu0 %v33
  %v1330 = vpop.f32.mrf.mxu0
  %v1331 = vadd.f32 %v251, %v1330
  %v1332 = vpop.f32.mrf.mxu0
  %1333 = vdwg.mxu0
  %1334 = vmatpush.bf16.msra.mxu0 %v1085
  %1335 = vmatpush.bf16.msra.mxu0 %v1060
  %1336 = vmatpush.bf16.msra.mxu0 %v1035
  %1337 = vmatpush.bf16.msra.mxu0 %v1010
  %1338 = vmatpush.bf16.msra.mxu0 %v985
  %1339 = vmatpush.bf16.msra.mxu0 %v960
  %1340 = vmatpush.bf16.msra.mxu0 %v935
  %1341 = vmatpush.bf16.msra.mxu0 %v910
  %1342 = vmatmul.bf16.gmra.mxu0 %v33
  %v1343 = vpop.f32.mrf.mxu0
  %v1344 = vadd.f32 %v252, %v1343
  %v1345 = vpop.f32.mrf.mxu0
  %1346 = vdwg.mxu0
  %1347 = vmatpush.bf16.msra.mxu0 %v1086
  %1348 = vmatpush.bf16.msra.mxu0 %v1061
  %1349 = vmatpush.bf16.msra.mxu0 %v1036
  %1350 = vmatpush.bf16.msra.mxu0 %v1011
  %1351 = vmatpush.bf16.msra.mxu0 %v986
  %1352 = vmatpush.bf16.msra.mxu0 %v961
  %1353 = vmatpush.bf16.msra.mxu0 %v936
  %1354 = vmatpush.bf16.msra.mxu0 %v911
  %1355 = vmatmul.bf16.gmra.mxu0 %v33
  %v1356 = vpop.f32.mrf.mxu0
  %v1357 = vadd.f32 %v253, %v1356
  %v1358 = vpop.f32.mrf.mxu0
  %1359 = vdwg.mxu0
  %1360 = vmatpush.bf16.msra.mxu0 %v1087
  %1361 = vmatpush.bf16.msra.mxu0 %v1062
  %1362 = vmatpush.bf16.msra.mxu0 %v1037
  %1363 = vmatpush.bf16.msra.mxu0 %v1012
  %1364 = vmatpush.bf16.msra.mxu0 %v987
  %1365 = vmatpush.bf16.msra.mxu0 %v962
  %1366 = vmatpush.bf16.msra.mxu0 %v937
  %1367 = vmatpush.bf16.msra.mxu0 %v912
  %1368 = vmatmul.bf16.gmra.mxu0 %v33
  %v1369 = vpop.f32.mrf.mxu0
  %v1370 = vadd.f32 %v254, %v1369
  %v1371 = vpop.f32.mrf.mxu0
  %1372 = vdwg.mxu0
  %1373 = vmatpush.bf16.msra.mxu0 %v1088
  %1374 = vmatpush.bf16.msra.mxu0 %v1063
  %1375 = vmatpush.bf16.msra.mxu0 %v1038
  %1376 = vmatpush.bf16.msra.mxu0 %v1013
  %1377 = vmatpush.bf16.msra.mxu0 %v988
  %1378 = vmatpush.bf16.msra.mxu0 %v963
  %1379 = vmatpush.bf16.msra.mxu0 %v938
  %1380 = vmatpush.bf16.msra.mxu0 %v913
  %1381 = vmatmul.bf16.gmra.mxu0 %v33
  %v1382 = vpop.f32.mrf.mxu0
  %v1383 = vadd.f32 %v255, %v1382
  %v1384 = vpop.f32.mrf.mxu0
  %1385 = vdwg.mxu0
  %1386 = vmatpush.bf16.msra.mxu0 %v1089
  %1387 = vmatpush.bf16.msra.mxu0 %v1064
  %1388 = vmatpush.bf16.msra.mxu0 %v1039
  %1389 = vmatpush.bf16.msra.mxu0 %v1014
  %1390 = vmatpush.bf16.msra.mxu0 %v989
  %1391 = vmatpush.bf16.msra.mxu0 %v964
  %1392 = vmatpush.bf16.msra.mxu0 %v939
  %1393 = vmatpush.bf16.msra.mxu0 %v914
  %1394 = vmatmul.bf16.gmra.mxu0 %v33
  %v1395 = vpop.f32.mrf.mxu0
  %v1396 = vadd.f32 %v256, %v1395
  %v1397 = vpop.f32.mrf.mxu0
  %1398 = vdwg.mxu0
  %1399 = vmatpush.bf16.msra.mxu0 %v1090
  %1400 = vmatpush.bf16.msra.mxu0 %v1065
  %1401 = vmatpush.bf16.msra.mxu0 %v1040
  %1402 = vmatpush.bf16.msra.mxu0 %v1015
  %1403 = vmatpush.bf16.msra.mxu0 %v990
  %1404 = vmatpush.bf16.msra.mxu0 %v965
  %1405 = vmatpush.bf16.msra.mxu0 %v940
  %1406 = vmatpush.bf16.msra.mxu0 %v915
  %1407 = vmatmul.bf16.gmra.mxu0 %v33
  %v1408 = vpop.f32.mrf.mxu0
  %v1409 = vadd.f32 %v257, %v1408
  %v1410 = vpop.f32.mrf.mxu0
  %1411 = vdwg.mxu0
  %1412 = vmatpush.bf16.msra.mxu0 %v1091
  %1413 = vmatpush.bf16.msra.mxu0 %v1066
  %1414 = vmatpush.bf16.msra.mxu0 %v1041
  %1415 = vmatpush.bf16.msra.mxu0 %v1016
  %1416 = vmatpush.bf16.msra.mxu0 %v991
  %1417 = vmatpush.bf16.msra.mxu0 %v966
  %1418 = vmatpush.bf16.msra.mxu0 %v941
  %1419 = vmatpush.bf16.msra.mxu0 %v916
  %1420 = vmatmul.bf16.gmra.mxu0 %v33
  %v1421 = vpop.f32.mrf.mxu0
  %v1422 = vadd.f32 %v258, %v1421
  %v1423 = vpop.f32.mrf.mxu0
  %1424 = vdwg.mxu0
  %1425 = vmatpush.bf16.msra.mxu0 %v1092
  %1426 = vmatpush.bf16.msra.mxu0 %v1067
  %1427 = vmatpush.bf16.msra.mxu0 %v1042
  %1428 = vmatpush.bf16.msra.mxu0 %v1017
  %1429 = vmatpush.bf16.msra.mxu0 %v992
  %1430 = vmatpush.bf16.msra.mxu0 %v967
  %1431 = vmatpush.bf16.msra.mxu0 %v942
  %1432 = vmatpush.bf16.msra.mxu0 %v917
  %1433 = vmatmul.bf16.gmra.mxu0 %v33
  %v1434 = vpop.f32.mrf.mxu0
  %v1435 = vadd.f32 %v259, %v1434
  %v1436 = vpop.f32.mrf.mxu0
  %1437 = vdwg.mxu0
  %1438 = vmatpush.bf16.msra.mxu0 %v1093
  %1439 = vmatpush.bf16.msra.mxu0 %v1068
  %1440 = vmatpush.bf16.msra.mxu0 %v1043
  %1441 = vmatpush.bf16.msra.mxu0 %v1018
  %1442 = vmatpush.bf16.msra.mxu0 %v993
  %1443 = vmatpush.bf16.msra.mxu0 %v968
  %1444 = vmatpush.bf16.msra.mxu0 %v943
  %1445 = vmatpush.bf16.msra.mxu0 %v918
  %1446 = vmatmul.bf16.gmra.mxu0 %v33
  %v1447 = vpop.f32.mrf.mxu0
  %v1448 = vadd.f32 %v260, %v1447
  %v1449 = vpop.f32.mrf.mxu0
  %1450 = vdwg.mxu0
  %1451 = vmatpush.bf16.msra.mxu0 %v1094
  %1452 = vmatpush.bf16.msra.mxu0 %v1069
  %1453 = vmatpush.bf16.msra.mxu0 %v1044
  %1454 = vmatpush.bf16.msra.mxu0 %v1019
  %1455 = vmatpush.bf16.msra.mxu0 %v994
  %1456 = vmatpush.bf16.msra.mxu0 %v969
  %1457 = vmatpush.bf16.msra.mxu0 %v944
  %1458 = vmatpush.bf16.msra.mxu0 %v919
  %1459 = vmatmul.bf16.gmra.mxu0 %v33
  %v1460 = vpop.f32.mrf.mxu0
  %v1461 = vadd.f32 %v261, %v1460
  %v1462 = vpop.f32.mrf.mxu0
  %1463 = vdwg.mxu0
  %1464 = vmatpush.bf16.msra.mxu0 %v1095
  %1465 = vmatpush.bf16.msra.mxu0 %v1070
  %1466 = vmatpush.bf16.msra.mxu0 %v1045
  %1467 = vmatpush.bf16.msra.mxu0 %v1020
  %1468 = vmatpush.bf16.msra.mxu0 %v995
  %1469 = vmatpush.bf16.msra.mxu0 %v970
  %1470 = vmatpush.bf16.msra.mxu0 %v945
  %1471 = vmatpush.bf16.msra.mxu0 %v920
  %1472 = vmatmul.bf16.gmra.mxu0 %v33
  %v1473 = vpop.f32.mrf.mxu0
  %v1474 = vadd.f32 %v262, %v1473
  %v1475 = vpop.f32.mrf.mxu0
  %1476 = vdwg.mxu0
  %1477 = vmatpush.bf16.msra.mxu0 %v1096
  %1478 = vmatpush.bf16.msra.mxu0 %v1071
  %1479 = vmatpush.bf16.msra.mxu0 %v1046
  %1480 = vmatpush.bf16.msra.mxu0 %v1021
  %1481 = vmatpush.bf16.msra.mxu0 %v996
  %1482 = vmatpush.bf16.msra.mxu0 %v971
  %1483 = vmatpush.bf16.msra.mxu0 %v946
  %1484 = vmatpush.bf16.msra.mxu0 %v921
  %1485 = vmatmul.bf16.gmra.mxu0 %v33
  %v1486 = vpop.f32.mrf.mxu0
  %v1487 = vadd.f32 %v263, %v1486
  %v1488 = vpop.f32.mrf.mxu0
  %1489 = vdwg.mxu0
  %1490 = vmatpush.bf16.msra.mxu0 %v1097
  %1491 = vmatpush.bf16.msra.mxu0 %v1072
  %1492 = vmatpush.bf16.msra.mxu0 %v1047
  %1493 = vmatpush.bf16.msra.mxu0 %v1022
  %1494 = vmatpush.bf16.msra.mxu0 %v997
  %1495 = vmatpush.bf16.msra.mxu0 %v972
  %1496 = vmatpush.bf16.msra.mxu0 %v947
  %1497 = vmatpush.bf16.msra.mxu0 %v922
  %1498 = vmatmul.bf16.gmra.mxu0 %v33
  %v1499 = vpop.f32.mrf.mxu0
  %v1500 = vadd.f32 %v264, %v1499
  %v1501 = vpop.f32.mrf.mxu0
  %1502 = vdwg.mxu0
  %1503 = vmatpush.bf16.msra.mxu0 %v1098
  %1504 = vmatpush.bf16.msra.mxu0 %v1073
  %1505 = vmatpush.bf16.msra.mxu0 %v1048
  %1506 = vmatpush.bf16.msra.mxu0 %v1023
  %1507 = vmatpush.bf16.msra.mxu0 %v998
  %1508 = vmatpush.bf16.msra.mxu0 %v973
  %1509 = vmatpush.bf16.msra.mxu0 %v948
  %1510 = vmatpush.bf16.msra.mxu0 %v923
  %1511 = vmatmul.bf16.gmra.mxu0 %v33
  %v1512 = vpop.f32.mrf.mxu0
  %v1513 = vadd.f32 %v265, %v1512
  %v1514 = vpop.f32.mrf.mxu0
  %1515 = vdwg.mxu0
  %1516 = vmatpush.bf16.msra.mxu0 %v1099
  %1517 = vmatpush.bf16.msra.mxu0 %v1074
  %1518 = vmatpush.bf16.msra.mxu0 %v1049
  %1519 = vmatpush.bf16.msra.mxu0 %v1024
  %1520 = vmatpush.bf16.msra.mxu0 %v999
  %1521 = vmatpush.bf16.msra.mxu0 %v974
  %1522 = vmatpush.bf16.msra.mxu0 %v949
  %1523 = vmatpush.bf16.msra.mxu0 %v924
  %1524 = vmatmul.bf16.gmra.mxu0 %v33
  %v1525 = vpop.f32.mrf.mxu0
  %v1526 = vadd.f32 %v266, %v1525
  %v1527 = vpop.f32.mrf.mxu0
  %1528 = vdwg.mxu0
  %1529 = vmatpush.bf16.msra.mxu0 %v1100
  %1530 = vmatpush.bf16.msra.mxu0 %v1075
  %1531 = vmatpush.bf16.msra.mxu0 %v1050
  %1532 = vmatpush.bf16.msra.mxu0 %v1025
  %1533 = vmatpush.bf16.msra.mxu0 %v1000
  %1534 = vmatpush.bf16.msra.mxu0 %v975
  %1535 = vmatpush.bf16.msra.mxu0 %v950
  %1536 = vmatpush.bf16.msra.mxu0 %v925
  %1537 = vmatmul.bf16.gmra.mxu0 %v33
  %v1538 = vpop.f32.mrf.mxu0
  %v1539 = vadd.f32 %v267, %v1538
  %v1540 = vpop.f32.mrf.mxu0
  %1541 = vdwg.mxu0
  %1542 = vmatpush.bf16.msra.mxu0 %v1101
  %1543 = vmatpush.bf16.msra.mxu0 %v1076
  %1544 = vmatpush.bf16.msra.mxu0 %v1051
  %1545 = vmatpush.bf16.msra.mxu0 %v1026
  %1546 = vmatpush.bf16.msra.mxu0 %v1001
  %1547 = vmatpush.bf16.msra.mxu0 %v976
  %1548 = vmatpush.bf16.msra.mxu0 %v951
  %1549 = vmatpush.bf16.msra.mxu0 %v926
  %1550 = vmatmul.bf16.gmra.mxu0 %v33
  %v1551 = vpop.f32.mrf.mxu0
  %v1552 = vadd.f32 %v268, %v1551
  %v1553 = vpop.f32.mrf.mxu0
  %1554 = vdwg.mxu0
  %1555 = vmatpush.bf16.msra.mxu0 %v1102
  %1556 = vmatpush.bf16.msra.mxu0 %v1077
  %1557 = vmatpush.bf16.msra.mxu0 %v1052
  %1558 = vmatpush.bf16.msra.mxu0 %v1027
  %1559 = vmatpush.bf16.msra.mxu0 %v1002
  %1560 = vmatpush.bf16.msra.mxu0 %v977
  %1561 = vmatpush.bf16.msra.mxu0 %v952
  %1562 = vmatpush.bf16.msra.mxu0 %v927
  %1563 = vmatmul.bf16.gmra.mxu0 %v33
  %v1564 = vpop.f32.mrf.mxu0
  %v1565 = vadd.f32 %v269, %v1564
  %v1566 = vpop.f32.mrf.mxu0
  %1567 = vdwg.mxu0
  %1568 = vmatpush.bf16.msra.mxu0 %v1103
  %1569 = vmatpush.bf16.msra.mxu0 %v1078
  %1570 = vmatpush.bf16.msra.mxu0 %v1053
  %1571 = vmatpush.bf16.msra.mxu0 %v1028
  %1572 = vmatpush.bf16.msra.mxu0 %v1003
  %1573 = vmatpush.bf16.msra.mxu0 %v978
  %1574 = vmatpush.bf16.msra.mxu0 %v953
  %1575 = vmatpush.bf16.msra.mxu0 %v928
  %1576 = vmatmul.bf16.gmra.mxu0 %v33
  %v1577 = vpop.f32.mrf.mxu0
  %v1578 = vadd.f32 %v270, %v1577
  %v1579 = vpop.f32.mrf.mxu0
  %1580 = vdwg.mxu0
  %1581 = vmatpush.bf16.msra.mxu0 %v1104
  %1582 = vmatpush.bf16.msra.mxu0 %v1079
  %1583 = vmatpush.bf16.msra.mxu0 %v1054
  %1584 = vmatpush.bf16.msra.mxu0 %v1029
  %1585 = vmatpush.bf16.msra.mxu0 %v1004
  %1586 = vmatpush.bf16.msra.mxu0 %v979
  %1587 = vmatpush.bf16.msra.mxu0 %v954
  %1588 = vmatpush.bf16.msra.mxu0 %v929
  %1589 = vmatmul.bf16.gmra.mxu0 %v33
  %v1590 = vpop.f32.mrf.mxu0
  %v1591 = vadd.f32 %v271, %v1590
  %v1592 = vpop.f32.mrf.mxu0
  %1593 = vdwg.mxu0
  %1594 = vmatpush.bf16.msra.mxu0 %v1105
  %1595 = vmatpush.bf16.msra.mxu0 %v1080
  %1596 = vmatpush.bf16.msra.mxu0 %v1055
  %1597 = vmatpush.bf16.msra.mxu0 %v1030
  %1598 = vmatpush.bf16.msra.mxu0 %v1005
  %1599 = vmatpush.bf16.msra.mxu0 %v980
  %1600 = vmatpush.bf16.msra.mxu0 %v955
  %1601 = vmatpush.bf16.msra.mxu0 %v930
  %1602 = vmatmul.bf16.gmra.mxu0 %v33
  %v1603 = vpop.f32.mrf.mxu0
  %v1604 = vadd.f32 %v272, %v1603
  %v1605 = vpop.f32.mrf.mxu0
  %1606 = vdwg.mxu0
  %1607 = vmatpush.bf16.msra.mxu0 %v1106
  %1608 = vmatpush.bf16.msra.mxu0 %v1081
  %1609 = vmatpush.bf16.msra.mxu0 %v1056
  %1610 = vmatpush.bf16.msra.mxu0 %v1031
  %1611 = vmatpush.bf16.msra.mxu0 %v1006
  %1612 = vmatpush.bf16.msra.mxu0 %v981
  %1613 = vmatpush.bf16.msra.mxu0 %v956
  %1614 = vmatpush.bf16.msra.mxu0 %v931
  %1615 = vmatmul.bf16.gmra.mxu0 %v33
  %v1616 = vpop.f32.mrf.mxu0
  %v1617 = vadd.f32 %v273, %v1616
  %v1618 = vpop.f32.mrf.mxu0
  %1619 = vdwg.mxu0
  %1620 = vmatpush.bf16.msra.mxu0 %v1107
  %1621 = vmatpush.bf16.msra.mxu0 %v1082
  %1622 = vmatpush.bf16.msra.mxu0 %v1057
  %1623 = vmatpush.bf16.msra.mxu0 %v1032
  %1624 = vmatpush.bf16.msra.mxu0 %v1007
  %1625 = vmatpush.bf16.msra.mxu0 %v982
  %1626 = vmatpush.bf16.msra.mxu0 %v957
  %1627 = vmatpush.bf16.msra.mxu0 %v932
  %1628 = vmatmul.bf16.gmra.mxu0 %v33
  %v1629 = vpop.f32.mrf.mxu0
  %v1630 = vadd.f32 %v274, %v1629
  %v1631 = vpop.f32.mrf.mxu0
  %1632 = vdwg.mxu0
  %vm1633 = vcmp.ge.f32.partialorder %v1318, 0.0
  %vm1634 = vcmp.ge.f32.partialorder %v1331, 0.0
  %vm1635 = vcmp.ge.f32.partialorder %v1344, 0.0
  %vm1636 = vcmp.ge.f32.partialorder %v1357, 0.0
  %vm1637 = vcmp.ge.f32.partialorder %v1370, 0.0
  %vm1638 = vcmp.ge.f32.partialorder %v1383, 0.0
  %vm1639 = vcmp.ge.f32.partialorder %v1396, 0.0
  %vm1640 = vcmp.ge.f32.partialorder %v1409, 0.0
  %vm1641 = vcmp.ge.f32.partialorder %v1422, 0.0
  %vm1642 = vcmp.ge.f32.partialorder %v1435, 0.0
  %vm1643 = vcmp.ge.f32.partialorder %v1448, 0.0
  %vm1644 = vcmp.ge.f32.partialorder %v1461, 0.0
  %vm1645 = vcmp.ge.f32.partialorder %v1474, 0.0
  %vm1646 = vcmp.ge.f32.partialorder %v1487, 0.0
  %vm1647 = vcmp.ge.f32.partialorder %v1500, 0.0
  %vm1648 = vcmp.ge.f32.partialorder %v1513, 0.0
  %vm1649 = vcmp.ge.f32.partialorder %v1526, 0.0
  %vm1650 = vcmp.ge.f32.partialorder %v1539, 0.0
  %vm1651 = vcmp.ge.f32.partialorder %v1552, 0.0
  %vm1652 = vcmp.ge.f32.partialorder %v1565, 0.0
  %vm1653 = vcmp.ge.f32.partialorder %v1578, 0.0
  %vm1654 = vcmp.ge.f32.partialorder %v1591, 0.0
  %vm1655 = vcmp.ge.f32.partialorder %v1604, 0.0
  %vm1656 = vcmp.ge.f32.partialorder %v1617, 0.0
  %vm1657 = vcmp.ge.f32.partialorder %v1630, 0.0
  %v1658 = vmul.f32 %v1318, 0.2
  %v1659 = vmul.f32 %v1331, 0.2
  %v1660 = vmul.f32 %v1344, 0.2
  %v1661 = vmul.f32 %v1357, 0.2
  %v1662 = vmul.f32 %v1370, 0.2
  %v1663 = vmul.f32 %v1383, 0.2
  %v1664 = vmul.f32 %v1396, 0.2
  %v1665 = vmul.f32 %v1409, 0.2
  %v1666 = vmul.f32 %v1422, 0.2
  %v1667 = vmul.f32 %v1435, 0.2
  %v1668 = vmul.f32 %v1448, 0.2
  %v1669 = vmul.f32 %v1461, 0.2
  %v1670 = vmul.f32 %v1474, 0.2
  %v1671 = vmul.f32 %v1487, 0.2
  %v1672 = vmul.f32 %v1500, 0.2
  %v1673 = vmul.f32 %v1513, 0.2
  %v1674 = vmul.f32 %v1526, 0.2
  %v1675 = vmul.f32 %v1539, 0.2
  %v1676 = vmul.f32 %v1552, 0.2
  %v1677 = vmul.f32 %v1565, 0.2
  %v1678 = vmul.f32 %v1578, 0.2
  %v1679 = vmul.f32 %v1591, 0.2
  %v1680 = vmul.f32 %v1604, 0.2
  %v1681 = vmul.f32 %v1617, 0.2
  %v1682 = vmul.f32 %v1630, 0.2
  %v1683 = vsel %vm1633, %v1318, %v1658
  %v1684 = vsel %vm1634, %v1331, %v1659
  %v1685 = vsel %vm1635, %v1344, %v1660
  %v1686 = vsel %vm1636, %v1357, %v1661
  %v1687 = vsel %vm1637, %v1370, %v1662
  %v1688 = vsel %vm1638, %v1383, %v1663
  %v1689 = vsel %vm1639, %v1396, %v1664
  %v1690 = vsel %vm1640, %v1409, %v1665
  %v1691 = vsel %vm1641, %v1422, %v1666
  %v1692 = vsel %vm1642, %v1435, %v1667
  %v1693 = vsel %vm1643, %v1448, %v1668
  %v1694 = vsel %vm1644, %v1461, %v1669
  %v1695 = vsel %vm1645, %v1474, %v1670
  %v1696 = vsel %vm1646, %v1487, %v1671
  %v1697 = vsel %vm1647, %v1500, %v1672
  %v1698 = vsel %vm1648, %v1513, %v1673
  %v1699 = vsel %vm1649, %v1526, %v1674
  %v1700 = vsel %vm1650, %v1539, %v1675
  %v1701 = vsel %vm1651, %v1552, %v1676
  %v1702 = vsel %vm1652, %v1565, %v1677
  %v1703 = vsel %vm1653, %v1578, %v1678
  %v1704 = vsel %vm1654, %v1591, %v1679
  %v1705 = vsel %vm1655, %v1604, %v1680
  %v1706 = vsel %vm1656, %v1617, %v1681
  %v1707 = vsel %vm1657, %v1630, %v1682
  %1709 = vrot.lane.b32.xlu0 %v1683, 79
  %v1710 = vpop.permute.xlu0 %1709
  %1713 = vrot.lane.b32.xlu0 %v1683, 30
  %v1714 = vpop.permute.xlu0 %1713
  %1715 = vrot.lane.b32.xlu0 %v1684, 30
  %v1716 = vpop.permute.xlu0 %1715
  %vm1717 = vcmask 244736
  %v1718 = vsel %vm1717, %v1714, %v1716
  %1720 = vrot.lane.b32.xlu0 %v1684, 109
  %v1721 = vpop.permute.xlu0 %1720
  %1723 = vrot.lane.b32.xlu0 %v1684, 60
  %v1724 = vpop.permute.xlu0 %1723
  %1727 = vrot.lane.b32.xlu0 %v1684, 11
  %v1728 = vpop.permute.xlu0 %1727
  %1729 = vrot.lane.b32.xlu0 %v1685, 11
  %v1730 = vpop.permute.xlu0 %1729
  %vm1731 = vcmask 89088
  %v1732 = vsel %vm1731, %v1728, %v1730
  %1734 = vrot.lane.b32.xlu0 %v1685, 90
  %v1735 = vpop.permute.xlu0 %1734
  %1738 = vrot.lane.b32.xlu0 %v1685, 41
  %v1739 = vpop.permute.xlu0 %1738
  %1740 = vrot.lane.b32.xlu0 %v1686, 41
  %v1741 = vpop.permute.xlu0 %1740
  %vm1742 = vcmask 334848
  %v1743 = vsel %vm1742, %v1739, %v1741
  %1745 = vrot.lane.b32.xlu0 %v1686, 120
  %v1746 = vpop.permute.xlu0 %1745
  %1748 = vrot.lane.b32.xlu0 %v1686, 71
  %v1749 = vpop.permute.xlu0 %1748
  %1752 = vrot.lane.b32.xlu0 %v1686, 22
  %v1753 = vpop.permute.xlu0 %1752
  %1754 = vrot.lane.b32.xlu0 %v1687, 22
  %v1755 = vpop.permute.xlu0 %1754
  %vm1756 = vcmask 179200
  %v1757 = vsel %vm1756, %v1753, %v1755
  %1759 = vrot.lane.b32.xlu0 %v1687, 101
  %v1760 = vpop.permute.xlu0 %1759
  %1762 = vrot.lane.b32.xlu0 %v1687, 52
  %v1763 = vpop.permute.xlu0 %1762
  %1766 = vrot.lane.b32.xlu0 %v1687, 3
  %v1767 = vpop.permute.xlu0 %1766
  %1768 = vrot.lane.b32.xlu0 %v1688, 3
  %v1769 = vpop.permute.xlu0 %1768
  %vm1770 = vcmask 23552
  %v1771 = vsel %vm1770, %v1767, %v1769
  %1773 = vrot.lane.b32.xlu0 %v1688, 82
  %v1774 = vpop.permute.xlu0 %1773
  %1777 = vrot.lane.b32.xlu0 %v1688, 33
  %v1778 = vpop.permute.xlu0 %1777
  %1779 = vrot.lane.b32.xlu0 %v1689, 33
  %v1780 = vpop.permute.xlu0 %1779
  %vm1781 = vcmask 269312
  %v1782 = vsel %vm1781, %v1778, %v1780
  %1784 = vrot.lane.b32.xlu0 %v1689, 112
  %v1785 = vpop.permute.xlu0 %1784
  %1787 = vrot.lane.b32.xlu0 %v1689, 63
  %v1788 = vpop.permute.xlu0 %1787
  %1791 = vrot.lane.b32.xlu0 %v1689, 14
  %v1792 = vpop.permute.xlu0 %1791
  %1793 = vrot.lane.b32.xlu0 %v1690, 14
  %v1794 = vpop.permute.xlu0 %1793
  %vm1795 = vcmask 113664
  %v1796 = vsel %vm1795, %v1792, %v1794
  %1798 = vrot.lane.b32.xlu0 %v1690, 93
  %v1799 = vpop.permute.xlu0 %1798
  %1802 = vrot.lane.b32.xlu0 %v1690, 44
  %v1803 = vpop.permute.xlu0 %1802
  %1804 = vrot.lane.b32.xlu0 %v1691, 44
  %v1805 = vpop.permute.xlu0 %1804
  %vm1806 = vcmask 359424
  %v1807 = vsel %vm1806, %v1803, %v1805
  %1809 = vrot.lane.b32.xlu0 %v1691, 123
  %v1810 = vpop.permute.xlu0 %1809
  %1812 = vrot.lane.b32.xlu0 %v1691, 74
  %v1813 = vpop.permute.xlu0 %1812
  %1816 = vrot.lane.b32.xlu0 %v1691, 25
  %v1817 = vpop.permute.xlu0 %1816
  %1818 = vrot.lane.b32.xlu0 %v1692, 25
  %v1819 = vpop.permute.xlu0 %1818
  %vm1820 = vcmask 203776
  %v1821 = vsel %vm1820, %v1817, %v1819
  %1823 = vrot.lane.b32.xlu0 %v1692, 104
  %v1824 = vpop.permute.xlu0 %1823
  %1826 = vrot.lane.b32.xlu0 %v1692, 55
  %v1827 = vpop.permute.xlu0 %1826
  %1830 = vrot.lane.b32.xlu0 %v1692, 6
  %v1831 = vpop.permute.xlu0 %1830
  %1832 = vrot.lane.b32.xlu0 %v1693, 6
  %v1833 = vpop.permute.xlu0 %1832
  %vm1834 = vcmask 48128
  %v1835 = vsel %vm1834, %v1831, %v1833
  %1837 = vrot.lane.b32.xlu0 %v1693, 85
  %v1838 = vpop.permute.xlu0 %1837
  %1841 = vrot.lane.b32.xlu0 %v1693, 36
  %v1842 = vpop.permute.xlu0 %1841
  %1843 = vrot.lane.b32.xlu0 %v1694, 36
  %v1844 = vpop.permute.xlu0 %1843
  %vm1845 = vcmask 293888
  %v1846 = vsel %vm1845, %v1842, %v1844
  %1848 = vrot.lane.b32.xlu0 %v1694, 115
  %v1849 = vpop.permute.xlu0 %1848
  %1851 = vrot.lane.b32.xlu0 %v1694, 66
  %v1852 = vpop.permute.xlu0 %1851
  %1855 = vrot.lane.b32.xlu0 %v1694, 17
  %v1856 = vpop.permute.xlu0 %1855
  %1857 = vrot.lane.b32.xlu0 %v1695, 17
  %v1858 = vpop.permute.xlu0 %1857
  %vm1859 = vcmask 138240
  %v1860 = vsel %vm1859, %v1856, %v1858
  %1862 = vrot.lane.b32.xlu0 %v1695, 96
  %v1863 = vpop.permute.xlu0 %1862
  %1866 = vrot.lane.b32.xlu0 %v1695, 47
  %v1867 = vpop.permute.xlu0 %1866
  %1868 = vrot.lane.b32.xlu0 %v1696, 47
  %v1869 = vpop.permute.xlu0 %1868
  %vm1870 = vcmask 384000
  %v1871 = vsel %vm1870, %v1867, %v1869
  %1873 = vrot.lane.b32.xlu0 %v1696, 126
  %v1874 = vpop.permute.xlu0 %1873
  %1876 = vrot.lane.b32.xlu0 %v1696, 77
  %v1877 = vpop.permute.xlu0 %1876
  %1880 = vrot.lane.b32.xlu0 %v1696, 28
  %v1881 = vpop.permute.xlu0 %1880
  %1882 = vrot.lane.b32.xlu0 %v1697, 28
  %v1883 = vpop.permute.xlu0 %1882
  %vm1884 = vcmask 228352
  %v1885 = vsel %vm1884, %v1881, %v1883
  %1887 = vrot.lane.b32.xlu0 %v1697, 107
  %v1888 = vpop.permute.xlu0 %1887
  %1890 = vrot.lane.b32.xlu0 %v1697, 58
  %v1891 = vpop.permute.xlu0 %1890
  %1894 = vrot.lane.b32.xlu0 %v1697, 9
  %v1895 = vpop.permute.xlu0 %1894
  %1896 = vrot.lane.b32.xlu0 %v1698, 9
  %v1897 = vpop.permute.xlu0 %1896
  %vm1898 = vcmask 72704
  %v1899 = vsel %vm1898, %v1895, %v1897
  %1901 = vrot.lane.b32.xlu0 %v1698, 88
  %v1902 = vpop.permute.xlu0 %1901
  %1905 = vrot.lane.b32.xlu0 %v1698, 39
  %v1906 = vpop.permute.xlu0 %1905
  %1907 = vrot.lane.b32.xlu0 %v1699, 39
  %v1908 = vpop.permute.xlu0 %1907
  %vm1909 = vcmask 318464
  %v1910 = vsel %vm1909, %v1906, %v1908
  %1912 = vrot.lane.b32.xlu0 %v1699, 118
  %v1913 = vpop.permute.xlu0 %1912
  %1915 = vrot.lane.b32.xlu0 %v1699, 69
  %v1916 = vpop.permute.xlu0 %1915
  %1919 = vrot.lane.b32.xlu0 %v1699, 20
  %v1920 = vpop.permute.xlu0 %1919
  %1921 = vrot.lane.b32.xlu0 %v1700, 20
  %v1922 = vpop.permute.xlu0 %1921
  %vm1923 = vcmask 162816
  %v1924 = vsel %vm1923, %v1920, %v1922
  %1926 = vrot.lane.b32.xlu0 %v1700, 99
  %v1927 = vpop.permute.xlu0 %1926
  %1929 = vrot.lane.b32.xlu0 %v1700, 50
  %v1930 = vpop.permute.xlu0 %1929
  %1933 = vrot.lane.b32.xlu0 %v1700, 1
  %v1934 = vpop.permute.xlu0 %1933
  %1935 = vrot.lane.b32.xlu0 %v1701, 1
  %v1936 = vpop.permute.xlu0 %1935
  %vm1937 = vcmask 7168
  %v1938 = vsel %vm1937, %v1934, %v1936
  %1940 = vrot.lane.b32.xlu0 %v1701, 80
  %v1941 = vpop.permute.xlu0 %1940
  %1944 = vrot.lane.b32.xlu0 %v1701, 31
  %v1945 = vpop.permute.xlu0 %1944
  %1946 = vrot.lane.b32.xlu0 %v1702, 31
  %v1947 = vpop.permute.xlu0 %1946
  %vm1948 = vcmask 252928
  %v1949 = vsel %vm1948, %v1945, %v1947
  %1951 = vrot.lane.b32.xlu0 %v1702, 110
  %v1952 = vpop.permute.xlu0 %1951
  %1954 = vrot.lane.b32.xlu0 %v1702, 61
  %v1955 = vpop.permute.xlu0 %1954
  %1958 = vrot.lane.b32.xlu0 %v1702, 12
  %v1959 = vpop.permute.xlu0 %1958
  %1960 = vrot.lane.b32.xlu0 %v1703, 12
  %v1961 = vpop.permute.xlu0 %1960
  %vm1962 = vcmask 97280
  %v1963 = vsel %vm1962, %v1959, %v1961
  %1965 = vrot.lane.b32.xlu0 %v1703, 91
  %v1966 = vpop.permute.xlu0 %1965
  %1969 = vrot.lane.b32.xlu0 %v1703, 42
  %v1970 = vpop.permute.xlu0 %1969
  %1971 = vrot.lane.b32.xlu0 %v1704, 42
  %v1972 = vpop.permute.xlu0 %1971
  %vm1973 = vcmask 343040
  %v1974 = vsel %vm1973, %v1970, %v1972
  %1976 = vrot.lane.b32.xlu0 %v1704, 121
  %v1977 = vpop.permute.xlu0 %1976
  %1979 = vrot.lane.b32.xlu0 %v1704, 72
  %v1980 = vpop.permute.xlu0 %1979
  %1983 = vrot.lane.b32.xlu0 %v1704, 23
  %v1984 = vpop.permute.xlu0 %1983
  %1985 = vrot.lane.b32.xlu0 %v1705, 23
  %v1986 = vpop.permute.xlu0 %1985
  %vm1987 = vcmask 187392
  %v1988 = vsel %vm1987, %v1984, %v1986
  %1990 = vrot.lane.b32.xlu0 %v1705, 102
  %v1991 = vpop.permute.xlu0 %1990
  %1993 = vrot.lane.b32.xlu0 %v1705, 53
  %v1994 = vpop.permute.xlu0 %1993
  %1997 = vrot.lane.b32.xlu0 %v1705, 4
  %v1998 = vpop.permute.xlu0 %1997
  %1999 = vrot.lane.b32.xlu0 %v1706, 4
  %v2000 = vpop.permute.xlu0 %1999
  %vm2001 = vcmask 31744
  %v2002 = vsel %vm2001, %v1998, %v2000
  %2004 = vrot.lane.b32.xlu0 %v1706, 83
  %v2005 = vpop.permute.xlu0 %2004
  %2008 = vrot.lane.b32.xlu0 %v1706, 34
  %v2009 = vpop.permute.xlu0 %2008
  %2010 = vrot.lane.b32.xlu0 %v1707, 34
  %v2011 = vpop.permute.xlu0 %2010
  %vm2012 = vcmask 277504
  %v2013 = vsel %vm2012, %v2009, %v2011
  %2015 = vrot.lane.b32.xlu0 %v1707, 113
  %v2016 = vpop.permute.xlu0 %2015
  %v2018 = vrot.slane %v1718, 4
  %vm2019 = vcmask 1047556
  %v2020 = vsel %vm2019, %v2018, %v1683
  %v2022 = vunpack.c.l.s4 1983009808
  %v2023 = vunpack.c.0.s8 %v2022
  %v2024 = vperm.slane %v2020, %v2023
  %v2025 = vrot.slane %v1721, 4
  %v2026 = vsel %vm2019, %v2025, %v1710
  %v2028 = vunpack.c.l.s4 1983009808
  %v2029 = vunpack.c.0.s8 %v2028
  %v2030 = vperm.slane %v2026, %v2029
  %v2031 = vrot.slane %v1735, 4
  %v2032 = vsel %vm2019, %v2031, %v1724
  %v2034 = vunpack.c.l.s4 1983009808
  %v2035 = vunpack.c.0.s8 %v2034
  %v2036 = vperm.slane %v2032, %v2035
  %v2037 = vrot.slane %v1743, 4
  %v2038 = vsel %vm2019, %v2037, %v1732
  %v2040 = vunpack.c.l.s4 1983009808
  %v2041 = vunpack.c.0.s8 %v2040
  %v2042 = vperm.slane %v2038, %v2041
  %v2043 = vrot.slane %v2030, 4
  %v2044 = vsel %vm2019, %v2043, %v2024
  %v2046 = vunpack.c.l.s4 1934713408
  %v2047 = vunpack.c.0.s8 %v2046
  %v2048 = vperm.slane %v2044, %v2047
  %v2049 = vrot.slane %v2042, 4
  %v2050 = vsel %vm2019, %v2049, %v2036
  %v2052 = vunpack.c.l.s4 1934713408
  %v2053 = vunpack.c.0.s8 %v2052
  %v2054 = vperm.slane %v2050, %v2053
  %v2055 = vrot.slane %v2054, 4
  %v2056 = vsel %vm2019, %v2055, %v2048
  %v2057 = vrot.slane %v2048, 4
  %v2058 = vsel %vm2019, %v2054, %v2057
  %v2059 = vrot.slane %v1757, 4
  %v2060 = vsel %vm2019, %v2059, %v1746
  %v2062 = vunpack.c.l.s4 1983009808
  %v2063 = vunpack.c.0.s8 %v2062
  %v2064 = vperm.slane %v2060, %v2063
  %v2065 = vrot.slane %v1760, 4
  %v2066 = vsel %vm2019, %v2065, %v1749
  %v2068 = vunpack.c.l.s4 1983009808
  %v2069 = vunpack.c.0.s8 %v2068
  %v2070 = vperm.slane %v2066, %v2069
  %v2071 = vrot.slane %v1774, 4
  %v2072 = vsel %vm2019, %v2071, %v1763
  %v2074 = vunpack.c.l.s4 1983009808
  %v2075 = vunpack.c.0.s8 %v2074
  %v2076 = vperm.slane %v2072, %v2075
  %v2077 = vrot.slane %v1782, 4
  %v2078 = vsel %vm2019, %v2077, %v1771
  %v2080 = vunpack.c.l.s4 1983009808
  %v2081 = vunpack.c.0.s8 %v2080
  %v2082 = vperm.slane %v2078, %v2081
  %v2083 = vrot.slane %v2070, 4
  %v2084 = vsel %vm2019, %v2083, %v2064
  %v2086 = vunpack.c.l.s4 1934713408
  %v2087 = vunpack.c.0.s8 %v2086
  %v2088 = vperm.slane %v2084, %v2087
  %v2089 = vrot.slane %v2082, 4
  %v2090 = vsel %vm2019, %v2089, %v2076
  %v2092 = vunpack.c.l.s4 1934713408
  %v2093 = vunpack.c.0.s8 %v2092
  %v2094 = vperm.slane %v2090, %v2093
  %v2095 = vrot.slane %v2094, 4
  %v2096 = vsel %vm2019, %v2095, %v2088
  %v2097 = vrot.slane %v2088, 4
  %v2098 = vsel %vm2019, %v2094, %v2097
  %v2099 = vrot.slane %v1796, 4
  %v2100 = vsel %vm2019, %v2099, %v1785
  %v2102 = vunpack.c.l.s4 1983009808
  %v2103 = vunpack.c.0.s8 %v2102
  %v2104 = vperm.slane %v2100, %v2103
  %v2105 = vrot.slane %v1799, 4
  %v2106 = vsel %vm2019, %v2105, %v1788
  %v2108 = vunpack.c.l.s4 1983009808
  %v2109 = vunpack.c.0.s8 %v2108
  %v2110 = vperm.slane %v2106, %v2109
  %v2111 = vrot.slane %v1813, 4
  %v2112 = vsel %vm2019, %v2111, %v1807
  %v2114 = vunpack.c.l.s4 1983009808
  %v2115 = vunpack.c.0.s8 %v2114
  %v2116 = vperm.slane %v2112, %v2115
  %v2117 = vrot.slane %v1821, 4
  %v2118 = vsel %vm2019, %v2117, %v1810
  %v2120 = vunpack.c.l.s4 1983009808
  %v2121 = vunpack.c.0.s8 %v2120
  %v2122 = vperm.slane %v2118, %v2121
  %v2123 = vrot.slane %v2110, 4
  %v2124 = vsel %vm2019, %v2123, %v2104
  %v2126 = vunpack.c.l.s4 1934713408
  %v2127 = vunpack.c.0.s8 %v2126
  %v2128 = vperm.slane %v2124, %v2127
  %v2129 = vrot.slane %v2122, 4
  %v2130 = vsel %vm2019, %v2129, %v2116
  %v2132 = vunpack.c.l.s4 1934713408
  %v2133 = vunpack.c.0.s8 %v2132
  %v2134 = vperm.slane %v2130, %v2133
  %v2135 = vrot.slane %v2134, 4
  %v2136 = vsel %vm2019, %v2135, %v2128
  %v2137 = vrot.slane %v2128, 4
  %v2138 = vsel %vm2019, %v2134, %v2137
  %v2139 = vrot.slane %v1835, 4
  %v2140 = vsel %vm2019, %v2139, %v1824
  %v2142 = vunpack.c.l.s4 1983009808
  %v2143 = vunpack.c.0.s8 %v2142
  %v2144 = vperm.slane %v2140, %v2143
  %v2145 = vrot.slane %v1838, 4
  %v2146 = vsel %vm2019, %v2145, %v1827
  %v2148 = vunpack.c.l.s4 1983009808
  %v2149 = vunpack.c.0.s8 %v2148
  %v2150 = vperm.slane %v2146, %v2149
  %v2151 = vrot.slane %v1852, 4
  %v2152 = vsel %vm2019, %v2151, %v1846
  %v2154 = vunpack.c.l.s4 1983009808
  %v2155 = vunpack.c.0.s8 %v2154
  %v2156 = vperm.slane %v2152, %v2155
  %v2157 = vrot.slane %v1860, 4
  %v2158 = vsel %vm2019, %v2157, %v1849
  %v2160 = vunpack.c.l.s4 1983009808
  %v2161 = vunpack.c.0.s8 %v2160
  %v2162 = vperm.slane %v2158, %v2161
  %v2163 = vrot.slane %v2150, 4
  %v2164 = vsel %vm2019, %v2163, %v2144
  %v2166 = vunpack.c.l.s4 1934713408
  %v2167 = vunpack.c.0.s8 %v2166
  %v2168 = vperm.slane %v2164, %v2167
  %v2169 = vrot.slane %v2162, 4
  %v2170 = vsel %vm2019, %v2169, %v2156
  %v2172 = vunpack.c.l.s4 1934713408
  %v2173 = vunpack.c.0.s8 %v2172
  %v2174 = vperm.slane %v2170, %v2173
  %v2175 = vrot.slane %v2174, 4
  %v2176 = vsel %vm2019, %v2175, %v2168
  %v2177 = vrot.slane %v2168, 4
  %v2178 = vsel %vm2019, %v2174, %v2177
  %v2179 = vrot.slane %v1874, 4
  %v2180 = vsel %vm2019, %v2179, %v1863
  %v2182 = vunpack.c.l.s4 1983009808
  %v2183 = vunpack.c.0.s8 %v2182
  %v2184 = vperm.slane %v2180, %v2183
  %v2185 = vrot.slane %v1877, 4
  %v2186 = vsel %vm2019, %v2185, %v1871
  %v2188 = vunpack.c.l.s4 1983009808
  %v2189 = vunpack.c.0.s8 %v2188
  %v2190 = vperm.slane %v2186, %v2189
  %v2191 = vrot.slane %v1891, 4
  %v2192 = vsel %vm2019, %v2191, %v1885
  %v2194 = vunpack.c.l.s4 1983009808
  %v2195 = vunpack.c.0.s8 %v2194
  %v2196 = vperm.slane %v2192, %v2195
  %v2197 = vrot.slane %v1899, 4
  %v2198 = vsel %vm2019, %v2197, %v1888
  %v2200 = vunpack.c.l.s4 1983009808
  %v2201 = vunpack.c.0.s8 %v2200
  %v2202 = vperm.slane %v2198, %v2201
  %v2203 = vrot.slane %v2190, 4
  %v2204 = vsel %vm2019, %v2203, %v2184
  %v2206 = vunpack.c.l.s4 1934713408
  %v2207 = vunpack.c.0.s8 %v2206
  %v2208 = vperm.slane %v2204, %v2207
  %v2209 = vrot.slane %v2202, 4
  %v2210 = vsel %vm2019, %v2209, %v2196
  %v2212 = vunpack.c.l.s4 1934713408
  %v2213 = vunpack.c.0.s8 %v2212
  %v2214 = vperm.slane %v2210, %v2213
  %v2215 = vrot.slane %v2214, 4
  %v2216 = vsel %vm2019, %v2215, %v2208
  %v2217 = vrot.slane %v2208, 4
  %v2218 = vsel %vm2019, %v2214, %v2217
  %v2219 = vrot.slane %v1913, 4
  %v2220 = vsel %vm2019, %v2219, %v1902
  %v2222 = vunpack.c.l.s4 1983009808
  %v2223 = vunpack.c.0.s8 %v2222
  %v2224 = vperm.slane %v2220, %v2223
  %v2225 = vrot.slane %v1916, 4
  %v2226 = vsel %vm2019, %v2225, %v1910
  %v2228 = vunpack.c.l.s4 1983009808
  %v2229 = vunpack.c.0.s8 %v2228
  %v2230 = vperm.slane %v2226, %v2229
  %v2231 = vrot.slane %v1930, 4
  %v2232 = vsel %vm2019, %v2231, %v1924
  %v2234 = vunpack.c.l.s4 1983009808
  %v2235 = vunpack.c.0.s8 %v2234
  %v2236 = vperm.slane %v2232, %v2235
  %v2237 = vrot.slane %v1938, 4
  %v2238 = vsel %vm2019, %v2237, %v1927
  %v2240 = vunpack.c.l.s4 1983009808
  %v2241 = vunpack.c.0.s8 %v2240
  %v2242 = vperm.slane %v2238, %v2241
  %v2243 = vrot.slane %v2230, 4
  %v2244 = vsel %vm2019, %v2243, %v2224
  %v2246 = vunpack.c.l.s4 1934713408
  %v2247 = vunpack.c.0.s8 %v2246
  %v2248 = vperm.slane %v2244, %v2247
  %v2249 = vrot.slane %v2242, 4
  %v2250 = vsel %vm2019, %v2249, %v2236
  %v2252 = vunpack.c.l.s4 1934713408
  %v2253 = vunpack.c.0.s8 %v2252
  %v2254 = vperm.slane %v2250, %v2253
  %v2255 = vrot.slane %v2254, 4
  %v2256 = vsel %vm2019, %v2255, %v2248
  %v2257 = vrot.slane %v2248, 4
  %v2258 = vsel %vm2019, %v2254, %v2257
  %v2259 = vrot.slane %v1952, 4
  %v2260 = vsel %vm2019, %v2259, %v1941
  %v2262 = vunpack.c.l.s4 1983009808
  %v2263 = vunpack.c.0.s8 %v2262
  %v2264 = vperm.slane %v2260, %v2263
  %v2265 = vrot.slane %v1955, 4
  %v2266 = vsel %vm2019, %v2265, %v1949
  %v2268 = vunpack.c.l.s4 1983009808
  %v2269 = vunpack.c.0.s8 %v2268
  %v2270 = vperm.slane %v2266, %v2269
  %v2271 = vrot.slane %v1974, 4
  %v2272 = vsel %vm2019, %v2271, %v1963
  %v2274 = vunpack.c.l.s4 1983009808
  %v2275 = vunpack.c.0.s8 %v2274
  %v2276 = vperm.slane %v2272, %v2275
  %v2277 = vrot.slane %v1977, 4
  %v2278 = vsel %vm2019, %v2277, %v1966
  %v2280 = vunpack.c.l.s4 1983009808
  %v2281 = vunpack.c.0.s8 %v2280
  %v2282 = vperm.slane %v2278, %v2281
  %v2283 = vrot.slane %v2270, 4
  %v2284 = vsel %vm2019, %v2283, %v2264
  %v2286 = vunpack.c.l.s4 1934713408
  %v2287 = vunpack.c.0.s8 %v2286
  %v2288 = vperm.slane %v2284, %v2287
  %v2289 = vrot.slane %v2282, 4
  %v2290 = vsel %vm2019, %v2289, %v2276
  %v2292 = vunpack.c.l.s4 1934713408
  %v2293 = vunpack.c.0.s8 %v2292
  %v2294 = vperm.slane %v2290, %v2293
  %v2295 = vrot.slane %v2294, 4
  %v2296 = vsel %vm2019, %v2295, %v2288
  %v2297 = vrot.slane %v2288, 4
  %v2298 = vsel %vm2019, %v2294, %v2297
  %v2299 = vrot.slane %v1991, 4
  %v2300 = vsel %vm2019, %v2299, %v1980
  %v2302 = vunpack.c.l.s4 1983009808
  %v2303 = vunpack.c.0.s8 %v2302
  %v2304 = vperm.slane %v2300, %v2303
  %v2305 = vrot.slane %v1994, 4
  %v2306 = vsel %vm2019, %v2305, %v1988
  %v2308 = vunpack.c.l.s4 1983009808
  %v2309 = vunpack.c.0.s8 %v2308
  %v2310 = vperm.slane %v2306, %v2309
  %v2311 = vrot.slane %v2013, 4
  %v2312 = vsel %vm2019, %v2311, %v2002
  %v2314 = vunpack.c.l.s4 1983009808
  %v2315 = vunpack.c.0.s8 %v2314
  %v2316 = vperm.slane %v2312, %v2315
  %v2317 = vrot.slane %v2016, 4
  %v2318 = vsel %vm2019, %v2317, %v2005
  %v2320 = vunpack.c.l.s4 1983009808
  %v2321 = vunpack.c.0.s8 %v2320
  %v2322 = vperm.slane %v2318, %v2321
  %v2323 = vrot.slane %v2310, 4
  %v2324 = vsel %vm2019, %v2323, %v2304
  %v2326 = vunpack.c.l.s4 1934713408
  %v2327 = vunpack.c.0.s8 %v2326
  %v2328 = vperm.slane %v2324, %v2327
  %v2329 = vrot.slane %v2322, 4
  %v2330 = vsel %vm2019, %v2329, %v2316
  %v2332 = vunpack.c.l.s4 1934713408
  %v2333 = vunpack.c.0.s8 %v2332
  %v2334 = vperm.slane %v2330, %v2333
  %v2335 = vrot.slane %v2334, 4
  %v2336 = vsel %vm2019, %v2335, %v2328
  %v2337 = vrot.slane %v2328, 4
  %v2338 = vsel %vm2019, %v2334, %v2337
  %2347 = vrot.lane.b32.xlu0 %v2058, 49
  %v2348 = vpop.permute.xlu0 %2347
  %2349 = vrot.lane.b32.xlu0 %v2098, 49
  %v2350 = vpop.permute.xlu0 %2349
  %2351 = vrot.lane.b32.xlu0 %v2138, 49
  %v2352 = vpop.permute.xlu0 %2351
  %2353 = vrot.lane.b32.xlu0 %v2178, 49
  %v2354 = vpop.permute.xlu0 %2353
  %2355 = vrot.lane.b32.xlu0 %v2218, 49
  %v2356 = vpop.permute.xlu0 %2355
  %2357 = vrot.lane.b32.xlu0 %v2258, 49
  %v2358 = vpop.permute.xlu0 %2357
  %2359 = vrot.lane.b32.xlu0 %v2298, 49
  %v2360 = vpop.permute.xlu0 %2359
  %2361 = vrot.lane.b32.xlu0 %v2338, 49
  %v2362 = vpop.permute.xlu0 %2361
  %vm2371 = vcmask 400384
  %v2372 = vsel %vm2371, %v2056, %v2348
  %v2373 = vsel %vm2371, %v2096, %v2350
  %v2374 = vsel %vm2371, %v2136, %v2352
  %v2375 = vsel %vm2371, %v2176, %v2354
  %v2376 = vsel %vm2371, %v2216, %v2356
  %v2377 = vsel %vm2371, %v2256, %v2358
  %v2378 = vsel %vm2371, %v2296, %v2360
  %v2379 = vsel %vm2371, %v2336, %v2362
  %v2380 = vpack.c.bf16 %v2372, %v2372
  %v2381 = vpack.c.bf16 %v2373, %v2373
  %v2382 = vpack.c.bf16 %v2374, %v2374
  %v2383 = vpack.c.bf16 %v2375, %v2375
  %v2384 = vpack.c.bf16 %v2376, %v2376
  %v2385 = vpack.c.bf16 %v2377, %v2377
  %v2386 = vpack.c.bf16 %v2378, %v2378
  %v2387 = vpack.c.bf16 %v2379, %v2379
  %v2396 = vunpack.c.l.b16 %v2380
  %v2397 = vunpack.c.l.b16 %v2381
  %v2398 = vunpack.c.l.b16 %v2382
  %v2399 = vunpack.c.l.b16 %v2383
  %v2400 = vunpack.c.l.b16 %v2384
  %v2401 = vunpack.c.l.b16 %v2385
  %v2402 = vunpack.c.l.b16 %v2386
  %v2403 = vunpack.c.l.b16 %v2387
  %v2404 = vpack.c.b16 %v2397, %v2396
  %v2405 = vpack.c.b16 %v2399, %v2398
  %v2406 = vpack.c.b16 %v2401, %v2400
  %v2407 = vpack.c.b16 %v2403, %v2402
  %2408 = vrot.lane.b32.xlu0 %v2404, 8
  %v2409 = vpop.permute.xlu0 %2408
  %2410 = vrot.lane.b32.xlu0 %v2405, 8
  %v2411 = vpop.permute.xlu0 %2410
  %2412 = vrot.lane.b32.xlu0 %v2406, 8
  %v2413 = vpop.permute.xlu0 %2412
  %2414 = vrot.lane.b32.xlu0 %v2407, 8
  %v2415 = vpop.permute.xlu0 %2414
  %vm2416 = vcmask 64512
  %v2419 = vsel %vm2416, 0, %v2409
  %v2422 = vsel %vm2416, 0, %v2411
  %v2425 = vsel %vm2416, 0, %v2413
  %v2428 = vsel %vm2416, 0, %v2415
  %v2430 = vld [vmem:[%s7] sm:$0x1]
  %v2432 = vpack.i.b16 %v2430, %v2430
  %v2434 = vperm.slane %v2432, 0
  %v2435 = vunpack.c.l.bf16 %v2419
  %v2436 = vunpack.c.h.bf16 %v2419
  %v2437 = vunpack.c.l.bf16 %v2422
  %v2438 = vunpack.c.h.bf16 %v2422
  %v2439 = vunpack.c.l.bf16 %v2425
  %v2440 = vunpack.c.h.bf16 %v2425
  %v2441 = vunpack.c.l.bf16 %v2428
  %v2442 = vunpack.c.h.bf16 %v2428
  %v2443 = vunpack.c.l.bf16 %v2434
  %v2444 = vmul.f32 %v2435, %v2443
  %v2445 = vmul.f32 %v2436, %v2443
  %v2446 = vmul.f32 %v2437, %v2443
  %v2447 = vmul.f32 %v2438, %v2443
  %v2448 = vmul.f32 %v2439, %v2443
  %v2449 = vmul.f32 %v2440, %v2443
  %v2450 = vmul.f32 %v2441, %v2443
  %v2451 = vmul.f32 %v2442, %v2443
  %v2452 = vpack.c.bf16 %v2445, %v2444
  %v2453 = vpack.c.bf16 %v2447, %v2446
  %v2454 = vpack.c.bf16 %v2449, %v2448
  %v2455 = vpack.c.bf16 %v2451, %v2450
  %v2456 = vld [vmem:[%s3] sm:$0xf]
  %v2457 = vld [vmem:[%s3 + $0x4] sm:$0xf]
  %v2458 = vld [vmem:[%s3 + $0x8] sm:$0xf]
  %v2459 = vld [vmem:[%s3 + $0xc] sm:$0xf]
  %v2460 = vld [vmem:[%s3 + $0x10] sm:$0xf]
  %v2461 = vld [vmem:[%s3 + $0x14] sm:$0xf]
  %v2462 = vld [vmem:[%s3 + $0x18] sm:$0xf]
  %v2463 = vld [vmem:[%s3 + $0x1c] sm:$0xf]
  %v2464 = vld [vmem:[%s3 + $0x20] sm:$0xf]
  %v2465 = vld [vmem:[%s3 + $0x24] sm:$0xf]
  %v2466 = vld [vmem:[%s3 + $0x28] sm:$0xf]
  %v2467 = vld [vmem:[%s3 + $0x2c] sm:$0xf]
  %v2468 = vld [vmem:[%s3 + $0x30] sm:$0xf]
  %v2469 = vld [vmem:[%s3 + $0x34] sm:$0xf]
  %v2470 = vld [vmem:[%s3 + $0x38] sm:$0xf]
  %v2471 = vld [vmem:[%s3 + $0x3c] sm:$0xf]
  %2472 = vrot.lane.b32.xlu0 %v2404, 7
  %v2473 = vpop.permute.xlu0 %2472
  %2474 = vrot.lane.b32.xlu0 %v2405, 7
  %v2475 = vpop.permute.xlu0 %2474
  %2476 = vrot.lane.b32.xlu0 %v2406, 7
  %v2477 = vpop.permute.xlu0 %2476
  %2478 = vrot.lane.b32.xlu0 %v2407, 7
  %v2479 = vpop.permute.xlu0 %2478
  %vm2480 = vcmask 56320
  %v2482 = vsel %vm2480, 0, %v2473
  %v2485 = vsel %vm2480, 0, %v2475
  %v2488 = vsel %vm2480, 0, %v2477
  %v2491 = vsel %vm2480, 0, %v2479
  %s2493 = scalar_lea.vmem %s7, 1
  %v2494 = vld [vmem:[%s2493] sm:$0x1]
  %v2496 = vpack.i.b16 %v2494, %v2494
  %v2498 = vperm.slane %v2496, 0
  %v2499 = vunpack.c.l.bf16 %v2482
  %v2500 = vunpack.c.h.bf16 %v2482
  %v2501 = vunpack.c.l.bf16 %v2485
  %v2502 = vunpack.c.h.bf16 %v2485
  %v2503 = vunpack.c.l.bf16 %v2488
  %v2504 = vunpack.c.h.bf16 %v2488
  %v2505 = vunpack.c.l.bf16 %v2491
  %v2506 = vunpack.c.h.bf16 %v2491
  %v2507 = vunpack.c.l.bf16 %v2498
  %v2508 = vmul.f32 %v2499, %v2507
  %v2509 = vmul.f32 %v2500, %v2507
  %v2510 = vmul.f32 %v2501, %v2507
  %v2511 = vmul.f32 %v2502, %v2507
  %v2512 = vmul.f32 %v2503, %v2507
  %v2513 = vmul.f32 %v2504, %v2507
  %v2514 = vmul.f32 %v2505, %v2507
  %v2515 = vmul.f32 %v2506, %v2507
  %v2516 = vpack.c.bf16 %v2509, %v2508
  %v2517 = vpack.c.bf16 %v2511, %v2510
  %v2518 = vpack.c.bf16 %v2513, %v2512
  %v2519 = vpack.c.bf16 %v2515, %v2514
  %s2520 = scalar_lea.vmem %s3, 64
  %v2521 = vld [vmem:[%s2520] sm:$0xf]
  %v2522 = vld [vmem:[%s2520 + $0x4] sm:$0xf]
  %v2523 = vld [vmem:[%s2520 + $0x8] sm:$0xf]
  %v2524 = vld [vmem:[%s2520 + $0xc] sm:$0xf]
  %v2525 = vld [vmem:[%s2520 + $0x10] sm:$0xf]
  %v2526 = vld [vmem:[%s2520 + $0x14] sm:$0xf]
  %v2527 = vld [vmem:[%s2520 + $0x18] sm:$0xf]
  %v2528 = vld [vmem:[%s2520 + $0x1c] sm:$0xf]
  %v2529 = vld [vmem:[%s2520 + $0x20] sm:$0xf]
  %v2530 = vld [vmem:[%s2520 + $0x24] sm:$0xf]
  %v2531 = vld [vmem:[%s2520 + $0x28] sm:$0xf]
  %v2532 = vld [vmem:[%s2520 + $0x2c] sm:$0xf]
  %v2533 = vld [vmem:[%s2520 + $0x30] sm:$0xf]
  %v2534 = vld [vmem:[%s2520 + $0x34] sm:$0xf]
  %v2535 = vld [vmem:[%s2520 + $0x38] sm:$0xf]
  %v2536 = vld [vmem:[%s2520 + $0x3c] sm:$0xf]
  %v2553 = vunpack.c.l.b16 %v2521
  %v2554 = vunpack.c.l.b16 %v2522
  %v2555 = vunpack.c.l.b16 %v2523
  %v2556 = vunpack.c.l.b16 %v2524
  %v2557 = vunpack.c.l.b16 %v2525
  %v2558 = vunpack.c.l.b16 %v2526
  %v2559 = vunpack.c.l.b16 %v2527
  %v2560 = vunpack.c.l.b16 %v2528
  %v2561 = vunpack.c.l.b16 %v2529
  %v2562 = vunpack.c.l.b16 %v2530
  %v2563 = vunpack.c.l.b16 %v2531
  %v2564 = vunpack.c.l.b16 %v2532
  %v2565 = vunpack.c.l.b16 %v2533
  %v2566 = vunpack.c.l.b16 %v2534
  %v2567 = vunpack.c.l.b16 %v2535
  %v2568 = vunpack.c.l.b16 %v2536
  %v2569 = vpack.c.b16 %v2554, %v2553
  %v2570 = vpack.c.b16 %v2556, %v2555
  %v2571 = vpack.c.b16 %v2558, %v2557
  %v2572 = vpack.c.b16 %v2560, %v2559
  %v2573 = vpack.c.b16 %v2562, %v2561
  %v2574 = vpack.c.b16 %v2564, %v2563
  %v2575 = vpack.c.b16 %v2566, %v2565
  %v2576 = vpack.c.b16 %v2568, %v2567
  %vm2577 = vcmask 523264
  %v2579 = vsel %vm2577, %v2569, 0
  %v2582 = vsel %vm2577, %v2570, 0
  %v2585 = vsel %vm2577, %v2571, 0
  %v2588 = vsel %vm2577, %v2572, 0
  %v2591 = vsel %vm2577, %v2573, 0
  %v2594 = vsel %vm2577, %v2574, 0
  %v2597 = vsel %vm2577, %v2575, 0
  %v2600 = vsel %vm2577, %v2576, 0
  %2602 = vmatpush.bf16.msra.mxu0 0
  %2603 = vmatpush.bf16.msra.mxu0 0
  %2604 = vmatpush.bf16.msra.mxu0 0
  %2605 = vmatpush.bf16.msra.mxu0 0
  %2606 = vmatpush.bf16.msra.mxu0 %v2519
  %2607 = vmatpush.bf16.msra.mxu0 %v2518
  %2608 = vmatpush.bf16.msra.mxu0 %v2517
  %2609 = vmatpush.bf16.msra.mxu0 %v2516
  %2610 = vmatmul.bf16.gmra.mxu0 %v2579
  %v2611 = vpop.f32.mrf.mxu0
  %v2612 = vadd.f32 0.0, %v2611
  %v2613 = vpop.f32.mrf.mxu0
  %v2614 = vadd.f32 0.0, %v2613
  %2615 = vmatmul.bf16.gmra.mxu0 %v2582
  %v2616 = vpop.f32.mrf.mxu0
  %v2617 = vadd.f32 0.0, %v2616
  %v2618 = vpop.f32.mrf.mxu0
  %v2619 = vadd.f32 0.0, %v2618
  %2620 = vmatmul.bf16.gmra.mxu0 %v2585
  %v2621 = vpop.f32.mrf.mxu0
  %v2622 = vadd.f32 0.0, %v2621
  %v2623 = vpop.f32.mrf.mxu0
  %v2624 = vadd.f32 0.0, %v2623
  %2625 = vmatmul.bf16.gmra.mxu0 %v2588
  %v2626 = vpop.f32.mrf.mxu0
  %v2627 = vadd.f32 0.0, %v2626
  %v2628 = vpop.f32.mrf.mxu0
  %v2629 = vadd.f32 0.0, %v2628
  %2630 = vmatmul.bf16.gmra.mxu0 %v2591
  %v2631 = vpop.f32.mrf.mxu0
  %v2632 = vadd.f32 0.0, %v2631
  %v2633 = vpop.f32.mrf.mxu0
  %v2634 = vadd.f32 0.0, %v2633
  %2635 = vmatmul.bf16.gmra.mxu0 %v2594
  %v2636 = vpop.f32.mrf.mxu0
  %v2637 = vadd.f32 0.0, %v2636
  %v2638 = vpop.f32.mrf.mxu0
  %v2639 = vadd.f32 0.0, %v2638
  %2640 = vmatmul.bf16.gmra.mxu0 %v2597
  %v2641 = vpop.f32.mrf.mxu0
  %v2642 = vadd.f32 0.0, %v2641
  %v2643 = vpop.f32.mrf.mxu0
  %v2644 = vadd.f32 0.0, %v2643
  %2645 = vmatmul.bf16.gmra.mxu0 %v2600
  %v2646 = vpop.f32.mrf.mxu0
  %v2647 = vadd.f32 0.0, %v2646
  %v2648 = vpop.f32.mrf.mxu0
  %v2649 = vadd.f32 0.0, %v2648
  %2650 = vdwg.mxu0
  %v2667 = vunpack.c.l.b16 %v2456
  %v2668 = vunpack.c.l.b16 %v2457
  %v2669 = vunpack.c.l.b16 %v2458
  %v2670 = vunpack.c.l.b16 %v2459
  %v2671 = vunpack.c.l.b16 %v2460
  %v2672 = vunpack.c.l.b16 %v2461
  %v2673 = vunpack.c.l.b16 %v2462
  %v2674 = vunpack.c.l.b16 %v2463
  %v2675 = vunpack.c.l.b16 %v2464
  %v2676 = vunpack.c.l.b16 %v2465
  %v2677 = vunpack.c.l.b16 %v2466
  %v2678 = vunpack.c.l.b16 %v2467
  %v2679 = vunpack.c.l.b16 %v2468
  %v2680 = vunpack.c.l.b16 %v2469
  %v2681 = vunpack.c.l.b16 %v2470
  %v2682 = vunpack.c.l.b16 %v2471
  %v2683 = vpack.c.b16 %v2668, %v2667
  %v2684 = vpack.c.b16 %v2670, %v2669
  %v2685 = vpack.c.b16 %v2672, %v2671
  %v2686 = vpack.c.b16 %v2674, %v2673
  %v2687 = vpack.c.b16 %v2676, %v2675
  %v2688 = vpack.c.b16 %v2678, %v2677
  %v2689 = vpack.c.b16 %v2680, %v2679
  %v2690 = vpack.c.b16 %v2682, %v2681
  %v2692 = vsel %vm2577, %v2683, 0
  %v2695 = vsel %vm2577, %v2684, 0
  %v2698 = vsel %vm2577, %v2685, 0
  %v2701 = vsel %vm2577, %v2686, 0
  %v2704 = vsel %vm2577, %v2687, 0
  %v2707 = vsel %vm2577, %v2688, 0
  %v2710 = vsel %vm2577, %v2689, 0
  %v2713 = vsel %vm2577, %v2690, 0
  %2715 = vmatpush.bf16.msra.mxu0 0
  %2716 = vmatpush.bf16.msra.mxu0 0
  %2717 = vmatpush.bf16.msra.mxu0 0
  %2718 = vmatpush.bf16.msra.mxu0 0
  %2719 = vmatpush.bf16.msra.mxu0 %v2455
  %2720 = vmatpush.bf16.msra.mxu0 %v2454
  %2721 = vmatpush.bf16.msra.mxu0 %v2453
  %2722 = vmatpush.bf16.msra.mxu0 %v2452
  %2723 = vmatmul.bf16.gmra.mxu0 %v2692
  %v2724 = vpop.f32.mrf.mxu0
  %v2725 = vadd.f32 %v2612, %v2724
  %v2726 = vpop.f32.mrf.mxu0
  %v2727 = vadd.f32 %v2614, %v2726
  %2728 = vmatmul.bf16.gmra.mxu0 %v2695
  %v2729 = vpop.f32.mrf.mxu0
  %v2730 = vadd.f32 %v2617, %v2729
  %v2731 = vpop.f32.mrf.mxu0
  %v2732 = vadd.f32 %v2619, %v2731
  %2733 = vmatmul.bf16.gmra.mxu0 %v2698
  %v2734 = vpop.f32.mrf.mxu0
  %v2735 = vadd.f32 %v2622, %v2734
  %v2736 = vpop.f32.mrf.mxu0
  %v2737 = vadd.f32 %v2624, %v2736
  %2738 = vmatmul.bf16.gmra.mxu0 %v2701
  %v2739 = vpop.f32.mrf.mxu0
  %v2740 = vadd.f32 %v2627, %v2739
  %v2741 = vpop.f32.mrf.mxu0
  %v2742 = vadd.f32 %v2629, %v2741
  %2743 = vmatmul.bf16.gmra.mxu0 %v2704
  %v2744 = vpop.f32.mrf.mxu0
  %v2745 = vadd.f32 %v2632, %v2744
  %v2746 = vpop.f32.mrf.mxu0
  %v2747 = vadd.f32 %v2634, %v2746
  %2748 = vmatmul.bf16.gmra.mxu0 %v2707
  %v2749 = vpop.f32.mrf.mxu0
  %v2750 = vadd.f32 %v2637, %v2749
  %v2751 = vpop.f32.mrf.mxu0
  %v2752 = vadd.f32 %v2639, %v2751
  %2753 = vmatmul.bf16.gmra.mxu0 %v2710
  %v2754 = vpop.f32.mrf.mxu0
  %v2755 = vadd.f32 %v2642, %v2754
  %v2756 = vpop.f32.mrf.mxu0
  %v2757 = vadd.f32 %v2644, %v2756
  %2758 = vmatmul.bf16.gmra.mxu0 %v2713
  %v2759 = vpop.f32.mrf.mxu0
  %v2760 = vadd.f32 %v2647, %v2759
  %v2761 = vpop.f32.mrf.mxu0
  %v2762 = vadd.f32 %v2649, %v2761
  %2763 = vdwg.mxu0
  %2764 = vrot.lane.b32.xlu0 %v2404, 6
  %v2765 = vpop.permute.xlu0 %2764
  %2766 = vrot.lane.b32.xlu0 %v2405, 6
  %v2767 = vpop.permute.xlu0 %2766
  %2768 = vrot.lane.b32.xlu0 %v2406, 6
  %v2769 = vpop.permute.xlu0 %2768
  %2770 = vrot.lane.b32.xlu0 %v2407, 6
  %v2771 = vpop.permute.xlu0 %2770
  %v2773 = vsel %vm1834, 0, %v2765
  %v2776 = vsel %vm1834, 0, %v2767
  %v2779 = vsel %vm1834, 0, %v2769
  %v2782 = vsel %vm1834, 0, %v2771
  %s2784 = scalar_lea.vmem %s7, 2
  %v2785 = vld [vmem:[%s2784] sm:$0x1]
  %v2787 = vpack.i.b16 %v2785, %v2785
  %v2789 = vperm.slane %v2787, 0
  %v2790 = vunpack.c.l.bf16 %v2773
  %v2791 = vunpack.c.h.bf16 %v2773
  %v2792 = vunpack.c.l.bf16 %v2776
  %v2793 = vunpack.c.h.bf16 %v2776
  %v2794 = vunpack.c.l.bf16 %v2779
  %v2795 = vunpack.c.h.bf16 %v2779
  %v2796 = vunpack.c.l.bf16 %v2782
  %v2797 = vunpack.c.h.bf16 %v2782
  %v2798 = vunpack.c.l.bf16 %v2789
  %v2799 = vmul.f32 %v2790, %v2798
  %v2800 = vmul.f32 %v2791, %v2798
  %v2801 = vmul.f32 %v2792, %v2798
  %v2802 = vmul.f32 %v2793, %v2798
  %v2803 = vmul.f32 %v2794, %v2798
  %v2804 = vmul.f32 %v2795, %v2798
  %v2805 = vmul.f32 %v2796, %v2798
  %v2806 = vmul.f32 %v2797, %v2798
  %v2807 = vpack.c.bf16 %v2800, %v2799
  %v2808 = vpack.c.bf16 %v2802, %v2801
  %v2809 = vpack.c.bf16 %v2804, %v2803
  %v2810 = vpack.c.bf16 %v2806, %v2805
  %s2811 = scalar_lea.vmem %s3, 128
  %v2812 = vld [vmem:[%s2811] sm:$0xf]
  %v2813 = vld [vmem:[%s2811 + $0x4] sm:$0xf]
  %v2814 = vld [vmem:[%s2811 + $0x8] sm:$0xf]
  %v2815 = vld [vmem:[%s2811 + $0xc] sm:$0xf]
  %v2816 = vld [vmem:[%s2811 + $0x10] sm:$0xf]
  %v2817 = vld [vmem:[%s2811 + $0x14] sm:$0xf]
  %v2818 = vld [vmem:[%s2811 + $0x18] sm:$0xf]
  %v2819 = vld [vmem:[%s2811 + $0x1c] sm:$0xf]
  %v2820 = vld [vmem:[%s2811 + $0x20] sm:$0xf]
  %v2821 = vld [vmem:[%s2811 + $0x24] sm:$0xf]
  %v2822 = vld [vmem:[%s2811 + $0x28] sm:$0xf]
  %v2823 = vld [vmem:[%s2811 + $0x2c] sm:$0xf]
  %v2824 = vld [vmem:[%s2811 + $0x30] sm:$0xf]
  %v2825 = vld [vmem:[%s2811 + $0x34] sm:$0xf]
  %v2826 = vld [vmem:[%s2811 + $0x38] sm:$0xf]
  %v2827 = vld [vmem:[%s2811 + $0x3c] sm:$0xf]
  %v2844 = vunpack.c.l.b16 %v2812
  %v2845 = vunpack.c.l.b16 %v2813
  %v2846 = vunpack.c.l.b16 %v2814
  %v2847 = vunpack.c.l.b16 %v2815
  %v2848 = vunpack.c.l.b16 %v2816
  %v2849 = vunpack.c.l.b16 %v2817
  %v2850 = vunpack.c.l.b16 %v2818
  %v2851 = vunpack.c.l.b16 %v2819
  %v2852 = vunpack.c.l.b16 %v2820
  %v2853 = vunpack.c.l.b16 %v2821
  %v2854 = vunpack.c.l.b16 %v2822
  %v2855 = vunpack.c.l.b16 %v2823
  %v2856 = vunpack.c.l.b16 %v2824
  %v2857 = vunpack.c.l.b16 %v2825
  %v2858 = vunpack.c.l.b16 %v2826
  %v2859 = vunpack.c.l.b16 %v2827
  %v2860 = vpack.c.b16 %v2845, %v2844
  %v2861 = vpack.c.b16 %v2847, %v2846
  %v2862 = vpack.c.b16 %v2849, %v2848
  %v2863 = vpack.c.b16 %v2851, %v2850
  %v2864 = vpack.c.b16 %v2853, %v2852
  %v2865 = vpack.c.b16 %v2855, %v2854
  %v2866 = vpack.c.b16 %v2857, %v2856
  %v2867 = vpack.c.b16 %v2859, %v2858
  %v2869 = vsel %vm2577, %v2860, 0
  %v2872 = vsel %vm2577, %v2861, 0
  %v2875 = vsel %vm2577, %v2862, 0
  %v2878 = vsel %vm2577, %v2863, 0
  %v2881 = vsel %vm2577, %v2864, 0
  %v2884 = vsel %vm2577, %v2865, 0
  %v2887 = vsel %vm2577, %v2866, 0
  %v2890 = vsel %vm2577, %v2867, 0
  %2892 = vmatpush.bf16.msra.mxu0 0
  %2893 = vmatpush.bf16.msra.mxu0 0
  %2894 = vmatpush.bf16.msra.mxu0 0
  %2895 = vmatpush.bf16.msra.mxu0 0
  %2896 = vmatpush.bf16.msra.mxu0 %v2810
  %2897 = vmatpush.bf16.msra.mxu0 %v2809
  %2898 = vmatpush.bf16.msra.mxu0 %v2808
  %2899 = vmatpush.bf16.msra.mxu0 %v2807
  %2900 = vmatmul.bf16.gmra.mxu0 %v2869
  %v2901 = vpop.f32.mrf.mxu0
  %v2902 = vadd.f32 0.0, %v2901
  %v2903 = vpop.f32.mrf.mxu0
  %v2904 = vadd.f32 0.0, %v2903
  %2905 = vmatmul.bf16.gmra.mxu0 %v2872
  %v2906 = vpop.f32.mrf.mxu0
  %v2907 = vadd.f32 0.0, %v2906
  %v2908 = vpop.f32.mrf.mxu0
  %v2909 = vadd.f32 0.0, %v2908
  %2910 = vmatmul.bf16.gmra.mxu0 %v2875
  %v2911 = vpop.f32.mrf.mxu0
  %v2912 = vadd.f32 0.0, %v2911
  %v2913 = vpop.f32.mrf.mxu0
  %v2914 = vadd.f32 0.0, %v2913
  %2915 = vmatmul.bf16.gmra.mxu0 %v2878
  %v2916 = vpop.f32.mrf.mxu0
  %v2917 = vadd.f32 0.0, %v2916
  %v2918 = vpop.f32.mrf.mxu0
  %v2919 = vadd.f32 0.0, %v2918
  %2920 = vmatmul.bf16.gmra.mxu0 %v2881
  %v2921 = vpop.f32.mrf.mxu0
  %v2922 = vadd.f32 0.0, %v2921
  %v2923 = vpop.f32.mrf.mxu0
  %v2924 = vadd.f32 0.0, %v2923
  %2925 = vmatmul.bf16.gmra.mxu0 %v2884
  %v2926 = vpop.f32.mrf.mxu0
  %v2927 = vadd.f32 0.0, %v2926
  %v2928 = vpop.f32.mrf.mxu0
  %v2929 = vadd.f32 0.0, %v2928
  %2930 = vmatmul.bf16.gmra.mxu0 %v2887
  %v2931 = vpop.f32.mrf.mxu0
  %v2932 = vadd.f32 0.0, %v2931
  %v2933 = vpop.f32.mrf.mxu0
  %v2934 = vadd.f32 0.0, %v2933
  %2935 = vmatmul.bf16.gmra.mxu0 %v2890
  %v2936 = vpop.f32.mrf.mxu0
  %v2937 = vadd.f32 0.0, %v2936
  %v2938 = vpop.f32.mrf.mxu0
  %v2939 = vadd.f32 0.0, %v2938
  %2940 = vdwg.mxu0
  %v2941 = vadd.f32 %v2725, %v2902
  %v2942 = vadd.f32 %v2727, %v2904
  %v2943 = vadd.f32 %v2730, %v2907
  %v2944 = vadd.f32 %v2732, %v2909
  %v2945 = vadd.f32 %v2735, %v2912
  %v2946 = vadd.f32 %v2737, %v2914
  %v2947 = vadd.f32 %v2740, %v2917
  %v2948 = vadd.f32 %v2742, %v2919
  %v2949 = vadd.f32 %v2745, %v2922
  %v2950 = vadd.f32 %v2747, %v2924
  %v2951 = vadd.f32 %v2750, %v2927
  %v2952 = vadd.f32 %v2752, %v2929
  %v2953 = vadd.f32 %v2755, %v2932
  %v2954 = vadd.f32 %v2757, %v2934
  %v2955 = vadd.f32 %v2760, %v2937
  %v2956 = vadd.f32 %v2762, %v2939
  %2957 = vrot.lane.b32.xlu0 %v2404, 1
  %v2958 = vpop.permute.xlu0 %2957
  %2959 = vrot.lane.b32.xlu0 %v2405, 1
  %v2960 = vpop.permute.xlu0 %2959
  %2961 = vrot.lane.b32.xlu0 %v2406, 1
  %v2962 = vpop.permute.xlu0 %2961
  %2963 = vrot.lane.b32.xlu0 %v2407, 1
  %v2964 = vpop.permute.xlu0 %2963
  %v2966 = vsel %vm1937, 0, %v2958
  %v2969 = vsel %vm1937, 0, %v2960
  %v2972 = vsel %vm1937, 0, %v2962
  %v2975 = vsel %vm1937, 0, %v2964
  %s2977 = scalar_lea.vmem %s7, 3
  %v2978 = vld [vmem:[%s2977] sm:$0x1]
  %v2980 = vpack.i.b16 %v2978, %v2978
  %v2982 = vperm.slane %v2980, 0
  %v2983 = vunpack.c.l.bf16 %v2966
  %v2984 = vunpack.c.h.bf16 %v2966
  %v2985 = vunpack.c.l.bf16 %v2969
  %v2986 = vunpack.c.h.bf16 %v2969
  %v2987 = vunpack.c.l.bf16 %v2972
  %v2988 = vunpack.c.h.bf16 %v2972
  %v2989 = vunpack.c.l.bf16 %v2975
  %v2990 = vunpack.c.h.bf16 %v2975
  %v2991 = vunpack.c.l.bf16 %v2982
  %v2992 = vmul.f32 %v2983, %v2991
  %v2993 = vmul.f32 %v2984, %v2991
  %v2994 = vmul.f32 %v2985, %v2991
  %v2995 = vmul.f32 %v2986, %v2991
  %v2996 = vmul.f32 %v2987, %v2991
  %v2997 = vmul.f32 %v2988, %v2991
  %v2998 = vmul.f32 %v2989, %v2991
  %v2999 = vmul.f32 %v2990, %v2991
  %v3000 = vpack.c.bf16 %v2993, %v2992
  %v3001 = vpack.c.bf16 %v2995, %v2994
  %v3002 = vpack.c.bf16 %v2997, %v2996
  %v3003 = vpack.c.bf16 %v2999, %v2998
  %s3004 = scalar_lea.vmem %s3, 192
  %v3005 = vld [vmem:[%s3004] sm:$0xf]
  %v3006 = vld [vmem:[%s3004 + $0x4] sm:$0xf]
  %v3007 = vld [vmem:[%s3004 + $0x8] sm:$0xf]
  %v3008 = vld [vmem:[%s3004 + $0xc] sm:$0xf]
  %v3009 = vld [vmem:[%s3004 + $0x10] sm:$0xf]
  %v3010 = vld [vmem:[%s3004 + $0x14] sm:$0xf]
  %v3011 = vld [vmem:[%s3004 + $0x18] sm:$0xf]
  %v3012 = vld [vmem:[%s3004 + $0x1c] sm:$0xf]
  %v3013 = vld [vmem:[%s3004 + $0x20] sm:$0xf]
  %v3014 = vld [vmem:[%s3004 + $0x24] sm:$0xf]
  %v3015 = vld [vmem:[%s3004 + $0x28] sm:$0xf]
  %v3016 = vld [vmem:[%s3004 + $0x2c] sm:$0xf]
  %v3017 = vld [vmem:[%s3004 + $0x30] sm:$0xf]
  %v3018 = vld [vmem:[%s3004 + $0x34] sm:$0xf]
  %v3019 = vld [vmem:[%s3004 + $0x38] sm:$0xf]
  %v3020 = vld [vmem:[%s3004 + $0x3c] sm:$0xf]
  %v3037 = vunpack.c.l.b16 %v3005
  %v3038 = vunpack.c.l.b16 %v3006
  %v3039 = vunpack.c.l.b16 %v3007
  %v3040 = vunpack.c.l.b16 %v3008
  %v3041 = vunpack.c.l.b16 %v3009
  %v3042 = vunpack.c.l.b16 %v3010
  %v3043 = vunpack.c.l.b16 %v3011
  %v3044 = vunpack.c.l.b16 %v3012
  %v3045 = vunpack.c.l.b16 %v3013
  %v3046 = vunpack.c.l.b16 %v3014
  %v3047 = vunpack.c.l.b16 %v3015
  %v3048 = vunpack.c.l.b16 %v3016
  %v3049 = vunpack.c.l.b16 %v3017
  %v3050 = vunpack.c.l.b16 %v3018
  %v3051 = vunpack.c.l.b16 %v3019
  %v3052 = vunpack.c.l.b16 %v3020
  %v3053 = vpack.c.b16 %v3038, %v3037
  %v3054 = vpack.c.b16 %v3040, %v3039
  %v3055 = vpack.c.b16 %v3042, %v3041
  %v3056 = vpack.c.b16 %v3044, %v3043
  %v3057 = vpack.c.b16 %v3046, %v3045
  %v3058 = vpack.c.b16 %v3048, %v3047
  %v3059 = vpack.c.b16 %v3050, %v3049
  %v3060 = vpack.c.b16 %v3052, %v3051
  %v3062 = vsel %vm2577, %v3053, 0
  %v3065 = vsel %vm2577, %v3054, 0
  %v3068 = vsel %vm2577, %v3055, 0
  %v3071 = vsel %vm2577, %v3056, 0
  %v3074 = vsel %vm2577, %v3057, 0
  %v3077 = vsel %vm2577, %v3058, 0
  %v3080 = vsel %vm2577, %v3059, 0
  %v3083 = vsel %vm2577, %v3060, 0
  %3085 = vmatpush.bf16.msra.mxu0 0
  %3086 = vmatpush.bf16.msra.mxu0 0
  %3087 = vmatpush.bf16.msra.mxu0 0
  %3088 = vmatpush.bf16.msra.mxu0 0
  %3089 = vmatpush.bf16.msra.mxu0 %v3003
  %3090 = vmatpush.bf16.msra.mxu0 %v3002
  %3091 = vmatpush.bf16.msra.mxu0 %v3001
  %3092 = vmatpush.bf16.msra.mxu0 %v3000
  %3093 = vmatmul.bf16.gmra.mxu0 %v3062
  %v3094 = vpop.f32.mrf.mxu0
  %v3095 = vadd.f32 0.0, %v3094
  %v3096 = vpop.f32.mrf.mxu0
  %v3097 = vadd.f32 0.0, %v3096
  %3098 = vmatmul.bf16.gmra.mxu0 %v3065
  %v3099 = vpop.f32.mrf.mxu0
  %v3100 = vadd.f32 0.0, %v3099
  %v3101 = vpop.f32.mrf.mxu0
  %v3102 = vadd.f32 0.0, %v3101
  %3103 = vmatmul.bf16.gmra.mxu0 %v3068
  %v3104 = vpop.f32.mrf.mxu0
  %v3105 = vadd.f32 0.0, %v3104
  %v3106 = vpop.f32.mrf.mxu0
  %v3107 = vadd.f32 0.0, %v3106
  %3108 = vmatmul.bf16.gmra.mxu0 %v3071
  %v3109 = vpop.f32.mrf.mxu0
  %v3110 = vadd.f32 0.0, %v3109
  %v3111 = vpop.f32.mrf.mxu0
  %v3112 = vadd.f32 0.0, %v3111
  %3113 = vmatmul.bf16.gmra.mxu0 %v3074
  %v3114 = vpop.f32.mrf.mxu0
  %v3115 = vadd.f32 0.0, %v3114
  %v3116 = vpop.f32.mrf.mxu0
  %v3117 = vadd.f32 0.0, %v3116
  %3118 = vmatmul.bf16.gmra.mxu0 %v3077
  %v3119 = vpop.f32.mrf.mxu0
  %v3120 = vadd.f32 0.0, %v3119
  %v3121 = vpop.f32.mrf.mxu0
  %v3122 = vadd.f32 0.0, %v3121
  %3123 = vmatmul.bf16.gmra.mxu0 %v3080
  %v3124 = vpop.f32.mrf.mxu0
  %v3125 = vadd.f32 0.0, %v3124
  %v3126 = vpop.f32.mrf.mxu0
  %v3127 = vadd.f32 0.0, %v3126
  %3128 = vmatmul.bf16.gmra.mxu0 %v3083
  %v3129 = vpop.f32.mrf.mxu0
  %v3130 = vadd.f32 0.0, %v3129
  %v3131 = vpop.f32.mrf.mxu0
  %v3132 = vadd.f32 0.0, %v3131
  %3133 = vdwg.mxu0
  %v3134 = vadd.f32 %v2941, %v3095
  %v3135 = vadd.f32 %v2942, %v3097
  %v3136 = vadd.f32 %v2943, %v3100
  %v3137 = vadd.f32 %v2944, %v3102
  %v3138 = vadd.f32 %v2945, %v3105
  %v3139 = vadd.f32 %v2946, %v3107
  %v3140 = vadd.f32 %v2947, %v3110
  %v3141 = vadd.f32 %v2948, %v3112
  %v3142 = vadd.f32 %v2949, %v3115
  %v3143 = vadd.f32 %v2950, %v3117
  %v3144 = vadd.f32 %v2951, %v3120
  %v3145 = vadd.f32 %v2952, %v3122
  %v3146 = vadd.f32 %v2953, %v3125
  %v3147 = vadd.f32 %v2954, %v3127
  %v3148 = vadd.f32 %v2955, %v3130
  %v3149 = vadd.f32 %v2956, %v3132
  %s3150 = scalar_lea.vmem %s7, 4
  %v3151 = vld [vmem:[%s3150] sm:$0x1]
  %v3153 = vpack.i.b16 %v3151, %v3151
  %v3155 = vperm.slane %v3153, 0
  %v3156 = vunpack.c.l.bf16 %v2380
  %v3157 = vunpack.c.l.bf16 %v2381
  %v3158 = vunpack.c.l.bf16 %v2382
  %v3159 = vunpack.c.l.bf16 %v2383
  %v3160 = vunpack.c.l.bf16 %v2384
  %v3161 = vunpack.c.l.bf16 %v2385
  %v3162 = vunpack.c.l.bf16 %v2386
  %v3163 = vunpack.c.l.bf16 %v2387
  %v3164 = vunpack.c.l.bf16 %v3155
  %v3165 = vmul.f32 %v3156, %v3164
  %v3166 = vmul.f32 %v3157, %v3164
  %v3167 = vmul.f32 %v3158, %v3164
  %v3168 = vmul.f32 %v3159, %v3164
  %v3169 = vmul.f32 %v3160, %v3164
  %v3170 = vmul.f32 %v3161, %v3164
  %v3171 = vmul.f32 %v3162, %v3164
  %v3172 = vmul.f32 %v3163, %v3164
  %v3173 = vpack.c.bf16 %v3166, %v3165
  %v3174 = vpack.c.bf16 %v3168, %v3167
  %v3175 = vpack.c.bf16 %v3170, %v3169
  %v3176 = vpack.c.bf16 %v3172, %v3171
  %s3177 = scalar_lea.vmem %s3, 256
  %v3178 = vld [vmem:[%s3177] sm:$0xf]
  %v3179 = vld [vmem:[%s3177 + $0x4] sm:$0xf]
  %v3180 = vld [vmem:[%s3177 + $0x8] sm:$0xf]
  %v3181 = vld [vmem:[%s3177 + $0xc] sm:$0xf]
  %v3182 = vld [vmem:[%s3177 + $0x10] sm:$0xf]
  %v3183 = vld [vmem:[%s3177 + $0x14] sm:$0xf]
  %v3184 = vld [vmem:[%s3177 + $0x18] sm:$0xf]
  %v3185 = vld [vmem:[%s3177 + $0x1c] sm:$0xf]
  %v3186 = vld [vmem:[%s3177 + $0x20] sm:$0xf]
  %v3187 = vld [vmem:[%s3177 + $0x24] sm:$0xf]
  %v3188 = vld [vmem:[%s3177 + $0x28] sm:$0xf]
  %v3189 = vld [vmem:[%s3177 + $0x2c] sm:$0xf]
  %v3190 = vld [vmem:[%s3177 + $0x30] sm:$0xf]
  %v3191 = vld [vmem:[%s3177 + $0x34] sm:$0xf]
  %v3192 = vld [vmem:[%s3177 + $0x38] sm:$0xf]
  %v3193 = vld [vmem:[%s3177 + $0x3c] sm:$0xf]
  %v3210 = vunpack.c.l.b16 %v3178
  %v3211 = vunpack.c.l.b16 %v3179
  %v3212 = vunpack.c.l.b16 %v3180
  %v3213 = vunpack.c.l.b16 %v3181
  %v3214 = vunpack.c.l.b16 %v3182
  %v3215 = vunpack.c.l.b16 %v3183
  %v3216 = vunpack.c.l.b16 %v3184
  %v3217 = vunpack.c.l.b16 %v3185
  %v3218 = vunpack.c.l.b16 %v3186
  %v3219 = vunpack.c.l.b16 %v3187
  %v3220 = vunpack.c.l.b16 %v3188
  %v3221 = vunpack.c.l.b16 %v3189
  %v3222 = vunpack.c.l.b16 %v3190
  %v3223 = vunpack.c.l.b16 %v3191
  %v3224 = vunpack.c.l.b16 %v3192
  %v3225 = vunpack.c.l.b16 %v3193
  %v3226 = vpack.c.b16 %v3211, %v3210
  %v3227 = vpack.c.b16 %v3213, %v3212
  %v3228 = vpack.c.b16 %v3215, %v3214
  %v3229 = vpack.c.b16 %v3217, %v3216
  %v3230 = vpack.c.b16 %v3219, %v3218
  %v3231 = vpack.c.b16 %v3221, %v3220
  %v3232 = vpack.c.b16 %v3223, %v3222
  %v3233 = vpack.c.b16 %v3225, %v3224
  %v3235 = vsel %vm2577, %v3226, 0
  %v3238 = vsel %vm2577, %v3227, 0
  %v3241 = vsel %vm2577, %v3228, 0
  %v3244 = vsel %vm2577, %v3229, 0
  %v3247 = vsel %vm2577, %v3230, 0
  %v3250 = vsel %vm2577, %v3231, 0
  %v3253 = vsel %vm2577, %v3232, 0
  %v3256 = vsel %vm2577, %v3233, 0
  %3258 = vmatpush.bf16.msra.mxu0 0
  %3259 = vmatpush.bf16.msra.mxu0 0
  %3260 = vmatpush.bf16.msra.mxu0 0
  %3261 = vmatpush.bf16.msra.mxu0 0
  %3262 = vmatpush.bf16.msra.mxu0 %v3176
  %3263 = vmatpush.bf16.msra.mxu0 %v3175
  %3264 = vmatpush.bf16.msra.mxu0 %v3174
  %3265 = vmatpush.bf16.msra.mxu0 %v3173
  %3266 = vmatmul.bf16.gmra.mxu0 %v3235
  %v3267 = vpop.f32.mrf.mxu0
  %v3268 = vadd.f32 0.0, %v3267
  %v3269 = vpop.f32.mrf.mxu0
  %v3270 = vadd.f32 0.0, %v3269
  %3271 = vmatmul.bf16.gmra.mxu0 %v3238
  %v3272 = vpop.f32.mrf.mxu0
  %v3273 = vadd.f32 0.0, %v3272
  %v3274 = vpop.f32.mrf.mxu0
  %v3275 = vadd.f32 0.0, %v3274
  %3276 = vmatmul.bf16.gmra.mxu0 %v3241
  %v3277 = vpop.f32.mrf.mxu0
  %v3278 = vadd.f32 0.0, %v3277
  %v3279 = vpop.f32.mrf.mxu0
  %v3280 = vadd.f32 0.0, %v3279
  %3281 = vmatmul.bf16.gmra.mxu0 %v3244
  %v3282 = vpop.f32.mrf.mxu0
  %v3283 = vadd.f32 0.0, %v3282
  %v3284 = vpop.f32.mrf.mxu0
  %v3285 = vadd.f32 0.0, %v3284
  %3286 = vmatmul.bf16.gmra.mxu0 %v3247
  %v3287 = vpop.f32.mrf.mxu0
  %v3288 = vadd.f32 0.0, %v3287
  %v3289 = vpop.f32.mrf.mxu0
  %v3290 = vadd.f32 0.0, %v3289
  %3291 = vmatmul.bf16.gmra.mxu0 %v3250
  %v3292 = vpop.f32.mrf.mxu0
  %v3293 = vadd.f32 0.0, %v3292
  %v3294 = vpop.f32.mrf.mxu0
  %v3295 = vadd.f32 0.0, %v3294
  %3296 = vmatmul.bf16.gmra.mxu0 %v3253
  %v3297 = vpop.f32.mrf.mxu0
  %v3298 = vadd.f32 0.0, %v3297
  %v3299 = vpop.f32.mrf.mxu0
  %v3300 = vadd.f32 0.0, %v3299
  %3301 = vmatmul.bf16.gmra.mxu0 %v3256
  %v3302 = vpop.f32.mrf.mxu0
  %v3303 = vadd.f32 0.0, %v3302
  %v3304 = vpop.f32.mrf.mxu0
  %v3305 = vadd.f32 0.0, %v3304
  %3306 = vdwg.mxu0
  %v3307 = vadd.f32 %v3134, %v3268
  %v3308 = vadd.f32 %v3135, %v3270
  %v3309 = vadd.f32 %v3136, %v3273
  %v3310 = vadd.f32 %v3137, %v3275
  %v3311 = vadd.f32 %v3138, %v3278
  %v3312 = vadd.f32 %v3139, %v3280
  %v3313 = vadd.f32 %v3140, %v3283
  %v3314 = vadd.f32 %v3141, %v3285
  %v3315 = vadd.f32 %v3142, %v3288
  %v3316 = vadd.f32 %v3143, %v3290
  %v3317 = vadd.f32 %v3144, %v3293
  %v3318 = vadd.f32 %v3145, %v3295
  %v3319 = vadd.f32 %v3146, %v3298
  %v3320 = vadd.f32 %v3147, %v3300
  %v3321 = vadd.f32 %v3148, %v3303
  %v3322 = vadd.f32 %v3149, %v3305
  %3323 = vrot.lane.b32.xlu0 %v2404, 127
  %v3324 = vpop.permute.xlu0 %3323
  %3325 = vrot.lane.b32.xlu0 %v2405, 127
  %v3326 = vpop.permute.xlu0 %3325
  %3327 = vrot.lane.b32.xlu0 %v2406, 127
  %v3328 = vpop.permute.xlu0 %3327
  %3329 = vrot.lane.b32.xlu0 %v2407, 127
  %v3330 = vpop.permute.xlu0 %3329
  %vm3331 = vcmask 793600
  %v3333 = vsel %vm3331, %v3324, 0
  %v3336 = vsel %vm3331, %v3326, 0
  %v3339 = vsel %vm3331, %v3328, 0
  %v3342 = vsel %vm3331, %v3330, 0
  %s3344 = scalar_lea.vmem %s7, 5
  %v3345 = vld [vmem:[%s3344] sm:$0x1]
  %v3347 = vpack.i.b16 %v3345, %v3345
  %v3349 = vperm.slane %v3347, 0
  %v3350 = vunpack.c.l.bf16 %v3333
  %v3351 = vunpack.c.h.bf16 %v3333
  %v3352 = vunpack.c.l.bf16 %v3336
  %v3353 = vunpack.c.h.bf16 %v3336
  %v3354 = vunpack.c.l.bf16 %v3339
  %v3355 = vunpack.c.h.bf16 %v3339
  %v3356 = vunpack.c.l.bf16 %v3342
  %v3357 = vunpack.c.h.bf16 %v3342
  %v3358 = vunpack.c.l.bf16 %v3349
  %v3359 = vmul.f32 %v3350, %v3358
  %v3360 = vmul.f32 %v3351, %v3358
  %v3361 = vmul.f32 %v3352, %v3358
  %v3362 = vmul.f32 %v3353, %v3358
  %v3363 = vmul.f32 %v3354, %v3358
  %v3364 = vmul.f32 %v3355, %v3358
  %v3365 = vmul.f32 %v3356, %v3358
  %v3366 = vmul.f32 %v3357, %v3358
  %v3367 = vpack.c.bf16 %v3360, %v3359
  %v3368 = vpack.c.bf16 %v3362, %v3361
  %v3369 = vpack.c.bf16 %v3364, %v3363
  %v3370 = vpack.c.bf16 %v3366, %v3365
  %s3371 = scalar_lea.vmem %s3, 320
  %v3372 = vld [vmem:[%s3371] sm:$0xf]
  %v3373 = vld [vmem:[%s3371 + $0x4] sm:$0xf]
  %v3374 = vld [vmem:[%s3371 + $0x8] sm:$0xf]
  %v3375 = vld [vmem:[%s3371 + $0xc] sm:$0xf]
  %v3376 = vld [vmem:[%s3371 + $0x10] sm:$0xf]
  %v3377 = vld [vmem:[%s3371 + $0x14] sm:$0xf]
  %v3378 = vld [vmem:[%s3371 + $0x18] sm:$0xf]
  %v3379 = vld [vmem:[%s3371 + $0x1c] sm:$0xf]
  %v3380 = vld [vmem:[%s3371 + $0x20] sm:$0xf]
  %v3381 = vld [vmem:[%s3371 + $0x24] sm:$0xf]
  %v3382 = vld [vmem:[%s3371 + $0x28] sm:$0xf]
  %v3383 = vld [vmem:[%s3371 + $0x2c] sm:$0xf]
  %v3384 = vld [vmem:[%s3371 + $0x30] sm:$0xf]
  %v3385 = vld [vmem:[%s3371 + $0x34] sm:$0xf]
  %v3386 = vld [vmem:[%s3371 + $0x38] sm:$0xf]
  %v3387 = vld [vmem:[%s3371 + $0x3c] sm:$0xf]
  %v3404 = vunpack.c.l.b16 %v3372
  %v3405 = vunpack.c.l.b16 %v3373
  %v3406 = vunpack.c.l.b16 %v3374
  %v3407 = vunpack.c.l.b16 %v3375
  %v3408 = vunpack.c.l.b16 %v3376
  %v3409 = vunpack.c.l.b16 %v3377
  %v3410 = vunpack.c.l.b16 %v3378
  %v3411 = vunpack.c.l.b16 %v3379
  %v3412 = vunpack.c.l.b16 %v3380
  %v3413 = vunpack.c.l.b16 %v3381
  %v3414 = vunpack.c.l.b16 %v3382
  %v3415 = vunpack.c.l.b16 %v3383
  %v3416 = vunpack.c.l.b16 %v3384
  %v3417 = vunpack.c.l.b16 %v3385
  %v3418 = vunpack.c.l.b16 %v3386
  %v3419 = vunpack.c.l.b16 %v3387
  %v3420 = vpack.c.b16 %v3405, %v3404
  %v3421 = vpack.c.b16 %v3407, %v3406
  %v3422 = vpack.c.b16 %v3409, %v3408
  %v3423 = vpack.c.b16 %v3411, %v3410
  %v3424 = vpack.c.b16 %v3413, %v3412
  %v3425 = vpack.c.b16 %v3415, %v3414
  %v3426 = vpack.c.b16 %v3417, %v3416
  %v3427 = vpack.c.b16 %v3419, %v3418
  %v3429 = vsel %vm2577, %v3420, 0
  %v3432 = vsel %vm2577, %v3421, 0
  %v3435 = vsel %vm2577, %v3422, 0
  %v3438 = vsel %vm2577, %v3423, 0
  %v3441 = vsel %vm2577, %v3424, 0
  %v3444 = vsel %vm2577, %v3425, 0
  %v3447 = vsel %vm2577, %v3426, 0
  %v3450 = vsel %vm2577, %v3427, 0
  %3452 = vmatpush.bf16.msra.mxu0 0
  %3453 = vmatpush.bf16.msra.mxu0 0
  %3454 = vmatpush.bf16.msra.mxu0 0
  %3455 = vmatpush.bf16.msra.mxu0 0
  %3456 = vmatpush.bf16.msra.mxu0 %v3370
  %3457 = vmatpush.bf16.msra.mxu0 %v3369
  %3458 = vmatpush.bf16.msra.mxu0 %v3368
  %3459 = vmatpush.bf16.msra.mxu0 %v3367
  %3460 = vmatmul.bf16.gmra.mxu0 %v3429
  %v3461 = vpop.f32.mrf.mxu0
  %v3462 = vadd.f32 0.0, %v3461
  %v3463 = vpop.f32.mrf.mxu0
  %v3464 = vadd.f32 0.0, %v3463
  %3465 = vmatmul.bf16.gmra.mxu0 %v3432
  %v3466 = vpop.f32.mrf.mxu0
  %v3467 = vadd.f32 0.0, %v3466
  %v3468 = vpop.f32.mrf.mxu0
  %v3469 = vadd.f32 0.0, %v3468
  %3470 = vmatmul.bf16.gmra.mxu0 %v3435
  %v3471 = vpop.f32.mrf.mxu0
  %v3472 = vadd.f32 0.0, %v3471
  %v3473 = vpop.f32.mrf.mxu0
  %v3474 = vadd.f32 0.0, %v3473
  %3475 = vmatmul.bf16.gmra.mxu0 %v3438
  %v3476 = vpop.f32.mrf.mxu0
  %v3477 = vadd.f32 0.0, %v3476
  %v3478 = vpop.f32.mrf.mxu0
  %v3479 = vadd.f32 0.0, %v3478
  %3480 = vmatmul.bf16.gmra.mxu0 %v3441
  %v3481 = vpop.f32.mrf.mxu0
  %v3482 = vadd.f32 0.0, %v3481
  %v3483 = vpop.f32.mrf.mxu0
  %v3484 = vadd.f32 0.0, %v3483
  %3485 = vmatmul.bf16.gmra.mxu0 %v3444
  %v3486 = vpop.f32.mrf.mxu0
  %v3487 = vadd.f32 0.0, %v3486
  %v3488 = vpop.f32.mrf.mxu0
  %v3489 = vadd.f32 0.0, %v3488
  %3490 = vmatmul.bf16.gmra.mxu0 %v3447
  %v3491 = vpop.f32.mrf.mxu0
  %v3492 = vadd.f32 0.0, %v3491
  %v3493 = vpop.f32.mrf.mxu0
  %v3494 = vadd.f32 0.0, %v3493
  %3495 = vmatmul.bf16.gmra.mxu0 %v3450
  %v3496 = vpop.f32.mrf.mxu0
  %v3497 = vadd.f32 0.0, %v3496
  %v3498 = vpop.f32.mrf.mxu0
  %v3499 = vadd.f32 0.0, %v3498
  %3500 = vdwg.mxu0
  %v3501 = vadd.f32 %v3307, %v3462
  %v3502 = vadd.f32 %v3308, %v3464
  %v3503 = vadd.f32 %v3309, %v3467
  %v3504 = vadd.f32 %v3310, %v3469
  %v3505 = vadd.f32 %v3311, %v3472
  %v3506 = vadd.f32 %v3312, %v3474
  %v3507 = vadd.f32 %v3313, %v3477
  %v3508 = vadd.f32 %v3314, %v3479
  %v3509 = vadd.f32 %v3315, %v3482
  %v3510 = vadd.f32 %v3316, %v3484
  %v3511 = vadd.f32 %v3317, %v3487
  %v3512 = vadd.f32 %v3318, %v3489
  %v3513 = vadd.f32 %v3319, %v3492
  %v3514 = vadd.f32 %v3320, %v3494
  %v3515 = vadd.f32 %v3321, %v3497
  %v3516 = vadd.f32 %v3322, %v3499
  %3517 = vrot.lane.b32.xlu0 %v2404, 122
  %v3518 = vpop.permute.xlu0 %3517
  %3519 = vrot.lane.b32.xlu0 %v2405, 122
  %v3520 = vpop.permute.xlu0 %3519
  %3521 = vrot.lane.b32.xlu0 %v2406, 122
  %v3522 = vpop.permute.xlu0 %3521
  %3523 = vrot.lane.b32.xlu0 %v2407, 122
  %v3524 = vpop.permute.xlu0 %3523
  %vm3525 = vcmask 752640
  %v3527 = vsel %vm3525, %v3518, 0
  %v3530 = vsel %vm3525, %v3520, 0
  %v3533 = vsel %vm3525, %v3522, 0
  %v3536 = vsel %vm3525, %v3524, 0
  %s3538 = scalar_lea.vmem %s7, 6
  %v3539 = vld [vmem:[%s3538] sm:$0x1]
  %v3541 = vpack.i.b16 %v3539, %v3539
  %v3543 = vperm.slane %v3541, 0
  %v3544 = vunpack.c.l.bf16 %v3527
  %v3545 = vunpack.c.h.bf16 %v3527
  %v3546 = vunpack.c.l.bf16 %v3530
  %v3547 = vunpack.c.h.bf16 %v3530
  %v3548 = vunpack.c.l.bf16 %v3533
  %v3549 = vunpack.c.h.bf16 %v3533
  %v3550 = vunpack.c.l.bf16 %v3536
  %v3551 = vunpack.c.h.bf16 %v3536
  %v3552 = vunpack.c.l.bf16 %v3543
  %v3553 = vmul.f32 %v3544, %v3552
  %v3554 = vmul.f32 %v3545, %v3552
  %v3555 = vmul.f32 %v3546, %v3552
  %v3556 = vmul.f32 %v3547, %v3552
  %v3557 = vmul.f32 %v3548, %v3552
  %v3558 = vmul.f32 %v3549, %v3552
  %v3559 = vmul.f32 %v3550, %v3552
  %v3560 = vmul.f32 %v3551, %v3552
  %v3561 = vpack.c.bf16 %v3554, %v3553
  %v3562 = vpack.c.bf16 %v3556, %v3555
  %v3563 = vpack.c.bf16 %v3558, %v3557
  %v3564 = vpack.c.bf16 %v3560, %v3559
  %s3565 = scalar_lea.vmem %s3, 384
  %v3566 = vld [vmem:[%s3565] sm:$0xf]
  %v3567 = vld [vmem:[%s3565 + $0x4] sm:$0xf]
  %v3568 = vld [vmem:[%s3565 + $0x8] sm:$0xf]
  %v3569 = vld [vmem:[%s3565 + $0xc] sm:$0xf]
  %v3570 = vld [vmem:[%s3565 + $0x10] sm:$0xf]
  %v3571 = vld [vmem:[%s3565 + $0x14] sm:$0xf]
  %v3572 = vld [vmem:[%s3565 + $0x18] sm:$0xf]
  %v3573 = vld [vmem:[%s3565 + $0x1c] sm:$0xf]
  %v3574 = vld [vmem:[%s3565 + $0x20] sm:$0xf]
  %v3575 = vld [vmem:[%s3565 + $0x24] sm:$0xf]
  %v3576 = vld [vmem:[%s3565 + $0x28] sm:$0xf]
  %v3577 = vld [vmem:[%s3565 + $0x2c] sm:$0xf]
  %v3578 = vld [vmem:[%s3565 + $0x30] sm:$0xf]
  %v3579 = vld [vmem:[%s3565 + $0x34] sm:$0xf]
  %v3580 = vld [vmem:[%s3565 + $0x38] sm:$0xf]
  %v3581 = vld [vmem:[%s3565 + $0x3c] sm:$0xf]
  %v3598 = vunpack.c.l.b16 %v3566
  %v3599 = vunpack.c.l.b16 %v3567
  %v3600 = vunpack.c.l.b16 %v3568
  %v3601 = vunpack.c.l.b16 %v3569
  %v3602 = vunpack.c.l.b16 %v3570
  %v3603 = vunpack.c.l.b16 %v3571
  %v3604 = vunpack.c.l.b16 %v3572
  %v3605 = vunpack.c.l.b16 %v3573
  %v3606 = vunpack.c.l.b16 %v3574
  %v3607 = vunpack.c.l.b16 %v3575
  %v3608 = vunpack.c.l.b16 %v3576
  %v3609 = vunpack.c.l.b16 %v3577
  %v3610 = vunpack.c.l.b16 %v3578
  %v3611 = vunpack.c.l.b16 %v3579
  %v3612 = vunpack.c.l.b16 %v3580
  %v3613 = vunpack.c.l.b16 %v3581
  %v3614 = vpack.c.b16 %v3599, %v3598
  %v3615 = vpack.c.b16 %v3601, %v3600
  %v3616 = vpack.c.b16 %v3603, %v3602
  %v3617 = vpack.c.b16 %v3605, %v3604
  %v3618 = vpack.c.b16 %v3607, %v3606
  %v3619 = vpack.c.b16 %v3609, %v3608
  %v3620 = vpack.c.b16 %v3611, %v3610
  %v3621 = vpack.c.b16 %v3613, %v3612
  %v3623 = vsel %vm2577, %v3614, 0
  %v3626 = vsel %vm2577, %v3615, 0
  %v3629 = vsel %vm2577, %v3616, 0
  %v3632 = vsel %vm2577, %v3617, 0
  %v3635 = vsel %vm2577, %v3618, 0
  %v3638 = vsel %vm2577, %v3619, 0
  %v3641 = vsel %vm2577, %v3620, 0
  %v3644 = vsel %vm2577, %v3621, 0
  %3646 = vmatpush.bf16.msra.mxu0 0
  %3647 = vmatpush.bf16.msra.mxu0 0
  %3648 = vmatpush.bf16.msra.mxu0 0
  %3649 = vmatpush.bf16.msra.mxu0 0
  %3650 = vmatpush.bf16.msra.mxu0 %v3564
  %3651 = vmatpush.bf16.msra.mxu0 %v3563
  %3652 = vmatpush.bf16.msra.mxu0 %v3562
  %3653 = vmatpush.bf16.msra.mxu0 %v3561
  %3654 = vmatmul.bf16.gmra.mxu0 %v3623
  %v3655 = vpop.f32.mrf.mxu0
  %v3656 = vadd.f32 0.0, %v3655
  %v3657 = vpop.f32.mrf.mxu0
  %v3658 = vadd.f32 0.0, %v3657
  %3659 = vmatmul.bf16.gmra.mxu0 %v3626
  %v3660 = vpop.f32.mrf.mxu0
  %v3661 = vadd.f32 0.0, %v3660
  %v3662 = vpop.f32.mrf.mxu0
  %v3663 = vadd.f32 0.0, %v3662
  %3664 = vmatmul.bf16.gmra.mxu0 %v3629
  %v3665 = vpop.f32.mrf.mxu0
  %v3666 = vadd.f32 0.0, %v3665
  %v3667 = vpop.f32.mrf.mxu0
  %v3668 = vadd.f32 0.0, %v3667
  %3669 = vmatmul.bf16.gmra.mxu0 %v3632
  %v3670 = vpop.f32.mrf.mxu0
  %v3671 = vadd.f32 0.0, %v3670
  %v3672 = vpop.f32.mrf.mxu0
  %v3673 = vadd.f32 0.0, %v3672
  %3674 = vmatmul.bf16.gmra.mxu0 %v3635
  %v3675 = vpop.f32.mrf.mxu0
  %v3676 = vadd.f32 0.0, %v3675
  %v3677 = vpop.f32.mrf.mxu0
  %v3678 = vadd.f32 0.0, %v3677
  %3679 = vmatmul.bf16.gmra.mxu0 %v3638
  %v3680 = vpop.f32.mrf.mxu0
  %v3681 = vadd.f32 0.0, %v3680
  %v3682 = vpop.f32.mrf.mxu0
  %v3683 = vadd.f32 0.0, %v3682
  %3684 = vmatmul.bf16.gmra.mxu0 %v3641
  %v3685 = vpop.f32.mrf.mxu0
  %v3686 = vadd.f32 0.0, %v3685
  %v3687 = vpop.f32.mrf.mxu0
  %v3688 = vadd.f32 0.0, %v3687
  %3689 = vmatmul.bf16.gmra.mxu0 %v3644
  %v3690 = vpop.f32.mrf.mxu0
  %v3691 = vadd.f32 0.0, %v3690
  %v3692 = vpop.f32.mrf.mxu0
  %v3693 = vadd.f32 0.0, %v3692
  %3694 = vdwg.mxu0
  %v3695 = vadd.f32 %v3501, %v3656
  %v3696 = vadd.f32 %v3502, %v3658
  %v3697 = vadd.f32 %v3503, %v3661
  %v3698 = vadd.f32 %v3504, %v3663
  %v3699 = vadd.f32 %v3505, %v3666
  %v3700 = vadd.f32 %v3506, %v3668
  %v3701 = vadd.f32 %v3507, %v3671
  %v3702 = vadd.f32 %v3508, %v3673
  %v3703 = vadd.f32 %v3509, %v3676
  %v3704 = vadd.f32 %v3510, %v3678
  %v3705 = vadd.f32 %v3511, %v3681
  %v3706 = vadd.f32 %v3512, %v3683
  %v3707 = vadd.f32 %v3513, %v3686
  %v3708 = vadd.f32 %v3514, %v3688
  %v3709 = vadd.f32 %v3515, %v3691
  %v3710 = vadd.f32 %v3516, %v3693
  %3711 = vrot.lane.b32.xlu0 %v2404, 121
  %v3712 = vpop.permute.xlu0 %3711
  %3713 = vrot.lane.b32.xlu0 %v2405, 121
  %v3714 = vpop.permute.xlu0 %3713
  %3715 = vrot.lane.b32.xlu0 %v2406, 121
  %v3716 = vpop.permute.xlu0 %3715
  %3717 = vrot.lane.b32.xlu0 %v2407, 121
  %v3718 = vpop.permute.xlu0 %3717
  %vm3719 = vcmask 744448
  %v3721 = vsel %vm3719, %v3712, 0
  %v3724 = vsel %vm3719, %v3714, 0
  %v3727 = vsel %vm3719, %v3716, 0
  %v3730 = vsel %vm3719, %v3718, 0
  %s3732 = scalar_lea.vmem %s7, 7
  %v3733 = vld [vmem:[%s3732] sm:$0x1]
  %v3735 = vpack.i.b16 %v3733, %v3733
  %v3737 = vperm.slane %v3735, 0
  %v3738 = vunpack.c.l.bf16 %v3721
  %v3739 = vunpack.c.h.bf16 %v3721
  %v3740 = vunpack.c.l.bf16 %v3724
  %v3741 = vunpack.c.h.bf16 %v3724
  %v3742 = vunpack.c.l.bf16 %v3727
  %v3743 = vunpack.c.h.bf16 %v3727
  %v3744 = vunpack.c.l.bf16 %v3730
  %v3745 = vunpack.c.h.bf16 %v3730
  %v3746 = vunpack.c.l.bf16 %v3737
  %v3747 = vmul.f32 %v3738, %v3746
  %v3748 = vmul.f32 %v3739, %v3746
  %v3749 = vmul.f32 %v3740, %v3746
  %v3750 = vmul.f32 %v3741, %v3746
  %v3751 = vmul.f32 %v3742, %v3746
  %v3752 = vmul.f32 %v3743, %v3746
  %v3753 = vmul.f32 %v3744, %v3746
  %v3754 = vmul.f32 %v3745, %v3746
  %v3755 = vpack.c.bf16 %v3748, %v3747
  %v3756 = vpack.c.bf16 %v3750, %v3749
  %v3757 = vpack.c.bf16 %v3752, %v3751
  %v3758 = vpack.c.bf16 %v3754, %v3753
  %s3759 = scalar_lea.vmem %s3, 448
  %v3760 = vld [vmem:[%s3759] sm:$0xf]
  %v3761 = vld [vmem:[%s3759 + $0x4] sm:$0xf]
  %v3762 = vld [vmem:[%s3759 + $0x8] sm:$0xf]
  %v3763 = vld [vmem:[%s3759 + $0xc] sm:$0xf]
  %v3764 = vld [vmem:[%s3759 + $0x10] sm:$0xf]
  %v3765 = vld [vmem:[%s3759 + $0x14] sm:$0xf]
  %v3766 = vld [vmem:[%s3759 + $0x18] sm:$0xf]
  %v3767 = vld [vmem:[%s3759 + $0x1c] sm:$0xf]
  %v3768 = vld [vmem:[%s3759 + $0x20] sm:$0xf]
  %v3769 = vld [vmem:[%s3759 + $0x24] sm:$0xf]
  %v3770 = vld [vmem:[%s3759 + $0x28] sm:$0xf]
  %v3771 = vld [vmem:[%s3759 + $0x2c] sm:$0xf]
  %v3772 = vld [vmem:[%s3759 + $0x30] sm:$0xf]
  %v3773 = vld [vmem:[%s3759 + $0x34] sm:$0xf]
  %v3774 = vld [vmem:[%s3759 + $0x38] sm:$0xf]
  %v3775 = vld [vmem:[%s3759 + $0x3c] sm:$0xf]
  %v3792 = vunpack.c.l.b16 %v3760
  %v3793 = vunpack.c.l.b16 %v3761
  %v3794 = vunpack.c.l.b16 %v3762
  %v3795 = vunpack.c.l.b16 %v3763
  %v3796 = vunpack.c.l.b16 %v3764
  %v3797 = vunpack.c.l.b16 %v3765
  %v3798 = vunpack.c.l.b16 %v3766
  %v3799 = vunpack.c.l.b16 %v3767
  %v3800 = vunpack.c.l.b16 %v3768
  %v3801 = vunpack.c.l.b16 %v3769
  %v3802 = vunpack.c.l.b16 %v3770
  %v3803 = vunpack.c.l.b16 %v3771
  %v3804 = vunpack.c.l.b16 %v3772
  %v3805 = vunpack.c.l.b16 %v3773
  %v3806 = vunpack.c.l.b16 %v3774
  %v3807 = vunpack.c.l.b16 %v3775
  %v3808 = vpack.c.b16 %v3793, %v3792
  %v3809 = vpack.c.b16 %v3795, %v3794
  %v3810 = vpack.c.b16 %v3797, %v3796
  %v3811 = vpack.c.b16 %v3799, %v3798
  %v3812 = vpack.c.b16 %v3801, %v3800
  %v3813 = vpack.c.b16 %v3803, %v3802
  %v3814 = vpack.c.b16 %v3805, %v3804
  %v3815 = vpack.c.b16 %v3807, %v3806
  %v3817 = vsel %vm2577, %v3808, 0
  %v3820 = vsel %vm2577, %v3809, 0
  %v3823 = vsel %vm2577, %v3810, 0
  %v3826 = vsel %vm2577, %v3811, 0
  %v3829 = vsel %vm2577, %v3812, 0
  %v3832 = vsel %vm2577, %v3813, 0
  %v3835 = vsel %vm2577, %v3814, 0
  %v3838 = vsel %vm2577, %v3815, 0
  %3840 = vmatpush.bf16.msra.mxu0 0
  %3841 = vmatpush.bf16.msra.mxu0 0
  %3842 = vmatpush.bf16.msra.mxu0 0
  %3843 = vmatpush.bf16.msra.mxu0 0
  %3844 = vmatpush.bf16.msra.mxu0 %v3758
  %3845 = vmatpush.bf16.msra.mxu0 %v3757
  %3846 = vmatpush.bf16.msra.mxu0 %v3756
  %3847 = vmatpush.bf16.msra.mxu0 %v3755
  %3848 = vmatmul.bf16.gmra.mxu0 %v3817
  %v3849 = vpop.f32.mrf.mxu0
  %v3850 = vadd.f32 0.0, %v3849
  %v3851 = vpop.f32.mrf.mxu0
  %v3852 = vadd.f32 0.0, %v3851
  %3853 = vmatmul.bf16.gmra.mxu0 %v3820
  %v3854 = vpop.f32.mrf.mxu0
  %v3855 = vadd.f32 0.0, %v3854
  %v3856 = vpop.f32.mrf.mxu0
  %v3857 = vadd.f32 0.0, %v3856
  %3858 = vmatmul.bf16.gmra.mxu0 %v3823
  %v3859 = vpop.f32.mrf.mxu0
  %v3860 = vadd.f32 0.0, %v3859
  %v3861 = vpop.f32.mrf.mxu0
  %v3862 = vadd.f32 0.0, %v3861
  %3863 = vmatmul.bf16.gmra.mxu0 %v3826
  %v3864 = vpop.f32.mrf.mxu0
  %v3865 = vadd.f32 0.0, %v3864
  %v3866 = vpop.f32.mrf.mxu0
  %v3867 = vadd.f32 0.0, %v3866
  %3868 = vmatmul.bf16.gmra.mxu0 %v3829
  %v3869 = vpop.f32.mrf.mxu0
  %v3870 = vadd.f32 0.0, %v3869
  %v3871 = vpop.f32.mrf.mxu0
  %v3872 = vadd.f32 0.0, %v3871
  %3873 = vmatmul.bf16.gmra.mxu0 %v3832
  %v3874 = vpop.f32.mrf.mxu0
  %v3875 = vadd.f32 0.0, %v3874
  %v3876 = vpop.f32.mrf.mxu0
  %v3877 = vadd.f32 0.0, %v3876
  %3878 = vmatmul.bf16.gmra.mxu0 %v3835
  %v3879 = vpop.f32.mrf.mxu0
  %v3880 = vadd.f32 0.0, %v3879
  %v3881 = vpop.f32.mrf.mxu0
  %v3882 = vadd.f32 0.0, %v3881
  %3883 = vmatmul.bf16.gmra.mxu0 %v3838
  %v3884 = vpop.f32.mrf.mxu0
  %v3885 = vadd.f32 0.0, %v3884
  %v3886 = vpop.f32.mrf.mxu0
  %v3887 = vadd.f32 0.0, %v3886
  %3888 = vdwg.mxu0
  %v3889 = vadd.f32 %v3695, %v3850
  %v3890 = vadd.f32 %v3696, %v3852
  %v3891 = vadd.f32 %v3697, %v3855
  %v3892 = vadd.f32 %v3698, %v3857
  %v3893 = vadd.f32 %v3699, %v3860
  %v3894 = vadd.f32 %v3700, %v3862
  %v3895 = vadd.f32 %v3701, %v3865
  %v3896 = vadd.f32 %v3702, %v3867
  %v3897 = vadd.f32 %v3703, %v3870
  %v3898 = vadd.f32 %v3704, %v3872
  %v3899 = vadd.f32 %v3705, %v3875
  %v3900 = vadd.f32 %v3706, %v3877
  %v3901 = vadd.f32 %v3707, %v3880
  %v3902 = vadd.f32 %v3708, %v3882
  %v3903 = vadd.f32 %v3709, %v3885
  %v3904 = vadd.f32 %v3710, %v3887
  %3905 = vrot.lane.b32.xlu0 %v2404, 120
  %v3906 = vpop.permute.xlu0 %3905
  %3907 = vrot.lane.b32.xlu0 %v2405, 120
  %v3908 = vpop.permute.xlu0 %3907
  %3909 = vrot.lane.b32.xlu0 %v2406, 120
  %v3910 = vpop.permute.xlu0 %3909
  %3911 = vrot.lane.b32.xlu0 %v2407, 120
  %v3912 = vpop.permute.xlu0 %3911
  %vm3913 = vcmask 736256
  %v3915 = vsel %vm3913, %v3906, 0
  %v3918 = vsel %vm3913, %v3908, 0
  %v3921 = vsel %vm3913, %v3910, 0
  %v3924 = vsel %vm3913, %v3912, 0
  %s3926 = scalar_lea.vmem %s7, 8
  %v3927 = vld [vmem:[%s3926] sm:$0x1]
  %v3929 = vpack.i.b16 %v3927, %v3927
  %v3931 = vperm.slane %v3929, 0
  %v3932 = vunpack.c.l.bf16 %v3915
  %v3933 = vunpack.c.h.bf16 %v3915
  %v3934 = vunpack.c.l.bf16 %v3918
  %v3935 = vunpack.c.h.bf16 %v3918
  %v3936 = vunpack.c.l.bf16 %v3921
  %v3937 = vunpack.c.h.bf16 %v3921
  %v3938 = vunpack.c.l.bf16 %v3924
  %v3939 = vunpack.c.h.bf16 %v3924
  %v3940 = vunpack.c.l.bf16 %v3931
  %v3941 = vmul.f32 %v3932, %v3940
  %v3942 = vmul.f32 %v3933, %v3940
  %v3943 = vmul.f32 %v3934, %v3940
  %v3944 = vmul.f32 %v3935, %v3940
  %v3945 = vmul.f32 %v3936, %v3940
  %v3946 = vmul.f32 %v3937, %v3940
  %v3947 = vmul.f32 %v3938, %v3940
  %v3948 = vmul.f32 %v3939, %v3940
  %v3949 = vpack.c.bf16 %v3942, %v3941
  %v3950 = vpack.c.bf16 %v3944, %v3943
  %v3951 = vpack.c.bf16 %v3946, %v3945
  %v3952 = vpack.c.bf16 %v3948, %v3947
  %s3953 = scalar_lea.vmem %s3, 512
  %v3954 = vld [vmem:[%s3953] sm:$0xf]
  %v3955 = vld [vmem:[%s3953 + $0x4] sm:$0xf]
  %v3956 = vld [vmem:[%s3953 + $0x8] sm:$0xf]
  %v3957 = vld [vmem:[%s3953 + $0xc] sm:$0xf]
  %v3958 = vld [vmem:[%s3953 + $0x10] sm:$0xf]
  %v3959 = vld [vmem:[%s3953 + $0x14] sm:$0xf]
  %v3960 = vld [vmem:[%s3953 + $0x18] sm:$0xf]
  %v3961 = vld [vmem:[%s3953 + $0x1c] sm:$0xf]
  %v3962 = vld [vmem:[%s3953 + $0x20] sm:$0xf]
  %v3963 = vld [vmem:[%s3953 + $0x24] sm:$0xf]
  %v3964 = vld [vmem:[%s3953 + $0x28] sm:$0xf]
  %v3965 = vld [vmem:[%s3953 + $0x2c] sm:$0xf]
  %v3966 = vld [vmem:[%s3953 + $0x30] sm:$0xf]
  %v3967 = vld [vmem:[%s3953 + $0x34] sm:$0xf]
  %v3968 = vld [vmem:[%s3953 + $0x38] sm:$0xf]
  %v3969 = vld [vmem:[%s3953 + $0x3c] sm:$0xf]
  %v3986 = vunpack.c.l.b16 %v3954
  %v3987 = vunpack.c.l.b16 %v3955
  %v3988 = vunpack.c.l.b16 %v3956
  %v3989 = vunpack.c.l.b16 %v3957
  %v3990 = vunpack.c.l.b16 %v3958
  %v3991 = vunpack.c.l.b16 %v3959
  %v3992 = vunpack.c.l.b16 %v3960
  %v3993 = vunpack.c.l.b16 %v3961
  %v3994 = vunpack.c.l.b16 %v3962
  %v3995 = vunpack.c.l.b16 %v3963
  %v3996 = vunpack.c.l.b16 %v3964
  %v3997 = vunpack.c.l.b16 %v3965
  %v3998 = vunpack.c.l.b16 %v3966
  %v3999 = vunpack.c.l.b16 %v3967
  %v4000 = vunpack.c.l.b16 %v3968
  %v4001 = vunpack.c.l.b16 %v3969
  %v4002 = vpack.c.b16 %v3987, %v3986
  %v4003 = vpack.c.b16 %v3989, %v3988
  %v4004 = vpack.c.b16 %v3991, %v3990
  %v4005 = vpack.c.b16 %v3993, %v3992
  %v4006 = vpack.c.b16 %v3995, %v3994
  %v4007 = vpack.c.b16 %v3997, %v3996
  %v4008 = vpack.c.b16 %v3999, %v3998
  %v4009 = vpack.c.b16 %v4001, %v4000
  %v4011 = vsel %vm2577, %v4002, 0
  %v4014 = vsel %vm2577, %v4003, 0
  %v4017 = vsel %vm2577, %v4004, 0
  %v4020 = vsel %vm2577, %v4005, 0
  %v4023 = vsel %vm2577, %v4006, 0
  %v4026 = vsel %vm2577, %v4007, 0
  %v4029 = vsel %vm2577, %v4008, 0
  %v4032 = vsel %vm2577, %v4009, 0
  %4034 = vmatpush.bf16.msra.mxu0 0
  %4035 = vmatpush.bf16.msra.mxu0 0
  %4036 = vmatpush.bf16.msra.mxu0 0
  %4037 = vmatpush.bf16.msra.mxu0 0
  %4038 = vmatpush.bf16.msra.mxu0 %v3952
  %4039 = vmatpush.bf16.msra.mxu0 %v3951
  %4040 = vmatpush.bf16.msra.mxu0 %v3950
  %4041 = vmatpush.bf16.msra.mxu0 %v3949
  %4042 = vmatmul.bf16.gmra.mxu0 %v4011
  %v4043 = vpop.f32.mrf.mxu0
  %v4044 = vadd.f32 0.0, %v4043
  %v4045 = vpop.f32.mrf.mxu0
  %v4046 = vadd.f32 0.0, %v4045
  %4047 = vmatmul.bf16.gmra.mxu0 %v4014
  %v4048 = vpop.f32.mrf.mxu0
  %v4049 = vadd.f32 0.0, %v4048
  %v4050 = vpop.f32.mrf.mxu0
  %v4051 = vadd.f32 0.0, %v4050
  %4052 = vmatmul.bf16.gmra.mxu0 %v4017
  %v4053 = vpop.f32.mrf.mxu0
  %v4054 = vadd.f32 0.0, %v4053
  %v4055 = vpop.f32.mrf.mxu0
  %v4056 = vadd.f32 0.0, %v4055
  %4057 = vmatmul.bf16.gmra.mxu0 %v4020
  %v4058 = vpop.f32.mrf.mxu0
  %v4059 = vadd.f32 0.0, %v4058
  %v4060 = vpop.f32.mrf.mxu0
  %v4061 = vadd.f32 0.0, %v4060
  %4062 = vmatmul.bf16.gmra.mxu0 %v4023
  %v4063 = vpop.f32.mrf.mxu0
  %v4064 = vadd.f32 0.0, %v4063
  %v4065 = vpop.f32.mrf.mxu0
  %v4066 = vadd.f32 0.0, %v4065
  %4067 = vmatmul.bf16.gmra.mxu0 %v4026
  %v4068 = vpop.f32.mrf.mxu0
  %v4069 = vadd.f32 0.0, %v4068
  %v4070 = vpop.f32.mrf.mxu0
  %v4071 = vadd.f32 0.0, %v4070
  %4072 = vmatmul.bf16.gmra.mxu0 %v4029
  %v4073 = vpop.f32.mrf.mxu0
  %v4074 = vadd.f32 0.0, %v4073
  %v4075 = vpop.f32.mrf.mxu0
  %v4076 = vadd.f32 0.0, %v4075
  %4077 = vmatmul.bf16.gmra.mxu0 %v4032
  %v4078 = vpop.f32.mrf.mxu0
  %v4079 = vadd.f32 0.0, %v4078
  %v4080 = vpop.f32.mrf.mxu0
  %v4081 = vadd.f32 0.0, %v4080
  %4082 = vdwg.mxu0
  %v4083 = vadd.f32 %v3889, %v4044
  %v4084 = vadd.f32 %v3890, %v4046
  %v4085 = vadd.f32 %v3891, %v4049
  %v4086 = vadd.f32 %v3892, %v4051
  %v4087 = vadd.f32 %v3893, %v4054
  %v4088 = vadd.f32 %v3894, %v4056
  %v4089 = vadd.f32 %v3895, %v4059
  %v4090 = vadd.f32 %v3896, %v4061
  %v4091 = vadd.f32 %v3897, %v4064
  %v4092 = vadd.f32 %v3898, %v4066
  %v4093 = vadd.f32 %v3899, %v4069
  %v4094 = vadd.f32 %v3900, %v4071
  %v4095 = vadd.f32 %v3901, %v4074
  %v4096 = vadd.f32 %v3902, %v4076
  %v4097 = vadd.f32 %v3903, %v4079
  %v4098 = vadd.f32 %v3904, %v4081
  %v4099 = vld [vmem:[%s4] sm:$0xff]
  %v4100 = vld [vmem:[%s4 + $0x8] sm:$0xff]
  %v4101 = vld [vmem:[%s4 + $0x10] sm:$0xff]
  %v4102 = vld [vmem:[%s4 + $0x18] sm:$0xff]
  %v4103 = vld [vmem:[%s4 + $0x20] sm:$0xff]
  %v4104 = vld [vmem:[%s4 + $0x28] sm:$0xff]
  %v4105 = vld [vmem:[%s4 + $0x30] sm:$0xff]
  %v4106 = vld [vmem:[%s4 + $0x38] sm:$0xff]
  %v4107 = vld [vmem:[%s4 + $0x40] sm:$0xff]
  %v4108 = vld [vmem:[%s4 + $0x48] sm:$0xff]
  %v4109 = vld [vmem:[%s4 + $0x50] sm:$0xff]
  %v4110 = vld [vmem:[%s4 + $0x58] sm:$0xff]
  %v4111 = vld [vmem:[%s4 + $0x60] sm:$0xff]
  %v4112 = vld [vmem:[%s4 + $0x68] sm:$0xff]
  %v4113 = vld [vmem:[%s4 + $0x70] sm:$0xff]
  %v4114 = vld [vmem:[%s4 + $0x78] sm:$0xff]
  %4116 = vset.pattern.permute.xlu0 0
  %4117 = vperm.xlu0 %4116, %v4099
  %v4118 = vpop.permute.xlu0 %4117
  %4121 = vset.pattern.permute.xlu0 0
  %4122 = vperm.xlu0 %4121, %v4100
  %v4123 = vpop.permute.xlu0 %4122
  %4126 = vset.pattern.permute.xlu0 0
  %4127 = vperm.xlu0 %4126, %v4101
  %v4128 = vpop.permute.xlu0 %4127
  %4131 = vset.pattern.permute.xlu0 0
  %4132 = vperm.xlu0 %4131, %v4102
  %v4133 = vpop.permute.xlu0 %4132
  %4136 = vset.pattern.permute.xlu0 0
  %4137 = vperm.xlu0 %4136, %v4103
  %v4138 = vpop.permute.xlu0 %4137
  %4141 = vset.pattern.permute.xlu0 0
  %4142 = vperm.xlu0 %4141, %v4104
  %v4143 = vpop.permute.xlu0 %4142
  %4146 = vset.pattern.permute.xlu0 0
  %4147 = vperm.xlu0 %4146, %v4105
  %v4148 = vpop.permute.xlu0 %4147
  %4151 = vset.pattern.permute.xlu0 0
  %4152 = vperm.xlu0 %4151, %v4106
  %v4153 = vpop.permute.xlu0 %4152
  %4156 = vset.pattern.permute.xlu0 0
  %4157 = vperm.xlu0 %4156, %v4107
  %v4158 = vpop.permute.xlu0 %4157
  %4161 = vset.pattern.permute.xlu0 0
  %4162 = vperm.xlu0 %4161, %v4108
  %v4163 = vpop.permute.xlu0 %4162
  %4166 = vset.pattern.permute.xlu0 0
  %4167 = vperm.xlu0 %4166, %v4109
  %v4168 = vpop.permute.xlu0 %4167
  %4171 = vset.pattern.permute.xlu0 0
  %4172 = vperm.xlu0 %4171, %v4110
  %v4173 = vpop.permute.xlu0 %4172
  %4176 = vset.pattern.permute.xlu0 0
  %4177 = vperm.xlu0 %4176, %v4111
  %v4178 = vpop.permute.xlu0 %4177
  %4181 = vset.pattern.permute.xlu0 0
  %4182 = vperm.xlu0 %4181, %v4112
  %v4183 = vpop.permute.xlu0 %4182
  %4186 = vset.pattern.permute.xlu0 0
  %4187 = vperm.xlu0 %4186, %v4113
  %v4188 = vpop.permute.xlu0 %4187
  %4191 = vset.pattern.permute.xlu0 0
  %4192 = vperm.xlu0 %4191, %v4114
  %v4193 = vpop.permute.xlu0 %4192
  %v4195 = vadd.f32 %v4083, %v4118
  %v4196 = vadd.f32 %v4084, %v4123
  %v4197 = vadd.f32 %v4085, %v4128
  %v4198 = vadd.f32 %v4086, %v4133
  %v4199 = vadd.f32 %v4087, %v4138
  %v4200 = vadd.f32 %v4088, %v4143
  %v4201 = vadd.f32 %v4089, %v4148
  %v4202 = vadd.f32 %v4090, %v4153
  %v4203 = vadd.f32 %v4091, %v4158
  %v4204 = vadd.f32 %v4092, %v4163
  %v4205 = vadd.f32 %v4093, %v4168
  %v4206 = vadd.f32 %v4094, %v4173
  %v4207 = vadd.f32 %v4095, %v4178
  %v4208 = vadd.f32 %v4096, %v4183
  %v4209 = vadd.f32 %v4097, %v4188
  %v4210 = vadd.f32 %v4098, %v4193
  %vm4211 = vcmp.ge.f32.partialorder %v4195, 0.0
  %vm4212 = vcmp.ge.f32.partialorder %v4196, 0.0
  %vm4213 = vcmp.ge.f32.partialorder %v4197, 0.0
  %vm4214 = vcmp.ge.f32.partialorder %v4198, 0.0
  %vm4215 = vcmp.ge.f32.partialorder %v4199, 0.0
  %vm4216 = vcmp.ge.f32.partialorder %v4200, 0.0
  %vm4217 = vcmp.ge.f32.partialorder %v4201, 0.0
  %vm4218 = vcmp.ge.f32.partialorder %v4202, 0.0
  %vm4219 = vcmp.ge.f32.partialorder %v4203, 0.0
  %vm4220 = vcmp.ge.f32.partialorder %v4204, 0.0
  %vm4221 = vcmp.ge.f32.partialorder %v4205, 0.0
  %vm4222 = vcmp.ge.f32.partialorder %v4206, 0.0
  %vm4223 = vcmp.ge.f32.partialorder %v4207, 0.0
  %vm4224 = vcmp.ge.f32.partialorder %v4208, 0.0
  %vm4225 = vcmp.ge.f32.partialorder %v4209, 0.0
  %vm4226 = vcmp.ge.f32.partialorder %v4210, 0.0
  %v4227 = vmul.f32 %v4195, 0.2
  %v4228 = vmul.f32 %v4196, 0.2
  %v4229 = vmul.f32 %v4197, 0.2
  %v4230 = vmul.f32 %v4198, 0.2
  %v4231 = vmul.f32 %v4199, 0.2
  %v4232 = vmul.f32 %v4200, 0.2
  %v4233 = vmul.f32 %v4201, 0.2
  %v4234 = vmul.f32 %v4202, 0.2
  %v4235 = vmul.f32 %v4203, 0.2
  %v4236 = vmul.f32 %v4204, 0.2
  %v4237 = vmul.f32 %v4205, 0.2
  %v4238 = vmul.f32 %v4206, 0.2
  %v4239 = vmul.f32 %v4207, 0.2
  %v4240 = vmul.f32 %v4208, 0.2
  %v4241 = vmul.f32 %v4209, 0.2
  %v4242 = vmul.f32 %v4210, 0.2
  %v4243 = vsel %vm4211, %v4195, %v4227
  %v4244 = vsel %vm4212, %v4196, %v4228
  %v4245 = vsel %vm4213, %v4197, %v4229
  %v4246 = vsel %vm4214, %v4198, %v4230
  %v4247 = vsel %vm4215, %v4199, %v4231
  %v4248 = vsel %vm4216, %v4200, %v4232
  %v4249 = vsel %vm4217, %v4201, %v4233
  %v4250 = vsel %vm4218, %v4202, %v4234
  %v4251 = vsel %vm4219, %v4203, %v4235
  %v4252 = vsel %vm4220, %v4204, %v4236
  %v4253 = vsel %vm4221, %v4205, %v4237
  %v4254 = vsel %vm4222, %v4206, %v4238
  %v4255 = vsel %vm4223, %v4207, %v4239
  %v4256 = vsel %vm4224, %v4208, %v4240
  %v4257 = vsel %vm4225, %v4209, %v4241
  %v4258 = vsel %vm4226, %v4210, %v4242
  %v4259 = vpack.c.bf16 %v4243, %v4243
  %v4260 = vpack.c.bf16 %v4244, %v4244
  %v4261 = vpack.c.bf16 %v4245, %v4245
  %v4262 = vpack.c.bf16 %v4246, %v4246
  %v4263 = vpack.c.bf16 %v4247, %v4247
  %v4264 = vpack.c.bf16 %v4248, %v4248
  %v4265 = vpack.c.bf16 %v4249, %v4249
  %v4266 = vpack.c.bf16 %v4250, %v4250
  %v4267 = vpack.c.bf16 %v4251, %v4251
  %v4268 = vpack.c.bf16 %v4252, %v4252
  %v4269 = vpack.c.bf16 %v4253, %v4253
  %v4270 = vpack.c.bf16 %v4254, %v4254
  %v4271 = vpack.c.bf16 %v4255, %v4255
  %v4272 = vpack.c.bf16 %v4256, %v4256
  %v4273 = vpack.c.bf16 %v4257, %v4257
  %v4274 = vpack.c.bf16 %v4258, %v4258
  %v4291 = vunpack.c.l.b16 %v4259
  %v4292 = vunpack.c.l.b16 %v4260
  %v4293 = vunpack.c.l.b16 %v4261
  %v4294 = vunpack.c.l.b16 %v4262
  %v4295 = vunpack.c.l.b16 %v4263
  %v4296 = vunpack.c.l.b16 %v4264
  %v4297 = vunpack.c.l.b16 %v4265
  %v4298 = vunpack.c.l.b16 %v4266
  %v4299 = vunpack.c.l.b16 %v4267
  %v4300 = vunpack.c.l.b16 %v4268
  %v4301 = vunpack.c.l.b16 %v4269
  %v4302 = vunpack.c.l.b16 %v4270
  %v4303 = vunpack.c.l.b16 %v4271
  %v4304 = vunpack.c.l.b16 %v4272
  %v4305 = vunpack.c.l.b16 %v4273
  %v4306 = vunpack.c.l.b16 %v4274
  %v4307 = vpack.c.b16 %v4292, %v4291
  %v4308 = vpack.c.b16 %v4294, %v4293
  %v4309 = vpack.c.b16 %v4296, %v4295
  %v4310 = vpack.c.b16 %v4298, %v4297
  %v4311 = vpack.c.b16 %v4300, %v4299
  %v4312 = vpack.c.b16 %v4302, %v4301
  %v4313 = vpack.c.b16 %v4304, %v4303
  %v4314 = vpack.c.b16 %v4306, %v4305
  %4315 = vrot.lane.b32.xlu0 %v4307, 8
  %v4316 = vpop.permute.xlu0 %4315
  %4317 = vrot.lane.b32.xlu0 %v4308, 8
  %v4318 = vpop.permute.xlu0 %4317
  %4319 = vrot.lane.b32.xlu0 %v4309, 8
  %v4320 = vpop.permute.xlu0 %4319
  %4321 = vrot.lane.b32.xlu0 %v4310, 8
  %v4322 = vpop.permute.xlu0 %4321
  %4323 = vrot.lane.b32.xlu0 %v4311, 8
  %v4324 = vpop.permute.xlu0 %4323
  %4325 = vrot.lane.b32.xlu0 %v4312, 8
  %v4326 = vpop.permute.xlu0 %4325
  %4327 = vrot.lane.b32.xlu0 %v4313, 8
  %v4328 = vpop.permute.xlu0 %4327
  %4329 = vrot.lane.b32.xlu0 %v4314, 8
  %v4330 = vpop.permute.xlu0 %4329
  %v4332 = vsel %vm2416, 0, %v4316
  %v4335 = vsel %vm2416, 0, %v4318
  %v4338 = vsel %vm2416, 0, %v4320
  %v4341 = vsel %vm2416, 0, %v4322
  %v4344 = vsel %vm2416, 0, %v4324
  %v4347 = vsel %vm2416, 0, %v4326
  %v4350 = vsel %vm2416, 0, %v4328
  %v4353 = vsel %vm2416, 0, %v4330
  %v4355 = vunpack.c.l.bf16 %v4332
  %v4356 = vunpack.c.h.bf16 %v4332
  %v4357 = vunpack.c.l.bf16 %v4335
  %v4358 = vunpack.c.h.bf16 %v4335
  %v4359 = vunpack.c.l.bf16 %v4338
  %v4360 = vunpack.c.h.bf16 %v4338
  %v4361 = vunpack.c.l.bf16 %v4341
  %v4362 = vunpack.c.h.bf16 %v4341
  %v4363 = vunpack.c.l.bf16 %v4344
  %v4364 = vunpack.c.h.bf16 %v4344
  %v4365 = vunpack.c.l.bf16 %v4347
  %v4366 = vunpack.c.h.bf16 %v4347
  %v4367 = vunpack.c.l.bf16 %v4350
  %v4368 = vunpack.c.h.bf16 %v4350
  %v4369 = vunpack.c.l.bf16 %v4353
  %v4370 = vunpack.c.h.bf16 %v4353
  %v4371 = vmul.f32 %v4355, %v2443
  %v4372 = vmul.f32 %v4356, %v2443
  %v4373 = vmul.f32 %v4357, %v2443
  %v4374 = vmul.f32 %v4358, %v2443
  %v4375 = vmul.f32 %v4359, %v2443
  %v4376 = vmul.f32 %v4360, %v2443
  %v4377 = vmul.f32 %v4361, %v2443
  %v4378 = vmul.f32 %v4362, %v2443
  %v4379 = vmul.f32 %v4363, %v2443
  %v4380 = vmul.f32 %v4364, %v2443
  %v4381 = vmul.f32 %v4365, %v2443
  %v4382 = vmul.f32 %v4366, %v2443
  %v4383 = vmul.f32 %v4367, %v2443
  %v4384 = vmul.f32 %v4368, %v2443
  %v4385 = vmul.f32 %v4369, %v2443
  %v4386 = vmul.f32 %v4370, %v2443
  %v4387 = vpack.c.bf16 %v4372, %v4371
  %v4388 = vpack.c.bf16 %v4374, %v4373
  %v4389 = vpack.c.bf16 %v4376, %v4375
  %v4390 = vpack.c.bf16 %v4378, %v4377
  %v4391 = vpack.c.bf16 %v4380, %v4379
  %v4392 = vpack.c.bf16 %v4382, %v4381
  %v4393 = vpack.c.bf16 %v4384, %v4383
  %v4394 = vpack.c.bf16 %v4386, %v4385
  %v4395 = vld [vmem:[%s5] sm:$0xf]
  %v4396 = vld [vmem:[%s5 + $0x4] sm:$0xf]
  %4397 = vrot.lane.b32.xlu0 %v4307, 7
  %v4398 = vpop.permute.xlu0 %4397
  %4399 = vrot.lane.b32.xlu0 %v4308, 7
  %v4400 = vpop.permute.xlu0 %4399
  %4401 = vrot.lane.b32.xlu0 %v4309, 7
  %v4402 = vpop.permute.xlu0 %4401
  %4403 = vrot.lane.b32.xlu0 %v4310, 7
  %v4404 = vpop.permute.xlu0 %4403
  %4405 = vrot.lane.b32.xlu0 %v4311, 7
  %v4406 = vpop.permute.xlu0 %4405
  %4407 = vrot.lane.b32.xlu0 %v4312, 7
  %v4408 = vpop.permute.xlu0 %4407
  %4409 = vrot.lane.b32.xlu0 %v4313, 7
  %v4410 = vpop.permute.xlu0 %4409
  %4411 = vrot.lane.b32.xlu0 %v4314, 7
  %v4412 = vpop.permute.xlu0 %4411
  %v4414 = vsel %vm2480, 0, %v4398
  %v4417 = vsel %vm2480, 0, %v4400
  %v4420 = vsel %vm2480, 0, %v4402
  %v4423 = vsel %vm2480, 0, %v4404
  %v4426 = vsel %vm2480, 0, %v4406
  %v4429 = vsel %vm2480, 0, %v4408
  %v4432 = vsel %vm2480, 0, %v4410
  %v4435 = vsel %vm2480, 0, %v4412
  %v4437 = vunpack.c.l.bf16 %v4414
  %v4438 = vunpack.c.h.bf16 %v4414
  %v4439 = vunpack.c.l.bf16 %v4417
  %v4440 = vunpack.c.h.bf16 %v4417
  %v4441 = vunpack.c.l.bf16 %v4420
  %v4442 = vunpack.c.h.bf16 %v4420
  %v4443 = vunpack.c.l.bf16 %v4423
  %v4444 = vunpack.c.h.bf16 %v4423
  %v4445 = vunpack.c.l.bf16 %v4426
  %v4446 = vunpack.c.h.bf16 %v4426
  %v4447 = vunpack.c.l.bf16 %v4429
  %v4448 = vunpack.c.h.bf16 %v4429
  %v4449 = vunpack.c.l.bf16 %v4432
  %v4450 = vunpack.c.h.bf16 %v4432
  %v4451 = vunpack.c.l.bf16 %v4435
  %v4452 = vunpack.c.h.bf16 %v4435
  %v4453 = vmul.f32 %v4437, %v2507
  %v4454 = vmul.f32 %v4438, %v2507
  %v4455 = vmul.f32 %v4439, %v2507
  %v4456 = vmul.f32 %v4440, %v2507
  %v4457 = vmul.f32 %v4441, %v2507
  %v4458 = vmul.f32 %v4442, %v2507
  %v4459 = vmul.f32 %v4443, %v2507
  %v4460 = vmul.f32 %v4444, %v2507
  %v4461 = vmul.f32 %v4445, %v2507
  %v4462 = vmul.f32 %v4446, %v2507
  %v4463 = vmul.f32 %v4447, %v2507
  %v4464 = vmul.f32 %v4448, %v2507
  %v4465 = vmul.f32 %v4449, %v2507
  %v4466 = vmul.f32 %v4450, %v2507
  %v4467 = vmul.f32 %v4451, %v2507
  %v4468 = vmul.f32 %v4452, %v2507
  %v4469 = vpack.c.bf16 %v4454, %v4453
  %v4470 = vpack.c.bf16 %v4456, %v4455
  %v4471 = vpack.c.bf16 %v4458, %v4457
  %v4472 = vpack.c.bf16 %v4460, %v4459
  %v4473 = vpack.c.bf16 %v4462, %v4461
  %v4474 = vpack.c.bf16 %v4464, %v4463
  %v4475 = vpack.c.bf16 %v4466, %v4465
  %v4476 = vpack.c.bf16 %v4468, %v4467
  %s4477 = scalar_lea.vmem %s5, 8
  %v4478 = vld [vmem:[%s4477] sm:$0xf]
  %v4479 = vld [vmem:[%s4477 + $0x4] sm:$0xf]
  %v4482 = vunpack.c.l.b16 %v4478
  %v4483 = vunpack.c.l.b16 %v4479
  %v4484 = vpack.c.b16 %v4483, %v4482
  %4486 = vmatpush.bf16.msra.mxu0 %v4476
  %4487 = vmatpush.bf16.msra.mxu0 %v4475
  %4488 = vmatpush.bf16.msra.mxu0 %v4474
  %4489 = vmatpush.bf16.msra.mxu0 %v4473
  %4490 = vmatpush.bf16.msra.mxu0 %v4472
  %4491 = vmatpush.bf16.msra.mxu0 %v4471
  %4492 = vmatpush.bf16.msra.mxu0 %v4470
  %4493 = vmatpush.bf16.msra.mxu0 %v4469
  %4494 = vmatmul.bf16.gmra.mxu0 %v4484
  %v4495 = vpop.f32.mrf.mxu0
  %v4496 = vadd.f32 0.0, %v4495
  %v4497 = vpop.f32.mrf.mxu0
  %v4498 = vadd.f32 0.0, %v4497
  %4499 = vdwg.mxu0
  %v4502 = vunpack.c.l.b16 %v4395
  %v4503 = vunpack.c.l.b16 %v4396
  %v4504 = vpack.c.b16 %v4503, %v4502
  %4506 = vmatpush.bf16.msra.mxu0 %v4394
  %4507 = vmatpush.bf16.msra.mxu0 %v4393
  %4508 = vmatpush.bf16.msra.mxu0 %v4392
  %4509 = vmatpush.bf16.msra.mxu0 %v4391
  %4510 = vmatpush.bf16.msra.mxu0 %v4390
  %4511 = vmatpush.bf16.msra.mxu0 %v4389
  %4512 = vmatpush.bf16.msra.mxu0 %v4388
  %4513 = vmatpush.bf16.msra.mxu0 %v4387
  %4514 = vmatmul.bf16.gmra.mxu0 %v4504
  %v4515 = vpop.f32.mrf.mxu0
  %v4516 = vadd.f32 %v4496, %v4515
  %v4517 = vpop.f32.mrf.mxu0
  %v4518 = vadd.f32 %v4498, %v4517
  %4519 = vdwg.mxu0
  %4520 = vrot.lane.b32.xlu0 %v4307, 6
  %v4521 = vpop.permute.xlu0 %4520
  %4522 = vrot.lane.b32.xlu0 %v4308, 6
  %v4523 = vpop.permute.xlu0 %4522
  %4524 = vrot.lane.b32.xlu0 %v4309, 6
  %v4525 = vpop.permute.xlu0 %4524
  %4526 = vrot.lane.b32.xlu0 %v4310, 6
  %v4527 = vpop.permute.xlu0 %4526
  %4528 = vrot.lane.b32.xlu0 %v4311, 6
  %v4529 = vpop.permute.xlu0 %4528
  %4530 = vrot.lane.b32.xlu0 %v4312, 6
  %v4531 = vpop.permute.xlu0 %4530
  %4532 = vrot.lane.b32.xlu0 %v4313, 6
  %v4533 = vpop.permute.xlu0 %4532
  %4534 = vrot.lane.b32.xlu0 %v4314, 6
  %v4535 = vpop.permute.xlu0 %4534
  %v4537 = vsel %vm1834, 0, %v4521
  %v4540 = vsel %vm1834, 0, %v4523
  %v4543 = vsel %vm1834, 0, %v4525
  %v4546 = vsel %vm1834, 0, %v4527
  %v4549 = vsel %vm1834, 0, %v4529
  %v4552 = vsel %vm1834, 0, %v4531
  %v4555 = vsel %vm1834, 0, %v4533
  %v4558 = vsel %vm1834, 0, %v4535
  %v4560 = vunpack.c.l.bf16 %v4537
  %v4561 = vunpack.c.h.bf16 %v4537
  %v4562 = vunpack.c.l.bf16 %v4540
  %v4563 = vunpack.c.h.bf16 %v4540
  %v4564 = vunpack.c.l.bf16 %v4543
  %v4565 = vunpack.c.h.bf16 %v4543
  %v4566 = vunpack.c.l.bf16 %v4546
  %v4567 = vunpack.c.h.bf16 %v4546
  %v4568 = vunpack.c.l.bf16 %v4549
  %v4569 = vunpack.c.h.bf16 %v4549
  %v4570 = vunpack.c.l.bf16 %v4552
  %v4571 = vunpack.c.h.bf16 %v4552
  %v4572 = vunpack.c.l.bf16 %v4555
  %v4573 = vunpack.c.h.bf16 %v4555
  %v4574 = vunpack.c.l.bf16 %v4558
  %v4575 = vunpack.c.h.bf16 %v4558
  %v4576 = vmul.f32 %v4560, %v2798
  %v4577 = vmul.f32 %v4561, %v2798
  %v4578 = vmul.f32 %v4562, %v2798
  %v4579 = vmul.f32 %v4563, %v2798
  %v4580 = vmul.f32 %v4564, %v2798
  %v4581 = vmul.f32 %v4565, %v2798
  %v4582 = vmul.f32 %v4566, %v2798
  %v4583 = vmul.f32 %v4567, %v2798
  %v4584 = vmul.f32 %v4568, %v2798
  %v4585 = vmul.f32 %v4569, %v2798
  %v4586 = vmul.f32 %v4570, %v2798
  %v4587 = vmul.f32 %v4571, %v2798
  %v4588 = vmul.f32 %v4572, %v2798
  %v4589 = vmul.f32 %v4573, %v2798
  %v4590 = vmul.f32 %v4574, %v2798
  %v4591 = vmul.f32 %v4575, %v2798
  %v4592 = vpack.c.bf16 %v4577, %v4576
  %v4593 = vpack.c.bf16 %v4579, %v4578
  %v4594 = vpack.c.bf16 %v4581, %v4580
  %v4595 = vpack.c.bf16 %v4583, %v4582
  %v4596 = vpack.c.bf16 %v4585, %v4584
  %v4597 = vpack.c.bf16 %v4587, %v4586
  %v4598 = vpack.c.bf16 %v4589, %v4588
  %v4599 = vpack.c.bf16 %v4591, %v4590
  %s4600 = scalar_lea.vmem %s5, 16
  %v4601 = vld [vmem:[%s4600] sm:$0xf]
  %v4602 = vld [vmem:[%s4600 + $0x4] sm:$0xf]
  %v4605 = vunpack.c.l.b16 %v4601
  %v4606 = vunpack.c.l.b16 %v4602
  %v4607 = vpack.c.b16 %v4606, %v4605
  %4609 = vmatpush.bf16.msra.mxu0 %v4599
  %4610 = vmatpush.bf16.msra.mxu0 %v4598
  %4611 = vmatpush.bf16.msra.mxu0 %v4597
  %4612 = vmatpush.bf16.msra.mxu0 %v4596
  %4613 = vmatpush.bf16.msra.mxu0 %v4595
  %4614 = vmatpush.bf16.msra.mxu0 %v4594
  %4615 = vmatpush.bf16.msra.mxu0 %v4593
  %4616 = vmatpush.bf16.msra.mxu0 %v4592
  %4617 = vmatmul.bf16.gmra.mxu0 %v4607
  %v4618 = vpop.f32.mrf.mxu0
  %v4619 = vadd.f32 0.0, %v4618
  %v4620 = vpop.f32.mrf.mxu0
  %v4621 = vadd.f32 0.0, %v4620
  %4622 = vdwg.mxu0
  %v4623 = vadd.f32 %v4516, %v4619
  %v4624 = vadd.f32 %v4518, %v4621
  %4625 = vrot.lane.b32.xlu0 %v4307, 1
  %v4626 = vpop.permute.xlu0 %4625
  %4627 = vrot.lane.b32.xlu0 %v4308, 1
  %v4628 = vpop.permute.xlu0 %4627
  %4629 = vrot.lane.b32.xlu0 %v4309, 1
  %v4630 = vpop.permute.xlu0 %4629
  %4631 = vrot.lane.b32.xlu0 %v4310, 1
  %v4632 = vpop.permute.xlu0 %4631
  %4633 = vrot.lane.b32.xlu0 %v4311, 1
  %v4634 = vpop.permute.xlu0 %4633
  %4635 = vrot.lane.b32.xlu0 %v4312, 1
  %v4636 = vpop.permute.xlu0 %4635
  %4637 = vrot.lane.b32.xlu0 %v4313, 1
  %v4638 = vpop.permute.xlu0 %4637
  %4639 = vrot.lane.b32.xlu0 %v4314, 1
  %v4640 = vpop.permute.xlu0 %4639
  %v4642 = vsel %vm1937, 0, %v4626
  %v4645 = vsel %vm1937, 0, %v4628
  %v4648 = vsel %vm1937, 0, %v4630
  %v4651 = vsel %vm1937, 0, %v4632
  %v4654 = vsel %vm1937, 0, %v4634
  %v4657 = vsel %vm1937, 0, %v4636
  %v4660 = vsel %vm1937, 0, %v4638
  %v4663 = vsel %vm1937, 0, %v4640
  %v4665 = vunpack.c.l.bf16 %v4642
  %v4666 = vunpack.c.h.bf16 %v4642
  %v4667 = vunpack.c.l.bf16 %v4645
  %v4668 = vunpack.c.h.bf16 %v4645
  %v4669 = vunpack.c.l.bf16 %v4648
  %v4670 = vunpack.c.h.bf16 %v4648
  %v4671 = vunpack.c.l.bf16 %v4651
  %v4672 = vunpack.c.h.bf16 %v4651
  %v4673 = vunpack.c.l.bf16 %v4654
  %v4674 = vunpack.c.h.bf16 %v4654
  %v4675 = vunpack.c.l.bf16 %v4657
  %v4676 = vunpack.c.h.bf16 %v4657
  %v4677 = vunpack.c.l.bf16 %v4660
  %v4678 = vunpack.c.h.bf16 %v4660
  %v4679 = vunpack.c.l.bf16 %v4663
  %v4680 = vunpack.c.h.bf16 %v4663
  %v4681 = vmul.f32 %v4665, %v2991
  %v4682 = vmul.f32 %v4666, %v2991
  %v4683 = vmul.f32 %v4667, %v2991
  %v4684 = vmul.f32 %v4668, %v2991
  %v4685 = vmul.f32 %v4669, %v2991
  %v4686 = vmul.f32 %v4670, %v2991
  %v4687 = vmul.f32 %v4671, %v2991
  %v4688 = vmul.f32 %v4672, %v2991
  %v4689 = vmul.f32 %v4673, %v2991
  %v4690 = vmul.f32 %v4674, %v2991
  %v4691 = vmul.f32 %v4675, %v2991
  %v4692 = vmul.f32 %v4676, %v2991
  %v4693 = vmul.f32 %v4677, %v2991
  %v4694 = vmul.f32 %v4678, %v2991
  %v4695 = vmul.f32 %v4679, %v2991
  %v4696 = vmul.f32 %v4680, %v2991
  %v4697 = vpack.c.bf16 %v4682, %v4681
  %v4698 = vpack.c.bf16 %v4684, %v4683
  %v4699 = vpack.c.bf16 %v4686, %v4685
  %v4700 = vpack.c.bf16 %v4688, %v4687
  %v4701 = vpack.c.bf16 %v4690, %v4689
  %v4702 = vpack.c.bf16 %v4692, %v4691
  %v4703 = vpack.c.bf16 %v4694, %v4693
  %v4704 = vpack.c.bf16 %v4696, %v4695
  %s4705 = scalar_lea.vmem %s5, 24
  %v4706 = vld [vmem:[%s4705] sm:$0xf]
  %v4707 = vld [vmem:[%s4705 + $0x4] sm:$0xf]
  %v4710 = vunpack.c.l.b16 %v4706
  %v4711 = vunpack.c.l.b16 %v4707
  %v4712 = vpack.c.b16 %v4711, %v4710
  %4714 = vmatpush.bf16.msra.mxu0 %v4704
  %4715 = vmatpush.bf16.msra.mxu0 %v4703
  %4716 = vmatpush.bf16.msra.mxu0 %v4702
  %4717 = vmatpush.bf16.msra.mxu0 %v4701
  %4718 = vmatpush.bf16.msra.mxu0 %v4700
  %4719 = vmatpush.bf16.msra.mxu0 %v4699
  %4720 = vmatpush.bf16.msra.mxu0 %v4698
  %4721 = vmatpush.bf16.msra.mxu0 %v4697
  %4722 = vmatmul.bf16.gmra.mxu0 %v4712
  %v4723 = vpop.f32.mrf.mxu0
  %v4724 = vadd.f32 0.0, %v4723
  %v4725 = vpop.f32.mrf.mxu0
  %v4726 = vadd.f32 0.0, %v4725
  %4727 = vdwg.mxu0
  %v4728 = vadd.f32 %v4623, %v4724
  %v4729 = vadd.f32 %v4624, %v4726
  %v4730 = vunpack.c.l.bf16 %v4259
  %v4731 = vunpack.c.l.bf16 %v4260
  %v4732 = vunpack.c.l.bf16 %v4261
  %v4733 = vunpack.c.l.bf16 %v4262
  %v4734 = vunpack.c.l.bf16 %v4263
  %v4735 = vunpack.c.l.bf16 %v4264
  %v4736 = vunpack.c.l.bf16 %v4265
  %v4737 = vunpack.c.l.bf16 %v4266
  %v4738 = vunpack.c.l.bf16 %v4267
  %v4739 = vunpack.c.l.bf16 %v4268
  %v4740 = vunpack.c.l.bf16 %v4269
  %v4741 = vunpack.c.l.bf16 %v4270
  %v4742 = vunpack.c.l.bf16 %v4271
  %v4743 = vunpack.c.l.bf16 %v4272
  %v4744 = vunpack.c.l.bf16 %v4273
  %v4745 = vunpack.c.l.bf16 %v4274
  %v4746 = vmul.f32 %v4730, %v3164
  %v4747 = vmul.f32 %v4731, %v3164
  %v4748 = vmul.f32 %v4732, %v3164
  %v4749 = vmul.f32 %v4733, %v3164
  %v4750 = vmul.f32 %v4734, %v3164
  %v4751 = vmul.f32 %v4735, %v3164
  %v4752 = vmul.f32 %v4736, %v3164
  %v4753 = vmul.f32 %v4737, %v3164
  %v4754 = vmul.f32 %v4738, %v3164
  %v4755 = vmul.f32 %v4739, %v3164
  %v4756 = vmul.f32 %v4740, %v3164
  %v4757 = vmul.f32 %v4741, %v3164
  %v4758 = vmul.f32 %v4742, %v3164
  %v4759 = vmul.f32 %v4743, %v3164
  %v4760 = vmul.f32 %v4744, %v3164
  %v4761 = vmul.f32 %v4745, %v3164
  %v4762 = vpack.c.bf16 %v4747, %v4746
  %v4763 = vpack.c.bf16 %v4749, %v4748
  %v4764 = vpack.c.bf16 %v4751, %v4750
  %v4765 = vpack.c.bf16 %v4753, %v4752
  %v4766 = vpack.c.bf16 %v4755, %v4754
  %v4767 = vpack.c.bf16 %v4757, %v4756
  %v4768 = vpack.c.bf16 %v4759, %v4758
  %v4769 = vpack.c.bf16 %v4761, %v4760
  %s4770 = scalar_lea.vmem %s5, 32
  %v4771 = vld [vmem:[%s4770] sm:$0xf]
  %v4772 = vld [vmem:[%s4770 + $0x4] sm:$0xf]
  %v4775 = vunpack.c.l.b16 %v4771
  %v4776 = vunpack.c.l.b16 %v4772
  %v4777 = vpack.c.b16 %v4776, %v4775
  %4779 = vmatpush.bf16.msra.mxu0 %v4769
  %4780 = vmatpush.bf16.msra.mxu0 %v4768
  %4781 = vmatpush.bf16.msra.mxu0 %v4767
  %4782 = vmatpush.bf16.msra.mxu0 %v4766
  %4783 = vmatpush.bf16.msra.mxu0 %v4765
  %4784 = vmatpush.bf16.msra.mxu0 %v4764
  %4785 = vmatpush.bf16.msra.mxu0 %v4763
  %4786 = vmatpush.bf16.msra.mxu0 %v4762
  %4787 = vmatmul.bf16.gmra.mxu0 %v4777
  %v4788 = vpop.f32.mrf.mxu0
  %v4789 = vadd.f32 0.0, %v4788
  %v4790 = vpop.f32.mrf.mxu0
  %v4791 = vadd.f32 0.0, %v4790
  %4792 = vdwg.mxu0
  %v4793 = vadd.f32 %v4728, %v4789
  %v4794 = vadd.f32 %v4729, %v4791
  %4795 = vrot.lane.b32.xlu0 %v4307, 127
  %v4796 = vpop.permute.xlu0 %4795
  %4797 = vrot.lane.b32.xlu0 %v4308, 127
  %v4798 = vpop.permute.xlu0 %4797
  %4799 = vrot.lane.b32.xlu0 %v4309, 127
  %v4800 = vpop.permute.xlu0 %4799
  %4801 = vrot.lane.b32.xlu0 %v4310, 127
  %v4802 = vpop.permute.xlu0 %4801
  %4803 = vrot.lane.b32.xlu0 %v4311, 127
  %v4804 = vpop.permute.xlu0 %4803
  %4805 = vrot.lane.b32.xlu0 %v4312, 127
  %v4806 = vpop.permute.xlu0 %4805
  %4807 = vrot.lane.b32.xlu0 %v4313, 127
  %v4808 = vpop.permute.xlu0 %4807
  %4809 = vrot.lane.b32.xlu0 %v4314, 127
  %v4810 = vpop.permute.xlu0 %4809
  %v4812 = vsel %vm3331, %v4796, 0
  %v4815 = vsel %vm3331, %v4798, 0
  %v4818 = vsel %vm3331, %v4800, 0
  %v4821 = vsel %vm3331, %v4802, 0
  %v4824 = vsel %vm3331, %v4804, 0
  %v4827 = vsel %vm3331, %v4806, 0
  %v4830 = vsel %vm3331, %v4808, 0
  %v4833 = vsel %vm3331, %v4810, 0
  %v4835 = vunpack.c.l.bf16 %v4812
  %v4836 = vunpack.c.h.bf16 %v4812
  %v4837 = vunpack.c.l.bf16 %v4815
  %v4838 = vunpack.c.h.bf16 %v4815
  %v4839 = vunpack.c.l.bf16 %v4818
  %v4840 = vunpack.c.h.bf16 %v4818
  %v4841 = vunpack.c.l.bf16 %v4821
  %v4842 = vunpack.c.h.bf16 %v4821
  %v4843 = vunpack.c.l.bf16 %v4824
  %v4844 = vunpack.c.h.bf16 %v4824
  %v4845 = vunpack.c.l.bf16 %v4827
  %v4846 = vunpack.c.h.bf16 %v4827
  %v4847 = vunpack.c.l.bf16 %v4830
  %v4848 = vunpack.c.h.bf16 %v4830
  %v4849 = vunpack.c.l.bf16 %v4833
  %v4850 = vunpack.c.h.bf16 %v4833
  %v4851 = vmul.f32 %v4835, %v3358
  %v4852 = vmul.f32 %v4836, %v3358
  %v4853 = vmul.f32 %v4837, %v3358
  %v4854 = vmul.f32 %v4838, %v3358
  %v4855 = vmul.f32 %v4839, %v3358
  %v4856 = vmul.f32 %v4840, %v3358
  %v4857 = vmul.f32 %v4841, %v3358
  %v4858 = vmul.f32 %v4842, %v3358
  %v4859 = vmul.f32 %v4843, %v3358
  %v4860 = vmul.f32 %v4844, %v3358
  %v4861 = vmul.f32 %v4845, %v3358
  %v4862 = vmul.f32 %v4846, %v3358
  %v4863 = vmul.f32 %v4847, %v3358
  %v4864 = vmul.f32 %v4848, %v3358
  %v4865 = vmul.f32 %v4849, %v3358
  %v4866 = vmul.f32 %v4850, %v3358
  %v4867 = vpack.c.bf16 %v4852, %v4851
  %v4868 = vpack.c.bf16 %v4854, %v4853
  %v4869 = vpack.c.bf16 %v4856, %v4855
  %v4870 = vpack.c.bf16 %v4858, %v4857
  %v4871 = vpack.c.bf16 %v4860, %v4859
  %v4872 = vpack.c.bf16 %v4862, %v4861
  %v4873 = vpack.c.bf16 %v4864, %v4863
  %v4874 = vpack.c.bf16 %v4866, %v4865
  %s4875 = scalar_lea.vmem %s5, 40
  %v4876 = vld [vmem:[%s4875] sm:$0xf]
  %v4877 = vld [vmem:[%s4875 + $0x4] sm:$0xf]
  %v4880 = vunpack.c.l.b16 %v4876
  %v4881 = vunpack.c.l.b16 %v4877
  %v4882 = vpack.c.b16 %v4881, %v4880
  %4884 = vmatpush.bf16.msra.mxu0 %v4874
  %4885 = vmatpush.bf16.msra.mxu0 %v4873
  %4886 = vmatpush.bf16.msra.mxu0 %v4872
  %4887 = vmatpush.bf16.msra.mxu0 %v4871
  %4888 = vmatpush.bf16.msra.mxu0 %v4870
  %4889 = vmatpush.bf16.msra.mxu0 %v4869
  %4890 = vmatpush.bf16.msra.mxu0 %v4868
  %4891 = vmatpush.bf16.msra.mxu0 %v4867
  %4892 = vmatmul.bf16.gmra.mxu0 %v4882
  %v4893 = vpop.f32.mrf.mxu0
  %v4894 = vadd.f32 0.0, %v4893
  %v4895 = vpop.f32.mrf.mxu0
  %v4896 = vadd.f32 0.0, %v4895
  %4897 = vdwg.mxu0
  %v4898 = vadd.f32 %v4793, %v4894
  %v4899 = vadd.f32 %v4794, %v4896
  %4900 = vrot.lane.b32.xlu0 %v4307, 122
  %v4901 = vpop.permute.xlu0 %4900
  %4902 = vrot.lane.b32.xlu0 %v4308, 122
  %v4903 = vpop.permute.xlu0 %4902
  %4904 = vrot.lane.b32.xlu0 %v4309, 122
  %v4905 = vpop.permute.xlu0 %4904
  %4906 = vrot.lane.b32.xlu0 %v4310, 122
  %v4907 = vpop.permute.xlu0 %4906
  %4908 = vrot.lane.b32.xlu0 %v4311, 122
  %v4909 = vpop.permute.xlu0 %4908
  %4910 = vrot.lane.b32.xlu0 %v4312, 122
  %v4911 = vpop.permute.xlu0 %4910
  %4912 = vrot.lane.b32.xlu0 %v4313, 122
  %v4913 = vpop.permute.xlu0 %4912
  %4914 = vrot.lane.b32.xlu0 %v4314, 122
  %v4915 = vpop.permute.xlu0 %4914
  %v4917 = vsel %vm3525, %v4901, 0
  %v4920 = vsel %vm3525, %v4903, 0
  %v4923 = vsel %vm3525, %v4905, 0
  %v4926 = vsel %vm3525, %v4907, 0
  %v4929 = vsel %vm3525, %v4909, 0
  %v4932 = vsel %vm3525, %v4911, 0
  %v4935 = vsel %vm3525, %v4913, 0
  %v4938 = vsel %vm3525, %v4915, 0
  %v4940 = vunpack.c.l.bf16 %v4917
  %v4941 = vunpack.c.h.bf16 %v4917
  %v4942 = vunpack.c.l.bf16 %v4920
  %v4943 = vunpack.c.h.bf16 %v4920
  %v4944 = vunpack.c.l.bf16 %v4923
  %v4945 = vunpack.c.h.bf16 %v4923
  %v4946 = vunpack.c.l.bf16 %v4926
  %v4947 = vunpack.c.h.bf16 %v4926
  %v4948 = vunpack.c.l.bf16 %v4929
  %v4949 = vunpack.c.h.bf16 %v4929
  %v4950 = vunpack.c.l.bf16 %v4932
  %v4951 = vunpack.c.h.bf16 %v4932
  %v4952 = vunpack.c.l.bf16 %v4935
  %v4953 = vunpack.c.h.bf16 %v4935
  %v4954 = vunpack.c.l.bf16 %v4938
  %v4955 = vunpack.c.h.bf16 %v4938
  %v4956 = vmul.f32 %v4940, %v3552
  %v4957 = vmul.f32 %v4941, %v3552
  %v4958 = vmul.f32 %v4942, %v3552
  %v4959 = vmul.f32 %v4943, %v3552
  %v4960 = vmul.f32 %v4944, %v3552
  %v4961 = vmul.f32 %v4945, %v3552
  %v4962 = vmul.f32 %v4946, %v3552
  %v4963 = vmul.f32 %v4947, %v3552
  %v4964 = vmul.f32 %v4948, %v3552
  %v4965 = vmul.f32 %v4949, %v3552
  %v4966 = vmul.f32 %v4950, %v3552
  %v4967 = vmul.f32 %v4951, %v3552
  %v4968 = vmul.f32 %v4952, %v3552
  %v4969 = vmul.f32 %v4953, %v3552
  %v4970 = vmul.f32 %v4954, %v3552
  %v4971 = vmul.f32 %v4955, %v3552
  %v4972 = vpack.c.bf16 %v4957, %v4956
  %v4973 = vpack.c.bf16 %v4959, %v4958
  %v4974 = vpack.c.bf16 %v4961, %v4960
  %v4975 = vpack.c.bf16 %v4963, %v4962
  %v4976 = vpack.c.bf16 %v4965, %v4964
  %v4977 = vpack.c.bf16 %v4967, %v4966
  %v4978 = vpack.c.bf16 %v4969, %v4968
  %v4979 = vpack.c.bf16 %v4971, %v4970
  %s4980 = scalar_lea.vmem %s5, 48
  %v4981 = vld [vmem:[%s4980] sm:$0xf]
  %v4982 = vld [vmem:[%s4980 + $0x4] sm:$0xf]
  %v4985 = vunpack.c.l.b16 %v4981
  %v4986 = vunpack.c.l.b16 %v4982
  %v4987 = vpack.c.b16 %v4986, %v4985
  %4989 = vmatpush.bf16.msra.mxu0 %v4979
  %4990 = vmatpush.bf16.msra.mxu0 %v4978
  %4991 = vmatpush.bf16.msra.mxu0 %v4977
  %4992 = vmatpush.bf16.msra.mxu0 %v4976
  %4993 = vmatpush.bf16.msra.mxu0 %v4975
  %4994 = vmatpush.bf16.msra.mxu0 %v4974
  %4995 = vmatpush.bf16.msra.mxu0 %v4973
  %4996 = vmatpush.bf16.msra.mxu0 %v4972
  %4997 = vmatmul.bf16.gmra.mxu0 %v4987
  %v4998 = vpop.f32.mrf.mxu0
  %v4999 = vadd.f32 0.0, %v4998
  %v5000 = vpop.f32.mrf.mxu0
  %v5001 = vadd.f32 0.0, %v5000
  %5002 = vdwg.mxu0
  %v5003 = vadd.f32 %v4898, %v4999
  %v5004 = vadd.f32 %v4899, %v5001
  %5005 = vrot.lane.b32.xlu0 %v4307, 121
  %v5006 = vpop.permute.xlu0 %5005
  %5007 = vrot.lane.b32.xlu0 %v4308, 121
  %v5008 = vpop.permute.xlu0 %5007
  %5009 = vrot.lane.b32.xlu0 %v4309, 121
  %v5010 = vpop.permute.xlu0 %5009
  %5011 = vrot.lane.b32.xlu0 %v4310, 121
  %v5012 = vpop.permute.xlu0 %5011
  %5013 = vrot.lane.b32.xlu0 %v4311, 121
  %v5014 = vpop.permute.xlu0 %5013
  %5015 = vrot.lane.b32.xlu0 %v4312, 121
  %v5016 = vpop.permute.xlu0 %5015
  %5017 = vrot.lane.b32.xlu0 %v4313, 121
  %v5018 = vpop.permute.xlu0 %5017
  %5019 = vrot.lane.b32.xlu0 %v4314, 121
  %v5020 = vpop.permute.xlu0 %5019
  %v5022 = vsel %vm3719, %v5006, 0
  %v5025 = vsel %vm3719, %v5008, 0
  %v5028 = vsel %vm3719, %v5010, 0
  %v5031 = vsel %vm3719, %v5012, 0
  %v5034 = vsel %vm3719, %v5014, 0
  %v5037 = vsel %vm3719, %v5016, 0
  %v5040 = vsel %vm3719, %v5018, 0
  %v5043 = vsel %vm3719, %v5020, 0
  %v5045 = vunpack.c.l.bf16 %v5022
  %v5046 = vunpack.c.h.bf16 %v5022
  %v5047 = vunpack.c.l.bf16 %v5025
  %v5048 = vunpack.c.h.bf16 %v5025
  %v5049 = vunpack.c.l.bf16 %v5028
  %v5050 = vunpack.c.h.bf16 %v5028
  %v5051 = vunpack.c.l.bf16 %v5031
  %v5052 = vunpack.c.h.bf16 %v5031
  %v5053 = vunpack.c.l.bf16 %v5034
  %v5054 = vunpack.c.h.bf16 %v5034
  %v5055 = vunpack.c.l.bf16 %v5037
  %v5056 = vunpack.c.h.bf16 %v5037
  %v5057 = vunpack.c.l.bf16 %v5040
  %v5058 = vunpack.c.h.bf16 %v5040
  %v5059 = vunpack.c.l.bf16 %v5043
  %v5060 = vunpack.c.h.bf16 %v5043
  %v5061 = vmul.f32 %v5045, %v3746
  %v5062 = vmul.f32 %v5046, %v3746
  %v5063 = vmul.f32 %v5047, %v3746
  %v5064 = vmul.f32 %v5048, %v3746
  %v5065 = vmul.f32 %v5049, %v3746
  %v5066 = vmul.f32 %v5050, %v3746
  %v5067 = vmul.f32 %v5051, %v3746
  %v5068 = vmul.f32 %v5052, %v3746
  %v5069 = vmul.f32 %v5053, %v3746
  %v5070 = vmul.f32 %v5054, %v3746
  %v5071 = vmul.f32 %v5055, %v3746
  %v5072 = vmul.f32 %v5056, %v3746
  %v5073 = vmul.f32 %v5057, %v3746
  %v5074 = vmul.f32 %v5058, %v3746
  %v5075 = vmul.f32 %v5059, %v3746
  %v5076 = vmul.f32 %v5060, %v3746
  %v5077 = vpack.c.bf16 %v5062, %v5061
  %v5078 = vpack.c.bf16 %v5064, %v5063
  %v5079 = vpack.c.bf16 %v5066, %v5065
  %v5080 = vpack.c.bf16 %v5068, %v5067
  %v5081 = vpack.c.bf16 %v5070, %v5069
  %v5082 = vpack.c.bf16 %v5072, %v5071
  %v5083 = vpack.c.bf16 %v5074, %v5073
  %v5084 = vpack.c.bf16 %v5076, %v5075
  %s5085 = scalar_lea.vmem %s5, 56
  %v5086 = vld [vmem:[%s5085] sm:$0xf]
  %v5087 = vld [vmem:[%s5085 + $0x4] sm:$0xf]
  %v5090 = vunpack.c.l.b16 %v5086
  %v5091 = vunpack.c.l.b16 %v5087
  %v5092 = vpack.c.b16 %v5091, %v5090
  %5094 = vmatpush.bf16.msra.mxu0 %v5084
  %5095 = vmatpush.bf16.msra.mxu0 %v5083
  %5096 = vmatpush.bf16.msra.mxu0 %v5082
  %5097 = vmatpush.bf16.msra.mxu0 %v5081
  %5098 = vmatpush.bf16.msra.mxu0 %v5080
  %5099 = vmatpush.bf16.msra.mxu0 %v5079
  %5100 = vmatpush.bf16.msra.mxu0 %v5078
  %5101 = vmatpush.bf16.msra.mxu0 %v5077
  %5102 = vmatmul.bf16.gmra.mxu0 %v5092
  %v5103 = vpop.f32.mrf.mxu0
  %v5104 = vadd.f32 0.0, %v5103
  %v5105 = vpop.f32.mrf.mxu0
  %v5106 = vadd.f32 0.0, %v5105
  %5107 = vdwg.mxu0
  %v5108 = vadd.f32 %v5003, %v5104
  %v5109 = vadd.f32 %v5004, %v5106
  %5110 = vrot.lane.b32.xlu0 %v4307, 120
  %v5111 = vpop.permute.xlu0 %5110
  %5112 = vrot.lane.b32.xlu0 %v4308, 120
  %v5113 = vpop.permute.xlu0 %5112
  %5114 = vrot.lane.b32.xlu0 %v4309, 120
  %v5115 = vpop.permute.xlu0 %5114
  %5116 = vrot.lane.b32.xlu0 %v4310, 120
  %v5117 = vpop.permute.xlu0 %5116
  %5118 = vrot.lane.b32.xlu0 %v4311, 120
  %v5119 = vpop.permute.xlu0 %5118
  %5120 = vrot.lane.b32.xlu0 %v4312, 120
  %v5121 = vpop.permute.xlu0 %5120
  %5122 = vrot.lane.b32.xlu0 %v4313, 120
  %v5123 = vpop.permute.xlu0 %5122
  %5124 = vrot.lane.b32.xlu0 %v4314, 120
  %v5125 = vpop.permute.xlu0 %5124
  %v5127 = vsel %vm3913, %v5111, 0
  %v5130 = vsel %vm3913, %v5113, 0
  %v5133 = vsel %vm3913, %v5115, 0
  %v5136 = vsel %vm3913, %v5117, 0
  %v5139 = vsel %vm3913, %v5119, 0
  %v5142 = vsel %vm3913, %v5121, 0
  %v5145 = vsel %vm3913, %v5123, 0
  %v5148 = vsel %vm3913, %v5125, 0
  %v5150 = vunpack.c.l.bf16 %v5127
  %v5151 = vunpack.c.h.bf16 %v5127
  %v5152 = vunpack.c.l.bf16 %v5130
  %v5153 = vunpack.c.h.bf16 %v5130
  %v5154 = vunpack.c.l.bf16 %v5133
  %v5155 = vunpack.c.h.bf16 %v5133
  %v5156 = vunpack.c.l.bf16 %v5136
  %v5157 = vunpack.c.h.bf16 %v5136
  %v5158 = vunpack.c.l.bf16 %v5139
  %v5159 = vunpack.c.h.bf16 %v5139
  %v5160 = vunpack.c.l.bf16 %v5142
  %v5161 = vunpack.c.h.bf16 %v5142
  %v5162 = vunpack.c.l.bf16 %v5145
  %v5163 = vunpack.c.h.bf16 %v5145
  %v5164 = vunpack.c.l.bf16 %v5148
  %v5165 = vunpack.c.h.bf16 %v5148
  %v5166 = vmul.f32 %v5150, %v3940
  %v5167 = vmul.f32 %v5151, %v3940
  %v5168 = vmul.f32 %v5152, %v3940
  %v5169 = vmul.f32 %v5153, %v3940
  %v5170 = vmul.f32 %v5154, %v3940
  %v5171 = vmul.f32 %v5155, %v3940
  %v5172 = vmul.f32 %v5156, %v3940
  %v5173 = vmul.f32 %v5157, %v3940
  %v5174 = vmul.f32 %v5158, %v3940
  %v5175 = vmul.f32 %v5159, %v3940
  %v5176 = vmul.f32 %v5160, %v3940
  %v5177 = vmul.f32 %v5161, %v3940
  %v5178 = vmul.f32 %v5162, %v3940
  %v5179 = vmul.f32 %v5163, %v3940
  %v5180 = vmul.f32 %v5164, %v3940
  %v5181 = vmul.f32 %v5165, %v3940
  %v5182 = vpack.c.bf16 %v5167, %v5166
  %v5183 = vpack.c.bf16 %v5169, %v5168
  %v5184 = vpack.c.bf16 %v5171, %v5170
  %v5185 = vpack.c.bf16 %v5173, %v5172
  %v5186 = vpack.c.bf16 %v5175, %v5174
  %v5187 = vpack.c.bf16 %v5177, %v5176
  %v5188 = vpack.c.bf16 %v5179, %v5178
  %v5189 = vpack.c.bf16 %v5181, %v5180
  %s5190 = scalar_lea.vmem %s5, 64
  %v5191 = vld [vmem:[%s5190] sm:$0xf]
  %v5192 = vld [vmem:[%s5190 + $0x4] sm:$0xf]
  %v5195 = vunpack.c.l.b16 %v5191
  %v5196 = vunpack.c.l.b16 %v5192
  %v5197 = vpack.c.b16 %v5196, %v5195
  %5199 = vmatpush.bf16.msra.mxu0 %v5189
  %5200 = vmatpush.bf16.msra.mxu0 %v5188
  %5201 = vmatpush.bf16.msra.mxu0 %v5187
  %5202 = vmatpush.bf16.msra.mxu0 %v5186
  %5203 = vmatpush.bf16.msra.mxu0 %v5185
  %5204 = vmatpush.bf16.msra.mxu0 %v5184
  %5205 = vmatpush.bf16.msra.mxu0 %v5183
  %5206 = vmatpush.bf16.msra.mxu0 %v5182
  %5207 = vmatmul.bf16.gmra.mxu0 %v5197
  %v5208 = vpop.f32.mrf.mxu0
  %v5209 = vadd.f32 0.0, %v5208
  %v5210 = vpop.f32.mrf.mxu0
  %v5211 = vadd.f32 0.0, %v5210
  %5212 = vdwg.mxu0
  %v5213 = vadd.f32 %v5108, %v5209
  %v5214 = vadd.f32 %v5109, %v5211
  %v5215 = vld [vmem:[#allocation2] sm:$0x1]
  %v5217 = vperm.slane %v5215, 0
  %5218 = vset.pattern.permute.xlu0 0
  %5219 = vperm.xlu0 %5218, %v5217
  %v5220 = vpop.permute.xlu0 %5219
  %v5222 = vadd.f32 %v5213, %v5220
  %v5223 = vadd.f32 %v5214, %v5220
  %v5224 = vxor.u32 %v5222, 2147483648
  %v5225 = vxor.u32 %v5223, 2147483648
  %v5226 = vmul.f32 %v5224, 1.442695
  %v5227 = vpow.pop %v5226
  %v5228 = vmul.f32 %v5225, 1.442695
  %v5229 = vpow.pop %v5228
  %v5230 = vadd.f32 %v5227, 1.0
  %v5231 = vadd.f32 %v5229, 1.0
  %v5232 = vrcp.pop %v5230
  %v5233 = vmul.f32 %v5230, %v5232
  %v5234 = vsub.f32 1.0, %v5233
  %v5235 = vmul.f32 %v5232, %v5234
  %v5236 = vadd.f32 %v5232, %v5235
  %vm5237 = vweird.f32 %v5230
  %vm5238 = vweird.f32 %v5232
  %vm5239 = vmor %vm5237, %vm5238
  %v5240 = vsel %vm5239, %v5232, %v5236
  %v5241 = vand.u32 2147483647, %v5230
  %vm5242 = vcmp.eq.f32.partialorder %v5241, 8.507059e+37
  %v5243 = vand.u32 %v5230, 2147483648
  %v5244 = vor.u32 1.1754944e-38, %v5243
  %v5245 = vsel %vm5242, %v5244, %v5240
  %v5246 = vmul.f32 1.0, %v5245
  %v5247 = vrcp.pop %v5231
  %v5248 = vmul.f32 %v5231, %v5247
  %v5249 = vsub.f32 1.0, %v5248
  %v5250 = vmul.f32 %v5247, %v5249
  %v5251 = vadd.f32 %v5247, %v5250
  %vm5252 = vweird.f32 %v5231
  %vm5253 = vweird.f32 %v5247
  %vm5254 = vmor %vm5252, %vm5253
  %v5255 = vsel %vm5254, %v5247, %v5251
  %v5256 = vand.u32 2147483647, %v5231
  %vm5257 = vcmp.eq.f32.partialorder %v5256, 8.507059e+37
  %v5258 = vand.u32 %v5231, 2147483648
  %v5259 = vor.u32 1.1754944e-38, %v5258
  %v5260 = vsel %vm5257, %v5259, %v5255
  %v5261 = vmul.f32 1.0, %v5260
  %vm5262 = vcmask 801792
  %5263 = vst.msk [vmem:[%s8] sm:$0xff] %vm5262, %v5246
  %5264 = vst.msk [vmem:[%s8 + $0x8] sm:$0xff] %vm5262, %v5261
  // Predicated region
  $region34: #{net3_forward.1} parent=0 // pred_check
    _
  $region35: #{net3_forward.1} parent=0 // pred_check_branch
    %5266 = sbr.rel (0) target = $region37
  $region36: #{net3_forward.1} parent=0 // pred_region
    _
  $region37: #{net3_forward.1} parent=0 // pred_fallthru
    _
  // Predicated region
  $region38: #{net3_forward.1} parent=0 // pred_check
    _
  $region39: #{net3_forward.1} parent=0 // pred_check_branch
    %5268 = sbr.rel (0) target = $region41
  $region40: #{net3_forward.1} parent=0 // pred_region
    _
  $region41: #{net3_forward.1} parent=0 // pred_fallthru
    _

</llo_original>
